<compile_context>
chip_gen: v5e
topology: v5e:2x2
jax: 0.10.0
libtpu: 0.0.40
codegen_flags: <defaults>
</compile_context>

<pallas_src>
import functools

import jax
import jax.numpy as jnp
from jax.experimental import pallas as pl
from jax.experimental.pallas import tpu as pltpu


_LANE = 128        # vreg lane width; gates / per-step hiddens are padded to this
_XPAD = 8          # layer-0 input feature dim (2) zero-padded to 8 lanes


def _round8(n):
    return ((n + 7) // 8) * 8


class _SlabLayout:
    """Row offsets inside the single packed parameter slab (width = 4*Hp)."""

    def __init__(self, T, Hp, nheads, nhid):
        off = 0

        def take(rows):
            nonlocal off
            start = off
            off += _round8(rows)
            return start

        self.wih0 = take(_XPAD)          # (8, 4Hp)   layer-0 input W (rows 2:8 zero)
        self.b0 = take(1)                # (1, 4Hp)   layer-0 bias (b_ih + b_hh)
        self.whh0 = take(Hp)             # (Hp, 4Hp)  layer-0 recurrent W
        self.w1 = take(2 * Hp)           # (2Hp, 4Hp) layer-1 merged [W_ih ; W_hh]
        self.b1 = take(1)                # (1, 4Hp)   layer-1 bias
        self.wh = take(T * Hp)           # (T*Hp, nheads*nhid) all-heads projection
        self.a1 = take(nheads)           # row k: head-k a[:nhid]
        self.a2 = take(nheads)           # row k: head-k a[nhid:]
        self.wo = take(nheads * nhid)    # (nheads*nhid, nclass) output-layer W
        self.ao1 = take(1)               # (1, nclass)
        self.ao2 = take(1)               # (1, nclass)
        self.rows = off
        self.width = 4 * Hp


# -----------------------------------------------------------------------------
# Fused kernel: 2-layer LSTM + multi-head dense GAT + output attention
#               + ELU + log_softmax.
#   x_ref    (T*N, 8)          time-major flattened inputs (cols 2:8 zero)
#   adj_ref  (N, N)            dense adjacency (>0 means edge)
#   slab_ref (rows, 4*Hp)      all parameters, packed (see _SlabLayout)
#   out_ref  (N, nclass)       log-softmax class scores
# -----------------------------------------------------------------------------
def gat_lstm_fused_kernel(x_ref, adj_ref, slab_ref, out_ref, *,
                          alpha, T, Hp, nheads, nhid):
    N = adj_ref.shape[0]
    nclass = out_ref.shape[-1]
    L = _SlabLayout(T, Hp, nheads, nhid)
    G = 4 * Hp
    f32 = jnp.float32

    def dotf(a, b):
        return jnp.dot(a, b, preferred_element_type=f32)

    # ---------------- Stage 1: two-layer LSTM (gate order i,f,g,o) ----------
    x2d = x_ref[...]                                        # (T*N, 8)
    wih0 = slab_ref[L.wih0:L.wih0 + _XPAD, :]               # (8, G)
    b0 = slab_ref[L.b0:L.b0 + 1, :]                         # (1, G)
    whh0 = slab_ref[L.whh0:L.whh0 + Hp, :]                  # (Hp, G)
    w1 = slab_ref[L.w1:L.w1 + 2 * Hp, :]                    # (2Hp, G)
    # bias broadcast hoisted out of the unrolled loop (no per-iter bcast)
    b1 = jnp.broadcast_to(slab_ref[L.b1:L.b1 + 1, :], (N, G))

    # Hoisted layer-0 input projection: one matmul over all T*N rows.
    xp = dotf(x2d, wih0) + b0                               # (T*N, G)

    h0 = jnp.zeros((N, Hp), f32)
    c0 = jnp.zeros((N, Hp), f32)
    h1 = jnp.zeros((N, Hp), f32)
    c1 = jnp.zeros((N, Hp), f32)
    h1_steps = []
    # Time loop fully unrolled (T small & static): 2 MXU ops per step.
    for t in range(T):
        lo = t * N                                          # sublane-aligned
        pre0 = xp[lo:lo + N, :] + dotf(h0, whh0)            # (N, G)
        i0 = jax.nn.sigmoid(pre0[:, 0 * Hp:1 * Hp])         # 128-lane aligned
        f0 = jax.nn.sigmoid(pre0[:, 1 * Hp:2 * Hp])
        g0 = jnp.tanh(pre0[:, 2 * Hp:3 * Hp])
        o0 = jax.nn.sigmoid(pre0[:, 3 * Hp:4 * Hp])
        c0 = f0 * c0 + i0 * g0
        h0 = o0 * jnp.tanh(c0)
        # layer 1: merged [W_ih ; W_hh] against lane-concat [h0, h1]
        pre1 = dotf(jnp.concatenate([h0, h1], axis=1), w1) + b1
        i1 = jax.nn.sigmoid(pre1[:, 0 * Hp:1 * Hp])
        f1 = jax.nn.sigmoid(pre1[:, 1 * Hp:2 * Hp])
        g1 = jnp.tanh(pre1[:, 2 * Hp:3 * Hp])
        o1 = jax.nn.sigmoid(pre1[:, 3 * Hp:4 * Hp])
        c1 = f1 * c1 + i1 * g1
        h1 = o1 * jnp.tanh(c1)
        h1_steps.append(h1)            # stash only; projection off the chain

    # flatten(start_dim=1) + all-heads W folded into one wide matmul.
    h_cat = jnp.concatenate(h1_steps, axis=1)               # (N, T*Hp)
    wh_w = slab_ref[L.wh:L.wh + T * Hp, 0:nheads * nhid]    # (T*Hp, nheads*nhid)
    wh_all = dotf(h_cat, wh_w)                              # (N, nheads*nhid)

    # ---------------- Stage 2: multi-head dense GAT --------------------------
    adj = adj_ref[...]
    # hoisted mask fill: computed once, reused by every softmax
    neg_fill = jnp.where(adj > 0.0, f32(0.0), f32(-9e15))
    tiny = f32(1e-30)

    def leaky(v):
        return jnp.where(v > 0, v, alpha * v)

    def elu(v):
        return jnp.where(v > 0, v, jnp.exp(v) - 1.0)

    def masked_softmax(e):
        logits = e + neg_fill            # exactly where(adj>0, e, -9e15) in f32
        m = jnp.max(logits, axis=1, keepdims=True)
        p = jnp.exp(logits - m)
        denom = jnp.maximum(jnp.sum(p, axis=1, keepdims=True), tiny)
        return p * pl.reciprocal(denom, approx=False)

    # torch.cat([att_k(x, adj) for k], dim=1) @ W_out folded into a per-head
    # accumulation, so the concatenated features never leave vregs.
    who = jnp.zeros((N, nclass), f32)
    for k in range(nheads):
        wh_k = wh_all[:, k * nhid:(k + 1) * nhid]                 # (N, nhid)
        a1_k = slab_ref[L.a1 + k:L.a1 + k + 1, 0:nhid]            # (1, nhid)
        a2_k = slab_ref[L.a2 + k:L.a2 + k + 1, 0:nhid]
        e1 = jnp.sum(wh_k * a1_k, axis=1, keepdims=True)          # (N, 1)
        e2 = jnp.sum(wh_k * a2_k, axis=1, keepdims=True)
        att = masked_softmax(leaky(e1 + jnp.transpose(e2)))       # (N, N)
        head = elu(dotf(att, wh_k))                               # concat=True ELU
        wo_k = slab_ref[L.wo + k * nhid:L.wo + (k + 1) * nhid, 0:nclass]
        who = who + dotf(head, wo_k)                              # (N, nclass)

    # Output attention layer (concat=False), then F.elu + log_softmax.
    ao1 = slab_ref[L.ao1:L.ao1 + 1, 0:nclass]
    ao2 = slab_ref[L.ao2:L.ao2 + 1, 0:nclass]
    e1 = jnp.sum(who * ao1, axis=1, keepdims=True)
    e2 = jnp.sum(who * ao2, axis=1, keepdims=True)
    att = masked_softmax(leaky(e1 + jnp.transpose(e2)))
    out = elu(dotf(att, who))                                     # (N, nclass)

    m = jnp.max(out, axis=1, keepdims=True)
    s = out - m
    lse = jnp.log(jnp.sum(jnp.exp(s), axis=1, keepdims=True))
    out_ref[...] = s - lse


# -----------------------------------------------------------------------------
# Wrapper: parameter re-layout into ONE slab (trace-time) + one pallas_call.
# -----------------------------------------------------------------------------
def _build_param_slab(params, *, T, H, Hp, nheads, nhid, nclass):
    L = _SlabLayout(T, Hp, nheads, nhid)
    W = L.width

    def gate_pad(w):
        # (in_dim, 4H) gate-ordered i,f,g,o -> (in_dim, 4*Hp), gate g at col g*Hp.
        ind = w.shape[0]
        w4 = w.reshape(ind, 4, H).astype(jnp.float32)
        return jnp.pad(w4, ((0, 0), (0, 0), (0, Hp - H))).reshape(ind, 4 * Hp)

    def place(block, rows):
        block = block.astype(jnp.float32)
        return jnp.pad(block, ((0, rows - block.shape[0]),
                               (0, W - block.shape[1])))

    # All heads' W packed column-wise; row t*Hp + j <- original row t*H + j.
    w_heads = jnp.transpose(params["W_heads"], (1, 0, 2))        # (T*H, nh, nhid)
    w_heads = w_heads.reshape(T, H, nheads * nhid)
    w_heads = jnp.pad(w_heads, ((0, 0), (0, Hp - H), (0, 0)))
    w_heads = w_heads.reshape(T * Hp, nheads * nhid)

    blocks = [
        place(gate_pad(params["wih0"]), _XPAD),
        place(gate_pad(params["b0"]), _round8(1)),
        place(gate_pad(params["whh0"]), Hp),
        place(gate_pad(params["wih1"]), Hp),     # first half of merged layer-1 W
        place(gate_pad(params["whh1"]), Hp),     # second half (recurrent part)
        place(gate_pad(params["b1"]), _round8(1)),
        place(w_heads, T * Hp),
        place(params["a_heads"][:, 0, :nhid], _round8(nheads)),
        place(params["a_heads"][:, 0, nhid:], _round8(nheads)),
        place(params["W_out"], _round8(nheads * nhid)),
        place(params["a_out"][:, :nclass], _round8(1)),
        place(params["a_out"][:, nclass:], _round8(1)),
    ]
    slab = jnp.concatenate(blocks, axis=0)
    assert slab.shape == (L.rows, W), (slab.shape, (L.rows, W))
    return slab


def gat_with_lstm_forward(x, adj, params, *, nheads, nhid, nclass, alpha,
                          lstm_hid):
    N, T, xin = x.shape
    H = 2 * lstm_hid
    Hp = _LANE
    assert H <= Hp and xin <= _XPAD
    assert nheads * nhid <= 4 * Hp and nclass <= 4 * Hp

    # time-major flattened input; feature dim zero-padded to 8 contraction lanes
    x2d = jnp.transpose(x, (1, 0, 2)).reshape(T * N, xin).astype(jnp.float32)
    x2d = jnp.pad(x2d, ((0, 0), (0, _XPAD - xin)))

    slab = _build_param_slab(params, T=T, H=H, Hp=Hp, nheads=nheads,
                             nhid=nhid, nclass=nclass)

    vmem = pl.BlockSpec(memory_space=pltpu.MemorySpace.VMEM)
    kernel = functools.partial(gat_lstm_fused_kernel, alpha=alpha, T=T, Hp=Hp,
                               nheads=nheads, nhid=nhid)
    return pl.pallas_call(
        kernel,
        out_shape=jax.ShapeDtypeStruct((N, nclass), jnp.float32),
        in_specs=[vmem, vmem, vmem],
        out_specs=vmem,
    )(x2d, adj.astype(jnp.float32), slab)


# -----------------------------------------------------------------------------
# Parameter init (PyTorch-like transposed layouts, gate order i,f,g,o).
# -----------------------------------------------------------------------------
def init_params(key, nfeat, nhid, nclass, nheads, lstm_hid):
    H = 2 * lstm_hid
    Fin = nfeat * lstm_hid
    ks = jax.random.split(key, 10)
    s = float(1.0 / (H ** 0.5))

    def u(k, shape):
        return jax.random.uniform(k, shape, jnp.float32, -s, s)

    return {
        "wih0": u(ks[0], (2, 4 * H)),
        "whh0": u(ks[1], (H, 4 * H)),
        "b0":   u(ks[2], (1, 4 * H)),     # b_ih + b_hh folded together
        "wih1": u(ks[3], (H, 4 * H)),
        "whh1": u(ks[4], (H, 4 * H)),
        "b1":   u(ks[5], (1, 4 * H)),
        "W_heads": jax.random.normal(ks[6], (nheads, Fin, nhid),
                                     jnp.float32) * float(1.0 / (Fin ** 0.5)),
        "a_heads": jax.random.normal(ks[7], (nheads, 1, 2 * nhid),
                                     jnp.float32) * 0.1,
        "W_out": jax.random.normal(ks[8], (nhid * nheads, nclass),
                                   jnp.float32) * float(1.0 / ((nhid * nheads) ** 0.5)),
        "a_out": jax.random.normal(ks[9], (1, 2 * nclass), jnp.float32) * 0.1,
    }


# -----------------------------------------------------------------------------
# Pure-JAX reference (mirrors the PyTorch module) for a correctness check.
# -----------------------------------------------------------------------------
def reference_forward(x, adj, params, *, nheads, nhid, nclass, alpha, lstm_hid):
    N, T, _ = x.shape
    H = 2 * lstm_hid
    hdot = functools.partial(jnp.dot, precision=jax.lax.Precision.HIGHEST)

    def lstm_layer(seq, wih, whh, b):
        h = jnp.zeros((N, H), jnp.float32)
        c = jnp.zeros((N, H), jnp.float32)
        outs = []
        for t in range(T):
            g = hdot(seq[:, t, :], wih) + hdot(h, whh) + b
            i_g = jax.nn.sigmoid(g[:, 0 * H:1 * H])
            f_g = jax.nn.sigmoid(g[:, 1 * H:2 * H])
            g_g = jnp.tanh(g[:, 2 * H:3 * H])
            o_g = jax.nn.sigmoid(g[:, 3 * H:4 * H])
            c = f_g * c + i_g * g_g
            h = o_g * jnp.tanh(c)
            outs.append(h)
        return jnp.stack(outs, axis=1)

    h = lstm_layer(x, params["wih0"], params["whh0"], params["b0"])
    h = lstm_layer(h, params["wih1"], params["whh1"], params["b1"])
    feat = h.reshape(N, T * H)

    def gat_layer(hin, W, a, concat):
        Wh = hdot(hin, W)
        fo = W.shape[1]
        e = hdot(Wh, a[0, :fo, None]) + hdot(Wh, a[0, fo:, None]).T
        e = jnp.where(e > 0, e, alpha * e)
        logits = jnp.where(adj > 0, e, jnp.float32(-9e15))
        att = jax.nn.softmax(logits, axis=1)
        out = hdot(att, Wh)
        return jax.nn.elu(out) if concat else out

    heads = [gat_layer(feat, params["W_heads"][k], params["a_heads"][k], True)
             for k in range(nheads)]
    out = gat_layer(jnp.concatenate(heads, axis=1), params["W_out"],
                    params["a_out"], False)
    return jax.nn.log_softmax(jax.nn.elu(out), axis=1)


if __name__ == "__main__":
    key = jax.random.PRNGKey(0)
    N, T = 16, 4                 # nodes, sequence length per node
    nfeat = 2 * T                # raw per-node feature count (= 8)
    lstm_hid = 6                 # LSTM hidden = 2*lstm_hid = 12
    nhid, nclass, nheads = 8, 3, 2
    alpha = 0.2

    k_x, k_adj, k_p = jax.random.split(key, 3)
    x = jax.random.normal(k_x, (N, T, 2), jnp.float32)
    adj = (jax.random.uniform(k_adj, (N, N)) > 0.5).astype(jnp.float32)
    adj = jnp.maximum(adj, jnp.eye(N, dtype=jnp.float32))    # self loops

    params = init_params(k_p, nfeat, nhid, nclass, nheads, lstm_hid)

    fwd = jax.jit(functools.partial(gat_with_lstm_forward, nheads=nheads,
                                    nhid=nhid, nclass=nclass, alpha=alpha,
                                    lstm_hid=lstm_hid))
    out = jax.block_until_ready(fwd(x, adj, params))
    assert out.shape == (N, nclass)
    assert bool(jnp.all(jnp.isfinite(out)))

    ref = reference_forward(x, adj, params, nheads=nheads, nhid=nhid,
                            nclass=nclass, alpha=alpha, lstm_hid=lstm_hid)
    err = float(jnp.max(jnp.abs(out - ref)))
    assert err < 5e-2, f"kernel vs pure-JAX reference max |diff| = {err}"
    print("KERNEL_OK")
</pallas_src>

<mosaic_0001>
module attributes {stable_mosaic.version = 11 : i64} {
  func.func @gat_lstm_fused_kernel(%arg0: memref<64x8xf32, #tpu.memory_space<vmem>>, %arg1: memref<16x16xf32, #tpu.memory_space<vmem>>, %arg2: memref<968x512xf32, #tpu.memory_space<vmem>>, %arg3: memref<16x3xf32, #tpu.memory_space<vmem>>) attributes {dimension_semantics = [], scalar_prefetch = 0 : i64, scratch_operands = 0 : i64, tpu.core_type = #tpu.core_type<tc>} {
    %c0 = arith.constant 0 : index
    %c0_0 = arith.constant 0 : index
    %0 = vector.load %arg0[%c0, %c0_0] : memref<64x8xf32, #tpu.memory_space<vmem>>, vector<64x8xf32>
    %c0_1 = arith.constant 0 : index
    %c0_2 = arith.constant 0 : index
    %1 = vector.load %arg2[%c0_1, %c0_2] : memref<968x512xf32, #tpu.memory_space<vmem>>, vector<8x512xf32>
    %c8 = arith.constant 8 : index
    %c0_3 = arith.constant 0 : index
    %2 = vector.load %arg2[%c8, %c0_3] : memref<968x512xf32, #tpu.memory_space<vmem>>, vector<1x512xf32>
    %c16 = arith.constant 16 : index
    %c0_4 = arith.constant 0 : index
    %3 = vector.load %arg2[%c16, %c0_4] : memref<968x512xf32, #tpu.memory_space<vmem>>, vector<128x512xf32>
    %c144 = arith.constant 144 : index
    %c0_5 = arith.constant 0 : index
    %4 = vector.load %arg2[%c144, %c0_5] : memref<968x512xf32, #tpu.memory_space<vmem>>, vector<256x512xf32>
    %c400 = arith.constant 400 : index
    %c0_6 = arith.constant 0 : index
    %5 = vector.load %arg2[%c400, %c0_6] : memref<968x512xf32, #tpu.memory_space<vmem>>, vector<1x512xf32>
    %6 = vector.shape_cast %5 : vector<1x512xf32> to vector<1x512xf32>
    %7 = vector.broadcast %6 : vector<1x512xf32> to vector<16x512xf32>
    %cst = arith.constant dense<0.000000e+00> : vector<64x512xf32>
    %8 = tpu.matmul %0, %1, %cst {dimension_numbers = #tpu.dot_dimension_numbers<[1], [0], [0], [1], [0, 0, 1, 1], [], []>} : vector<64x8xf32>, vector<8x512xf32>, vector<64x512xf32> -> vector<64x512xf32>
    %9 = vector.broadcast %2 : vector<1x512xf32> to vector<64x512xf32>
    %10 = arith.addf %8, %9 : vector<64x512xf32>
    %cst_7 = arith.constant 0.000000e+00 : f32
    %11 = vector.broadcast %cst_7 : f32 to vector<16x128xf32>
    %cst_8 = arith.constant 0.000000e+00 : f32
    %12 = vector.broadcast %cst_8 : f32 to vector<16x128xf32>
    %cst_9 = arith.constant 0.000000e+00 : f32
    %13 = vector.broadcast %cst_9 : f32 to vector<16x128xf32>
    %cst_10 = arith.constant 0.000000e+00 : f32
    %14 = vector.broadcast %cst_10 : f32 to vector<16x128xf32>
    %15 = vector.extract_strided_slice %10 {offsets = [0, 0], sizes = [16, 512], strides = [1, 1]} : vector<64x512xf32> to vector<16x512xf32>
    %cst_11 = arith.constant dense<0.000000e+00> : vector<16x512xf32>
    %16 = tpu.matmul %11, %3, %cst_11 {dimension_numbers = #tpu.dot_dimension_numbers<[1], [0], [0], [1], [0, 0, 1, 1], [], []>} : vector<16x128xf32>, vector<128x512xf32>, vector<16x512xf32> -> vector<16x512xf32>
    %17 = arith.addf %15, %16 : vector<16x512xf32>
    %18 = vector.extract_strided_slice %17 {offsets = [0, 0], sizes = [16, 128], strides = [1, 1]} : vector<16x512xf32> to vector<16x128xf32>
    %19 = arith.negf %18 : vector<16x128xf32>
    %20 = math.exp %19 : vector<16x128xf32>
    %cst_12 = arith.constant 1.000000e+00 : f32
    %21 = vector.broadcast %cst_12 : f32 to vector<16x128xf32>
    %22 = arith.addf %21, %20 : vector<16x128xf32>
    %23 = arith.divf %21, %22 : vector<16x128xf32>
    %24 = vector.extract_strided_slice %17 {offsets = [0, 128], sizes = [16, 128], strides = [1, 1]} : vector<16x512xf32> to vector<16x128xf32>
    %25 = arith.negf %24 : vector<16x128xf32>
    %26 = math.exp %25 : vector<16x128xf32>
    %cst_13 = arith.constant 1.000000e+00 : f32
    %27 = vector.broadcast %cst_13 : f32 to vector<16x128xf32>
    %28 = arith.addf %27, %26 : vector<16x128xf32>
    %29 = arith.divf %27, %28 : vector<16x128xf32>
    %30 = vector.extract_strided_slice %17 {offsets = [0, 256], sizes = [16, 128], strides = [1, 1]} : vector<16x512xf32> to vector<16x128xf32>
    %31 = math.tanh %30 : vector<16x128xf32>
    %32 = vector.extract_strided_slice %17 {offsets = [0, 384], sizes = [16, 128], strides = [1, 1]} : vector<16x512xf32> to vector<16x128xf32>
    %33 = arith.negf %32 : vector<16x128xf32>
    %34 = math.exp %33 : vector<16x128xf32>
    %cst_14 = arith.constant 1.000000e+00 : f32
    %35 = vector.broadcast %cst_14 : f32 to vector<16x128xf32>
    %36 = arith.addf %35, %34 : vector<16x128xf32>
    %37 = arith.divf %35, %36 : vector<16x128xf32>
    %38 = arith.mulf %29, %12 : vector<16x128xf32>
    %39 = arith.mulf %23, %31 : vector<16x128xf32>
    %40 = arith.addf %38, %39 : vector<16x128xf32>
    %41 = math.tanh %40 : vector<16x128xf32>
    %42 = arith.mulf %37, %41 : vector<16x128xf32>
    %43 = tpu.concatenate %42, %13 in 1 : vector<16x128xf32>, vector<16x128xf32> -> vector<16x256xf32>
    %cst_15 = arith.constant dense<0.000000e+00> : vector<16x512xf32>
    %44 = tpu.matmul %43, %4, %cst_15 {dimension_numbers = #tpu.dot_dimension_numbers<[1], [0], [0], [1], [0, 0, 1, 1], [], []>} : vector<16x256xf32>, vector<256x512xf32>, vector<16x512xf32> -> vector<16x512xf32>
    %45 = arith.addf %44, %7 : vector<16x512xf32>
    %46 = vector.extract_strided_slice %45 {offsets = [0, 0], sizes = [16, 128], strides = [1, 1]} : vector<16x512xf32> to vector<16x128xf32>
    %47 = arith.negf %46 : vector<16x128xf32>
    %48 = math.exp %47 : vector<16x128xf32>
    %cst_16 = arith.constant 1.000000e+00 : f32
    %49 = vector.broadcast %cst_16 : f32 to vector<16x128xf32>
    %50 = arith.addf %49, %48 : vector<16x128xf32>
    %51 = arith.divf %49, %50 : vector<16x128xf32>
    %52 = vector.extract_strided_slice %45 {offsets = [0, 128], sizes = [16, 128], strides = [1, 1]} : vector<16x512xf32> to vector<16x128xf32>
    %53 = arith.negf %52 : vector<16x128xf32>
    %54 = math.exp %53 : vector<16x128xf32>
    %cst_17 = arith.constant 1.000000e+00 : f32
    %55 = vector.broadcast %cst_17 : f32 to vector<16x128xf32>
    %56 = arith.addf %55, %54 : vector<16x128xf32>
    %57 = arith.divf %55, %56 : vector<16x128xf32>
    %58 = vector.extract_strided_slice %45 {offsets = [0, 256], sizes = [16, 128], strides = [1, 1]} : vector<16x512xf32> to vector<16x128xf32>
    %59 = math.tanh %58 : vector<16x128xf32>
    %60 = vector.extract_strided_slice %45 {offsets = [0, 384], sizes = [16, 128], strides = [1, 1]} : vector<16x512xf32> to vector<16x128xf32>
    %61 = arith.negf %60 : vector<16x128xf32>
    %62 = math.exp %61 : vector<16x128xf32>
    %cst_18 = arith.constant 1.000000e+00 : f32
    %63 = vector.broadcast %cst_18 : f32 to vector<16x128xf32>
    %64 = arith.addf %63, %62 : vector<16x128xf32>
    %65 = arith.divf %63, %64 : vector<16x128xf32>
    %66 = arith.mulf %57, %14 : vector<16x128xf32>
    %67 = arith.mulf %51, %59 : vector<16x128xf32>
    %68 = arith.addf %66, %67 : vector<16x128xf32>
    %69 = math.tanh %68 : vector<16x128xf32>
    %70 = arith.mulf %65, %69 : vector<16x128xf32>
    %71 = vector.extract_strided_slice %10 {offsets = [16, 0], sizes = [16, 512], strides = [1, 1]} : vector<64x512xf32> to vector<16x512xf32>
    %cst_19 = arith.constant dense<0.000000e+00> : vector<16x512xf32>
    %72 = tpu.matmul %42, %3, %cst_19 {dimension_numbers = #tpu.dot_dimension_numbers<[1], [0], [0], [1], [0, 0, 1, 1], [], []>} : vector<16x128xf32>, vector<128x512xf32>, vector<16x512xf32> -> vector<16x512xf32>
    %73 = arith.addf %71, %72 : vector<16x512xf32>
    %74 = vector.extract_strided_slice %73 {offsets = [0, 0], sizes = [16, 128], strides = [1, 1]} : vector<16x512xf32> to vector<16x128xf32>
    %75 = arith.negf %74 : vector<16x128xf32>
    %76 = math.exp %75 : vector<16x128xf32>
    %cst_20 = arith.constant 1.000000e+00 : f32
    %77 = vector.broadcast %cst_20 : f32 to vector<16x128xf32>
    %78 = arith.addf %77, %76 : vector<16x128xf32>
    %79 = arith.divf %77, %78 : vector<16x128xf32>
    %80 = vector.extract_strided_slice %73 {offsets = [0, 128], sizes = [16, 128], strides = [1, 1]} : vector<16x512xf32> to vector<16x128xf32>
    %81 = arith.negf %80 : vector<16x128xf32>
    %82 = math.exp %81 : vector<16x128xf32>
    %cst_21 = arith.constant 1.000000e+00 : f32
    %83 = vector.broadcast %cst_21 : f32 to vector<16x128xf32>
    %84 = arith.addf %83, %82 : vector<16x128xf32>
    %85 = arith.divf %83, %84 : vector<16x128xf32>
    %86 = vector.extract_strided_slice %73 {offsets = [0, 256], sizes = [16, 128], strides = [1, 1]} : vector<16x512xf32> to vector<16x128xf32>
    %87 = math.tanh %86 : vector<16x128xf32>
    %88 = vector.extract_strided_slice %73 {offsets = [0, 384], sizes = [16, 128], strides = [1, 1]} : vector<16x512xf32> to vector<16x128xf32>
    %89 = arith.negf %88 : vector<16x128xf32>
    %90 = math.exp %89 : vector<16x128xf32>
    %cst_22 = arith.constant 1.000000e+00 : f32
    %91 = vector.broadcast %cst_22 : f32 to vector<16x128xf32>
    %92 = arith.addf %91, %90 : vector<16x128xf32>
    %93 = arith.divf %91, %92 : vector<16x128xf32>
    %94 = arith.mulf %85, %40 : vector<16x128xf32>
    %95 = arith.mulf %79, %87 : vector<16x128xf32>
    %96 = arith.addf %94, %95 : vector<16x128xf32>
    %97 = math.tanh %96 : vector<16x128xf32>
    %98 = arith.mulf %93, %97 : vector<16x128xf32>
    %99 = tpu.concatenate %98, %70 in 1 : vector<16x128xf32>, vector<16x128xf32> -> vector<16x256xf32>
    %cst_23 = arith.constant dense<0.000000e+00> : vector<16x512xf32>
    %100 = tpu.matmul %99, %4, %cst_23 {dimension_numbers = #tpu.dot_dimension_numbers<[1], [0], [0], [1], [0, 0, 1, 1], [], []>} : vector<16x256xf32>, vector<256x512xf32>, vector<16x512xf32> -> vector<16x512xf32>
    %101 = arith.addf %100, %7 : vector<16x512xf32>
    %102 = vector.extract_strided_slice %101 {offsets = [0, 0], sizes = [16, 128], strides = [1, 1]} : vector<16x512xf32> to vector<16x128xf32>
    %103 = arith.negf %102 : vector<16x128xf32>
    %104 = math.exp %103 : vector<16x128xf32>
    %cst_24 = arith.constant 1.000000e+00 : f32
    %105 = vector.broadcast %cst_24 : f32 to vector<16x128xf32>
    %106 = arith.addf %105, %104 : vector<16x128xf32>
    %107 = arith.divf %105, %106 : vector<16x128xf32>
    %108 = vector.extract_strided_slice %101 {offsets = [0, 128], sizes = [16, 128], strides = [1, 1]} : vector<16x512xf32> to vector<16x128xf32>
    %109 = arith.negf %108 : vector<16x128xf32>
    %110 = math.exp %109 : vector<16x128xf32>
    %cst_25 = arith.constant 1.000000e+00 : f32
    %111 = vector.broadcast %cst_25 : f32 to vector<16x128xf32>
    %112 = arith.addf %111, %110 : vector<16x128xf32>
    %113 = arith.divf %111, %112 : vector<16x128xf32>
    %114 = vector.extract_strided_slice %101 {offsets = [0, 256], sizes = [16, 128], strides = [1, 1]} : vector<16x512xf32> to vector<16x128xf32>
    %115 = math.tanh %114 : vector<16x128xf32>
    %116 = vector.extract_strided_slice %101 {offsets = [0, 384], sizes = [16, 128], strides = [1, 1]} : vector<16x512xf32> to vector<16x128xf32>
    %117 = arith.negf %116 : vector<16x128xf32>
    %118 = math.exp %117 : vector<16x128xf32>
    %cst_26 = arith.constant 1.000000e+00 : f32
    %119 = vector.broadcast %cst_26 : f32 to vector<16x128xf32>
    %120 = arith.addf %119, %118 : vector<16x128xf32>
    %121 = arith.divf %119, %120 : vector<16x128xf32>
    %122 = arith.mulf %113, %68 : vector<16x128xf32>
    %123 = arith.mulf %107, %115 : vector<16x128xf32>
    %124 = arith.addf %122, %123 : vector<16x128xf32>
    %125 = math.tanh %124 : vector<16x128xf32>
    %126 = arith.mulf %121, %125 : vector<16x128xf32>
    %127 = vector.extract_strided_slice %10 {offsets = [32, 0], sizes = [16, 512], strides = [1, 1]} : vector<64x512xf32> to vector<16x512xf32>
    %cst_27 = arith.constant dense<0.000000e+00> : vector<16x512xf32>
    %128 = tpu.matmul %98, %3, %cst_27 {dimension_numbers = #tpu.dot_dimension_numbers<[1], [0], [0], [1], [0, 0, 1, 1], [], []>} : vector<16x128xf32>, vector<128x512xf32>, vector<16x512xf32> -> vector<16x512xf32>
    %129 = arith.addf %127, %128 : vector<16x512xf32>
    %130 = vector.extract_strided_slice %129 {offsets = [0, 0], sizes = [16, 128], strides = [1, 1]} : vector<16x512xf32> to vector<16x128xf32>
    %131 = arith.negf %130 : vector<16x128xf32>
    %132 = math.exp %131 : vector<16x128xf32>
    %cst_28 = arith.constant 1.000000e+00 : f32
    %133 = vector.broadcast %cst_28 : f32 to vector<16x128xf32>
    %134 = arith.addf %133, %132 : vector<16x128xf32>
    %135 = arith.divf %133, %134 : vector<16x128xf32>
    %136 = vector.extract_strided_slice %129 {offsets = [0, 128], sizes = [16, 128], strides = [1, 1]} : vector<16x512xf32> to vector<16x128xf32>
    %137 = arith.negf %136 : vector<16x128xf32>
    %138 = math.exp %137 : vector<16x128xf32>
    %cst_29 = arith.constant 1.000000e+00 : f32
    %139 = vector.broadcast %cst_29 : f32 to vector<16x128xf32>
    %140 = arith.addf %139, %138 : vector<16x128xf32>
    %141 = arith.divf %139, %140 : vector<16x128xf32>
    %142 = vector.extract_strided_slice %129 {offsets = [0, 256], sizes = [16, 128], strides = [1, 1]} : vector<16x512xf32> to vector<16x128xf32>
    %143 = math.tanh %142 : vector<16x128xf32>
    %144 = vector.extract_strided_slice %129 {offsets = [0, 384], sizes = [16, 128], strides = [1, 1]} : vector<16x512xf32> to vector<16x128xf32>
    %145 = arith.negf %144 : vector<16x128xf32>
    %146 = math.exp %145 : vector<16x128xf32>
    %cst_30 = arith.constant 1.000000e+00 : f32
    %147 = vector.broadcast %cst_30 : f32 to vector<16x128xf32>
    %148 = arith.addf %147, %146 : vector<16x128xf32>
    %149 = arith.divf %147, %148 : vector<16x128xf32>
    %150 = arith.mulf %141, %96 : vector<16x128xf32>
    %151 = arith.mulf %135, %143 : vector<16x128xf32>
    %152 = arith.addf %150, %151 : vector<16x128xf32>
    %153 = math.tanh %152 : vector<16x128xf32>
    %154 = arith.mulf %149, %153 : vector<16x128xf32>
    %155 = tpu.concatenate %154, %126 in 1 : vector<16x128xf32>, vector<16x128xf32> -> vector<16x256xf32>
    %cst_31 = arith.constant dense<0.000000e+00> : vector<16x512xf32>
    %156 = tpu.matmul %155, %4, %cst_31 {dimension_numbers = #tpu.dot_dimension_numbers<[1], [0], [0], [1], [0, 0, 1, 1], [], []>} : vector<16x256xf32>, vector<256x512xf32>, vector<16x512xf32> -> vector<16x512xf32>
    %157 = arith.addf %156, %7 : vector<16x512xf32>
    %158 = vector.extract_strided_slice %157 {offsets = [0, 0], sizes = [16, 128], strides = [1, 1]} : vector<16x512xf32> to vector<16x128xf32>
    %159 = arith.negf %158 : vector<16x128xf32>
    %160 = math.exp %159 : vector<16x128xf32>
    %cst_32 = arith.constant 1.000000e+00 : f32
    %161 = vector.broadcast %cst_32 : f32 to vector<16x128xf32>
    %162 = arith.addf %161, %160 : vector<16x128xf32>
    %163 = arith.divf %161, %162 : vector<16x128xf32>
    %164 = vector.extract_strided_slice %157 {offsets = [0, 128], sizes = [16, 128], strides = [1, 1]} : vector<16x512xf32> to vector<16x128xf32>
    %165 = arith.negf %164 : vector<16x128xf32>
    %166 = math.exp %165 : vector<16x128xf32>
    %cst_33 = arith.constant 1.000000e+00 : f32
    %167 = vector.broadcast %cst_33 : f32 to vector<16x128xf32>
    %168 = arith.addf %167, %166 : vector<16x128xf32>
    %169 = arith.divf %167, %168 : vector<16x128xf32>
    %170 = vector.extract_strided_slice %157 {offsets = [0, 256], sizes = [16, 128], strides = [1, 1]} : vector<16x512xf32> to vector<16x128xf32>
    %171 = math.tanh %170 : vector<16x128xf32>
    %172 = vector.extract_strided_slice %157 {offsets = [0, 384], sizes = [16, 128], strides = [1, 1]} : vector<16x512xf32> to vector<16x128xf32>
    %173 = arith.negf %172 : vector<16x128xf32>
    %174 = math.exp %173 : vector<16x128xf32>
    %cst_34 = arith.constant 1.000000e+00 : f32
    %175 = vector.broadcast %cst_34 : f32 to vector<16x128xf32>
    %176 = arith.addf %175, %174 : vector<16x128xf32>
    %177 = arith.divf %175, %176 : vector<16x128xf32>
    %178 = arith.mulf %169, %124 : vector<16x128xf32>
    %179 = arith.mulf %163, %171 : vector<16x128xf32>
    %180 = arith.addf %178, %179 : vector<16x128xf32>
    %181 = math.tanh %180 : vector<16x128xf32>
    %182 = arith.mulf %177, %181 : vector<16x128xf32>
    %183 = vector.extract_strided_slice %10 {offsets = [48, 0], sizes = [16, 512], strides = [1, 1]} : vector<64x512xf32> to vector<16x512xf32>
    %cst_35 = arith.constant dense<0.000000e+00> : vector<16x512xf32>
    %184 = tpu.matmul %154, %3, %cst_35 {dimension_numbers = #tpu.dot_dimension_numbers<[1], [0], [0], [1], [0, 0, 1, 1], [], []>} : vector<16x128xf32>, vector<128x512xf32>, vector<16x512xf32> -> vector<16x512xf32>
    %185 = arith.addf %183, %184 : vector<16x512xf32>
    %186 = vector.extract_strided_slice %185 {offsets = [0, 0], sizes = [16, 128], strides = [1, 1]} : vector<16x512xf32> to vector<16x128xf32>
    %187 = arith.negf %186 : vector<16x128xf32>
    %188 = math.exp %187 : vector<16x128xf32>
    %cst_36 = arith.constant 1.000000e+00 : f32
    %189 = vector.broadcast %cst_36 : f32 to vector<16x128xf32>
    %190 = arith.addf %189, %188 : vector<16x128xf32>
    %191 = arith.divf %189, %190 : vector<16x128xf32>
    %192 = vector.extract_strided_slice %185 {offsets = [0, 128], sizes = [16, 128], strides = [1, 1]} : vector<16x512xf32> to vector<16x128xf32>
    %193 = arith.negf %192 : vector<16x128xf32>
    %194 = math.exp %193 : vector<16x128xf32>
    %cst_37 = arith.constant 1.000000e+00 : f32
    %195 = vector.broadcast %cst_37 : f32 to vector<16x128xf32>
    %196 = arith.addf %195, %194 : vector<16x128xf32>
    %197 = arith.divf %195, %196 : vector<16x128xf32>
    %198 = vector.extract_strided_slice %185 {offsets = [0, 256], sizes = [16, 128], strides = [1, 1]} : vector<16x512xf32> to vector<16x128xf32>
    %199 = math.tanh %198 : vector<16x128xf32>
    %200 = vector.extract_strided_slice %185 {offsets = [0, 384], sizes = [16, 128], strides = [1, 1]} : vector<16x512xf32> to vector<16x128xf32>
    %201 = arith.negf %200 : vector<16x128xf32>
    %202 = math.exp %201 : vector<16x128xf32>
    %cst_38 = arith.constant 1.000000e+00 : f32
    %203 = vector.broadcast %cst_38 : f32 to vector<16x128xf32>
    %204 = arith.addf %203, %202 : vector<16x128xf32>
    %205 = arith.divf %203, %204 : vector<16x128xf32>
    %206 = arith.mulf %197, %152 : vector<16x128xf32>
    %207 = arith.mulf %191, %199 : vector<16x128xf32>
    %208 = arith.addf %206, %207 : vector<16x128xf32>
    %209 = math.tanh %208 : vector<16x128xf32>
    %210 = arith.mulf %205, %209 : vector<16x128xf32>
    %211 = tpu.concatenate %210, %182 in 1 : vector<16x128xf32>, vector<16x128xf32> -> vector<16x256xf32>
    %cst_39 = arith.constant dense<0.000000e+00> : vector<16x512xf32>
    %212 = tpu.matmul %211, %4, %cst_39 {dimension_numbers = #tpu.dot_dimension_numbers<[1], [0], [0], [1], [0, 0, 1, 1], [], []>} : vector<16x256xf32>, vector<256x512xf32>, vector<16x512xf32> -> vector<16x512xf32>
    %213 = arith.addf %212, %7 : vector<16x512xf32>
    %214 = vector.extract_strided_slice %213 {offsets = [0, 0], sizes = [16, 128], strides = [1, 1]} : vector<16x512xf32> to vector<16x128xf32>
    %215 = arith.negf %214 : vector<16x128xf32>
    %216 = math.exp %215 : vector<16x128xf32>
    %cst_40 = arith.constant 1.000000e+00 : f32
    %217 = vector.broadcast %cst_40 : f32 to vector<16x128xf32>
    %218 = arith.addf %217, %216 : vector<16x128xf32>
    %219 = arith.divf %217, %218 : vector<16x128xf32>
    %220 = vector.extract_strided_slice %213 {offsets = [0, 128], sizes = [16, 128], strides = [1, 1]} : vector<16x512xf32> to vector<16x128xf32>
    %221 = arith.negf %220 : vector<16x128xf32>
    %222 = math.exp %221 : vector<16x128xf32>
    %cst_41 = arith.constant 1.000000e+00 : f32
    %223 = vector.broadcast %cst_41 : f32 to vector<16x128xf32>
    %224 = arith.addf %223, %222 : vector<16x128xf32>
    %225 = arith.divf %223, %224 : vector<16x128xf32>
    %226 = vector.extract_strided_slice %213 {offsets = [0, 256], sizes = [16, 128], strides = [1, 1]} : vector<16x512xf32> to vector<16x128xf32>
    %227 = math.tanh %226 : vector<16x128xf32>
    %228 = vector.extract_strided_slice %213 {offsets = [0, 384], sizes = [16, 128], strides = [1, 1]} : vector<16x512xf32> to vector<16x128xf32>
    %229 = arith.negf %228 : vector<16x128xf32>
    %230 = math.exp %229 : vector<16x128xf32>
    %cst_42 = arith.constant 1.000000e+00 : f32
    %231 = vector.broadcast %cst_42 : f32 to vector<16x128xf32>
    %232 = arith.addf %231, %230 : vector<16x128xf32>
    %233 = arith.divf %231, %232 : vector<16x128xf32>
    %234 = arith.mulf %225, %180 : vector<16x128xf32>
    %235 = arith.mulf %219, %227 : vector<16x128xf32>
    %236 = arith.addf %234, %235 : vector<16x128xf32>
    %237 = math.tanh %236 : vector<16x128xf32>
    %238 = arith.mulf %233, %237 : vector<16x128xf32>
    %239 = tpu.concatenate %70, %126, %182, %238 in 1 : vector<16x128xf32>, vector<16x128xf32>, vector<16x128xf32>, vector<16x128xf32> -> vector<16x512xf32>
    %c408 = arith.constant 408 : index
    %c0_43 = arith.constant 0 : index
    %240 = vector.load %arg2[%c408, %c0_43] : memref<968x512xf32, #tpu.memory_space<vmem>>, vector<512x16xf32>
    %cst_44 = arith.constant dense<0.000000e+00> : vector<16x16xf32>
    %241 = tpu.matmul %239, %240, %cst_44 {dimension_numbers = #tpu.dot_dimension_numbers<[1], [0], [0], [1], [0, 0, 1, 1], [], []>} : vector<16x512xf32>, vector<512x16xf32>, vector<16x16xf32> -> vector<16x16xf32>
    %c0_45 = arith.constant 0 : index
    %c0_46 = arith.constant 0 : index
    %242 = vector.load %arg1[%c0_45, %c0_46] : memref<16x16xf32, #tpu.memory_space<vmem>>, vector<16x16xf32>
    %cst_47 = arith.constant 0.000000e+00 : f32
    %243 = vector.broadcast %cst_47 : f32 to vector<16x16xf32>
    %244 = arith.cmpf ogt, %242, %243 : vector<16x16xf32>
    %cst_48 = arith.constant 0.000000e+00 : f32
    %cst_49 = arith.constant -9.000000e+15 : f32
    %245 = vector.broadcast %cst_48 : f32 to vector<16x16xf32>
    %246 = vector.broadcast %cst_49 : f32 to vector<16x16xf32>
    %247 = arith.select %244, %245, %246 : vector<16x16xi1>, vector<16x16xf32>
    %cst_50 = arith.constant 0.000000e+00 : f32
    %248 = vector.broadcast %cst_50 : f32 to vector<16x3xf32>
    %249 = vector.extract_strided_slice %241 {offsets = [0, 0], sizes = [16, 8], strides = [1, 1]} : vector<16x16xf32> to vector<16x8xf32>
    %c920 = arith.constant 920 : index
    %c0_51 = arith.constant 0 : index
    %250 = vector.load %arg2[%c920, %c0_51] : memref<968x512xf32, #tpu.memory_space<vmem>>, vector<1x8xf32>
    %c928 = arith.constant 928 : index
    %c0_52 = arith.constant 0 : index
    %251 = vector.load %arg2[%c928, %c0_52] : memref<968x512xf32, #tpu.memory_space<vmem>>, vector<1x8xf32>
    %252 = vector.broadcast %250 : vector<1x8xf32> to vector<16x8xf32>
    %253 = arith.mulf %249, %252 : vector<16x8xf32>
    %cst_53 = arith.constant dense<0.000000e+00> : vector<16xf32>
    %254 = vector.multi_reduction <add>, %253, %cst_53 [1] : vector<16x8xf32> to vector<16xf32>
    %255 = vector.shape_cast %254 : vector<16xf32> to vector<16x1xf32>
    %256 = vector.broadcast %251 : vector<1x8xf32> to vector<16x8xf32>
    %257 = arith.mulf %249, %256 : vector<16x8xf32>
    %cst_54 = arith.constant dense<0.000000e+00> : vector<16xf32>
    %258 = vector.multi_reduction <add>, %257, %cst_54 [1] : vector<16x8xf32> to vector<16xf32>
    %259 = vector.shape_cast %258 : vector<16xf32> to vector<16x1xf32>
    %260 = tpu.transpose %259, [1, 0] : vector<16x1xf32> -> vector<1x16xf32>
    %261 = vector.broadcast %255 : vector<16x1xf32> to vector<16x16xf32>
    %262 = vector.broadcast %260 : vector<1x16xf32> to vector<16x16xf32>
    %263 = arith.addf %261, %262 : vector<16x16xf32>
    %cst_55 = arith.constant 0.000000e+00 : f32
    %264 = vector.broadcast %cst_55 : f32 to vector<16x16xf32>
    %265 = arith.cmpf ogt, %263, %264 : vector<16x16xf32>
    %cst_56 = arith.constant 2.000000e-01 : f32
    %266 = vector.broadcast %cst_56 : f32 to vector<16x16xf32>
    %267 = arith.mulf %266, %263 : vector<16x16xf32>
    %268 = arith.select %265, %263, %267 : vector<16x16xi1>, vector<16x16xf32>
    %269 = arith.addf %268, %247 : vector<16x16xf32>
    %cst_57 = arith.constant dense<0xFF800000> : vector<16xf32>
    %270 = vector.multi_reduction <maximumf>, %269, %cst_57 [1] : vector<16x16xf32> to vector<16xf32>
    %271 = vector.shape_cast %270 : vector<16xf32> to vector<16x1xf32>
    %272 = vector.broadcast %271 : vector<16x1xf32> to vector<16x16xf32>
    %273 = arith.subf %269, %272 : vector<16x16xf32>
    %274 = math.exp %273 : vector<16x16xf32>
    %cst_58 = arith.constant dense<0.000000e+00> : vector<16xf32>
    %275 = vector.multi_reduction <add>, %274, %cst_58 [1] : vector<16x16xf32> to vector<16xf32>
    %276 = vector.shape_cast %275 : vector<16xf32> to vector<16x1xf32>
    %cst_59 = arith.constant 1.000000e-30 : f32
    %277 = vector.broadcast %cst_59 : f32 to vector<16x1xf32>
    %278 = arith.maximumf %276, %277 : vector<16x1xf32>
    %279 = tpu.reciprocal %278 : vector<16x1xf32> -> vector<16x1xf32>
    %280 = vector.broadcast %279 : vector<16x1xf32> to vector<16x16xf32>
    %281 = arith.mulf %274, %280 : vector<16x16xf32>
    %cst_60 = arith.constant dense<0.000000e+00> : vector<16x8xf32>
    %282 = tpu.matmul %281, %249, %cst_60 {dimension_numbers = #tpu.dot_dimension_numbers<[1], [0], [0], [1], [0, 0, 1, 1], [], []>} : vector<16x16xf32>, vector<16x8xf32>, vector<16x8xf32> -> vector<16x8xf32>
    %cst_61 = arith.constant 0.000000e+00 : f32
    %283 = vector.broadcast %cst_61 : f32 to vector<16x8xf32>
    %284 = arith.cmpf ogt, %282, %283 : vector<16x8xf32>
    %285 = math.exp %282 : vector<16x8xf32>
    %cst_62 = arith.constant 1.000000e+00 : f32
    %286 = vector.broadcast %cst_62 : f32 to vector<16x8xf32>
    %287 = arith.subf %285, %286 : vector<16x8xf32>
    %288 = arith.select %284, %282, %287 : vector<16x8xi1>, vector<16x8xf32>
    %c936 = arith.constant 936 : index
    %c0_63 = arith.constant 0 : index
    %289 = vector.load %arg2[%c936, %c0_63] : memref<968x512xf32, #tpu.memory_space<vmem>>, vector<8x3xf32>
    %cst_64 = arith.constant dense<0.000000e+00> : vector<16x3xf32>
    %290 = tpu.matmul %288, %289, %cst_64 {dimension_numbers = #tpu.dot_dimension_numbers<[1], [0], [0], [1], [0, 0, 1, 1], [], []>} : vector<16x8xf32>, vector<8x3xf32>, vector<16x3xf32> -> vector<16x3xf32>
    %291 = arith.addf %248, %290 : vector<16x3xf32>
    %292 = vector.extract_strided_slice %241 {offsets = [0, 8], sizes = [16, 8], strides = [1, 1]} : vector<16x16xf32> to vector<16x8xf32>
    %c921 = arith.constant 921 : index
    %c0_65 = arith.constant 0 : index
    %293 = vector.load %arg2[%c921, %c0_65] : memref<968x512xf32, #tpu.memory_space<vmem>>, vector<1x8xf32>
    %c929 = arith.constant 929 : index
    %c0_66 = arith.constant 0 : index
    %294 = vector.load %arg2[%c929, %c0_66] : memref<968x512xf32, #tpu.memory_space<vmem>>, vector<1x8xf32>
    %295 = vector.broadcast %293 : vector<1x8xf32> to vector<16x8xf32>
    %296 = arith.mulf %292, %295 : vector<16x8xf32>
    %cst_67 = arith.constant dense<0.000000e+00> : vector<16xf32>
    %297 = vector.multi_reduction <add>, %296, %cst_67 [1] : vector<16x8xf32> to vector<16xf32>
    %298 = vector.shape_cast %297 : vector<16xf32> to vector<16x1xf32>
    %299 = vector.broadcast %294 : vector<1x8xf32> to vector<16x8xf32>
    %300 = arith.mulf %292, %299 : vector<16x8xf32>
    %cst_68 = arith.constant dense<0.000000e+00> : vector<16xf32>
    %301 = vector.multi_reduction <add>, %300, %cst_68 [1] : vector<16x8xf32> to vector<16xf32>
    %302 = vector.shape_cast %301 : vector<16xf32> to vector<16x1xf32>
    %303 = tpu.transpose %302, [1, 0] : vector<16x1xf32> -> vector<1x16xf32>
    %304 = vector.broadcast %298 : vector<16x1xf32> to vector<16x16xf32>
    %305 = vector.broadcast %303 : vector<1x16xf32> to vector<16x16xf32>
    %306 = arith.addf %304, %305 : vector<16x16xf32>
    %cst_69 = arith.constant 0.000000e+00 : f32
    %307 = vector.broadcast %cst_69 : f32 to vector<16x16xf32>
    %308 = arith.cmpf ogt, %306, %307 : vector<16x16xf32>
    %cst_70 = arith.constant 2.000000e-01 : f32
    %309 = vector.broadcast %cst_70 : f32 to vector<16x16xf32>
    %310 = arith.mulf %309, %306 : vector<16x16xf32>
    %311 = arith.select %308, %306, %310 : vector<16x16xi1>, vector<16x16xf32>
    %312 = arith.addf %311, %247 : vector<16x16xf32>
    %cst_71 = arith.constant dense<0xFF800000> : vector<16xf32>
    %313 = vector.multi_reduction <maximumf>, %312, %cst_71 [1] : vector<16x16xf32> to vector<16xf32>
    %314 = vector.shape_cast %313 : vector<16xf32> to vector<16x1xf32>
    %315 = vector.broadcast %314 : vector<16x1xf32> to vector<16x16xf32>
    %316 = arith.subf %312, %315 : vector<16x16xf32>
    %317 = math.exp %316 : vector<16x16xf32>
    %cst_72 = arith.constant dense<0.000000e+00> : vector<16xf32>
    %318 = vector.multi_reduction <add>, %317, %cst_72 [1] : vector<16x16xf32> to vector<16xf32>
    %319 = vector.shape_cast %318 : vector<16xf32> to vector<16x1xf32>
    %cst_73 = arith.constant 1.000000e-30 : f32
    %320 = vector.broadcast %cst_73 : f32 to vector<16x1xf32>
    %321 = arith.maximumf %319, %320 : vector<16x1xf32>
    %322 = tpu.reciprocal %321 : vector<16x1xf32> -> vector<16x1xf32>
    %323 = vector.broadcast %322 : vector<16x1xf32> to vector<16x16xf32>
    %324 = arith.mulf %317, %323 : vector<16x16xf32>
    %cst_74 = arith.constant dense<0.000000e+00> : vector<16x8xf32>
    %325 = tpu.matmul %324, %292, %cst_74 {dimension_numbers = #tpu.dot_dimension_numbers<[1], [0], [0], [1], [0, 0, 1, 1], [], []>} : vector<16x16xf32>, vector<16x8xf32>, vector<16x8xf32> -> vector<16x8xf32>
    %cst_75 = arith.constant 0.000000e+00 : f32
    %326 = vector.broadcast %cst_75 : f32 to vector<16x8xf32>
    %327 = arith.cmpf ogt, %325, %326 : vector<16x8xf32>
    %328 = math.exp %325 : vector<16x8xf32>
    %cst_76 = arith.constant 1.000000e+00 : f32
    %329 = vector.broadcast %cst_76 : f32 to vector<16x8xf32>
    %330 = arith.subf %328, %329 : vector<16x8xf32>
    %331 = arith.select %327, %325, %330 : vector<16x8xi1>, vector<16x8xf32>
    %c944 = arith.constant 944 : index
    %c0_77 = arith.constant 0 : index
    %332 = vector.load %arg2[%c944, %c0_77] : memref<968x512xf32, #tpu.memory_space<vmem>>, vector<8x3xf32>
    %cst_78 = arith.constant dense<0.000000e+00> : vector<16x3xf32>
    %333 = tpu.matmul %331, %332, %cst_78 {dimension_numbers = #tpu.dot_dimension_numbers<[1], [0], [0], [1], [0, 0, 1, 1], [], []>} : vector<16x8xf32>, vector<8x3xf32>, vector<16x3xf32> -> vector<16x3xf32>
    %334 = arith.addf %291, %333 : vector<16x3xf32>
    %c952 = arith.constant 952 : index
    %c0_79 = arith.constant 0 : index
    %335 = vector.load %arg2[%c952, %c0_79] : memref<968x512xf32, #tpu.memory_space<vmem>>, vector<1x3xf32>
    %c960 = arith.constant 960 : index
    %c0_80 = arith.constant 0 : index
    %336 = vector.load %arg2[%c960, %c0_80] : memref<968x512xf32, #tpu.memory_space<vmem>>, vector<1x3xf32>
    %337 = vector.broadcast %335 : vector<1x3xf32> to vector<16x3xf32>
    %338 = arith.mulf %334, %337 : vector<16x3xf32>
    %cst_81 = arith.constant dense<0.000000e+00> : vector<16xf32>
    %339 = vector.multi_reduction <add>, %338, %cst_81 [1] : vector<16x3xf32> to vector<16xf32>
    %340 = vector.shape_cast %339 : vector<16xf32> to vector<16x1xf32>
    %341 = vector.broadcast %336 : vector<1x3xf32> to vector<16x3xf32>
    %342 = arith.mulf %334, %341 : vector<16x3xf32>
    %cst_82 = arith.constant dense<0.000000e+00> : vector<16xf32>
    %343 = vector.multi_reduction <add>, %342, %cst_82 [1] : vector<16x3xf32> to vector<16xf32>
    %344 = vector.shape_cast %343 : vector<16xf32> to vector<16x1xf32>
    %345 = tpu.transpose %344, [1, 0] : vector<16x1xf32> -> vector<1x16xf32>
    %346 = vector.broadcast %340 : vector<16x1xf32> to vector<16x16xf32>
    %347 = vector.broadcast %345 : vector<1x16xf32> to vector<16x16xf32>
    %348 = arith.addf %346, %347 : vector<16x16xf32>
    %cst_83 = arith.constant 0.000000e+00 : f32
    %349 = vector.broadcast %cst_83 : f32 to vector<16x16xf32>
    %350 = arith.cmpf ogt, %348, %349 : vector<16x16xf32>
    %cst_84 = arith.constant 2.000000e-01 : f32
    %351 = vector.broadcast %cst_84 : f32 to vector<16x16xf32>
    %352 = arith.mulf %351, %348 : vector<16x16xf32>
    %353 = arith.select %350, %348, %352 : vector<16x16xi1>, vector<16x16xf32>
    %354 = arith.addf %353, %247 : vector<16x16xf32>
    %cst_85 = arith.constant dense<0xFF800000> : vector<16xf32>
    %355 = vector.multi_reduction <maximumf>, %354, %cst_85 [1] : vector<16x16xf32> to vector<16xf32>
    %356 = vector.shape_cast %355 : vector<16xf32> to vector<16x1xf32>
    %357 = vector.broadcast %356 : vector<16x1xf32> to vector<16x16xf32>
    %358 = arith.subf %354, %357 : vector<16x16xf32>
    %359 = math.exp %358 : vector<16x16xf32>
    %cst_86 = arith.constant dense<0.000000e+00> : vector<16xf32>
    %360 = vector.multi_reduction <add>, %359, %cst_86 [1] : vector<16x16xf32> to vector<16xf32>
    %361 = vector.shape_cast %360 : vector<16xf32> to vector<16x1xf32>
    %cst_87 = arith.constant 1.000000e-30 : f32
    %362 = vector.broadcast %cst_87 : f32 to vector<16x1xf32>
    %363 = arith.maximumf %361, %362 : vector<16x1xf32>
    %364 = tpu.reciprocal %363 : vector<16x1xf32> -> vector<16x1xf32>
    %365 = vector.broadcast %364 : vector<16x1xf32> to vector<16x16xf32>
    %366 = arith.mulf %359, %365 : vector<16x16xf32>
    %cst_88 = arith.constant dense<0.000000e+00> : vector<16x3xf32>
    %367 = tpu.matmul %366, %334, %cst_88 {dimension_numbers = #tpu.dot_dimension_numbers<[1], [0], [0], [1], [0, 0, 1, 1], [], []>} : vector<16x16xf32>, vector<16x3xf32>, vector<16x3xf32> -> vector<16x3xf32>
    %cst_89 = arith.constant 0.000000e+00 : f32
    %368 = vector.broadcast %cst_89 : f32 to vector<16x3xf32>
    %369 = arith.cmpf ogt, %367, %368 : vector<16x3xf32>
    %370 = math.exp %367 : vector<16x3xf32>
    %cst_90 = arith.constant 1.000000e+00 : f32
    %371 = vector.broadcast %cst_90 : f32 to vector<16x3xf32>
    %372 = arith.subf %370, %371 : vector<16x3xf32>
    %373 = arith.select %369, %367, %372 : vector<16x3xi1>, vector<16x3xf32>
    %cst_91 = arith.constant dense<0xFF800000> : vector<16xf32>
    %374 = vector.multi_reduction <maximumf>, %373, %cst_91 [1] : vector<16x3xf32> to vector<16xf32>
    %375 = vector.shape_cast %374 : vector<16xf32> to vector<16x1xf32>
    %376 = vector.broadcast %375 : vector<16x1xf32> to vector<16x3xf32>
    %377 = arith.subf %373, %376 : vector<16x3xf32>
    %378 = math.exp %377 : vector<16x3xf32>
    %cst_92 = arith.constant dense<0.000000e+00> : vector<16xf32>
    %379 = vector.multi_reduction <add>, %378, %cst_92 [1] : vector<16x3xf32> to vector<16xf32>
    %380 = vector.shape_cast %379 : vector<16xf32> to vector<16x1xf32>
    %381 = math.log %380 : vector<16x1xf32>
    %382 = vector.broadcast %381 : vector<16x1xf32> to vector<16x3xf32>
    %383 = arith.subf %377, %382 : vector<16x3xf32>
    %c0_93 = arith.constant 0 : index
    %c0_94 = arith.constant 0 : index
    %384 = vector.load %arg3[%c0_93, %c0_94] : memref<16x3xf32, #tpu.memory_space<vmem>>, vector<16x3xf32>
    tpu.vector_store %arg3[%c0_93, %c0_94], %383 {strides = array<i32>} : memref<16x3xf32, #tpu.memory_space<vmem>>, vector<16x3xf32>,
    return
  }
}

</mosaic_0001>

<llo_original>
// kernel: gat_with_lstm_forward.1
$region0: #{gat_with_lstm_forward.1}
  #allocation0 [shape = 'u32[]', space=smem, size = 0x4, offset = 0x4, fixed_abs, tag = 'smem constant byte address 0x4 - core index']
  #allocation1 [shape = 'u32[72,128]{1,0:T(1,128)}', space=vmem, size = 0x9000, scoped, tag = 'internal scratch']
  %s0 = inlined_call_operand.vmem [shape: f32[64,8], index: 0, kind: input, shape index: {}]
  %s1 = inlined_call_operand.vmem [shape: f32[16,16], index: 1, kind: input, shape index: {}]
  %s2 = inlined_call_operand.vmem [shape: f32[968,512], index: 2, kind: input, shape index: {}]
  %s3 = inlined_call_operand.vmem [shape: f32[16,3], index: 3, kind: output, shape index: {}]
  %s4 = sld [smem:[#allocation0]]
  $region22: #{gat_with_lstm_forward.1} parent=0
    _
  %s6 = ssub.s32 1, %s4
  %s7 = scalar_select 0, %s6, %s4
  // Predicated region
  $region2: #{gat_with_lstm_forward.1} parent=0 // pred_check
    _
  $region3: #{gat_with_lstm_forward.1} parent=0 // pred_check_branch
    %9 = sbr.rel (0) target = $region5
  $region4: #{gat_with_lstm_forward.1} parent=0 // pred_region
    _
  $region5: #{gat_with_lstm_forward.1} parent=0 // pred_fallthru
    _
  // Predicated region
  $region6: #{gat_with_lstm_forward.1} parent=0 // pred_check
    _
  $region7: #{gat_with_lstm_forward.1} parent=0 // pred_check_branch
    %11 = sbr.rel (0) target = $region9
  $region8: #{gat_with_lstm_forward.1} parent=0 // pred_region
    _
  $region9: #{gat_with_lstm_forward.1} parent=0 // pred_fallthru
    _
  // Predicated region
  $region10: #{gat_with_lstm_forward.1} parent=0 // pred_check
    _
  $region11: #{gat_with_lstm_forward.1} parent=0 // pred_check_branch
    %13 = sbr.rel (0) target = $region13
  $region12: #{gat_with_lstm_forward.1} parent=0 // pred_region
    _
  $region13: #{gat_with_lstm_forward.1} parent=0 // pred_fallthru
    _
  %v14 = vld [vmem:[%s0] sm:$0xff]
  %v15 = vld [vmem:[%s0 + $0x8] sm:$0xff]
  %v16 = vld [vmem:[%s0 + $0x10] sm:$0xff]
  %v17 = vld [vmem:[%s0 + $0x18] sm:$0xff]
  %v18 = vld [vmem:[%s0 + $0x20] sm:$0xff]
  %v19 = vld [vmem:[%s0 + $0x28] sm:$0xff]
  %v20 = vld [vmem:[%s0 + $0x30] sm:$0xff]
  %v21 = vld [vmem:[%s0 + $0x38] sm:$0xff]
  %v22 = vld [vmem:[%s2] sm:$0xff]
  %v23 = vld [vmem:[%s2 + $0x8] sm:$0xff]
  %v24 = vld [vmem:[%s2 + $0x10] sm:$0xff]
  %v25 = vld [vmem:[%s2 + $0x18] sm:$0xff]
  %s26 = scalar_lea.vmem %s2, 32
  %v27 = vld [vmem:[%s26] ss:$8 sm:$0xf]
  %v28 = vld [vmem:[%s2 + $0x40] sm:$0xff]
  %v29 = vld [vmem:[%s2 + $0x48] sm:$0xff]
  %v30 = vld [vmem:[%s2 + $0x50] sm:$0xff]
  %v31 = vld [vmem:[%s2 + $0x58] sm:$0xff]
  %v32 = vld [vmem:[%s2 + $0x60] sm:$0xff]
  %v33 = vld [vmem:[%s2 + $0x68] sm:$0xff]
  %v34 = vld [vmem:[%s2 + $0x70] sm:$0xff]
  %v35 = vld [vmem:[%s2 + $0x78] sm:$0xff]
  %v36 = vld [vmem:[%s2 + $0x80] sm:$0xff]
  %v37 = vld [vmem:[%s2 + $0x88] sm:$0xff]
  %v38 = vld [vmem:[%s2 + $0x90] sm:$0xff]
  %v39 = vld [vmem:[%s2 + $0x98] sm:$0xff]
  %v40 = vld [vmem:[%s2 + $0xa0] sm:$0xff]
  %v41 = vld [vmem:[%s2 + $0xa8] sm:$0xff]
  %v42 = vld [vmem:[%s2 + $0xb0] sm:$0xff]
  %v43 = vld [vmem:[%s2 + $0xb8] sm:$0xff]
  %v44 = vld [vmem:[%s2 + $0xc0] sm:$0xff]
  %v45 = vld [vmem:[%s2 + $0xc8] sm:$0xff]
  %v46 = vld [vmem:[%s2 + $0xd0] sm:$0xff]
  %v47 = vld [vmem:[%s2 + $0xd8] sm:$0xff]
  %v48 = vld [vmem:[%s2 + $0xe0] sm:$0xff]
  %v49 = vld [vmem:[%s2 + $0xe8] sm:$0xff]
  %v50 = vld [vmem:[%s2 + $0xf0] sm:$0xff]
  %v51 = vld [vmem:[%s2 + $0xf8] sm:$0xff]
  %v52 = vld [vmem:[%s2 + $0x100] sm:$0xff]
  %v53 = vld [vmem:[%s2 + $0x108] sm:$0xff]
  %v54 = vld [vmem:[%s2 + $0x110] sm:$0xff]
  %v55 = vld [vmem:[%s2 + $0x118] sm:$0xff]
  %v56 = vld [vmem:[%s2 + $0x120] sm:$0xff]
  %v57 = vld [vmem:[%s2 + $0x128] sm:$0xff]
  %v58 = vld [vmem:[%s2 + $0x130] sm:$0xff]
  %v59 = vld [vmem:[%s2 + $0x138] sm:$0xff]
  %v60 = vld [vmem:[%s2 + $0x140] sm:$0xff]
  %v61 = vld [vmem:[%s2 + $0x148] sm:$0xff]
  %v62 = vld [vmem:[%s2 + $0x150] sm:$0xff]
  %v63 = vld [vmem:[%s2 + $0x158] sm:$0xff]
  %v64 = vld [vmem:[%s2 + $0x160] sm:$0xff]
  %v65 = vld [vmem:[%s2 + $0x168] sm:$0xff]
  %v66 = vld [vmem:[%s2 + $0x170] sm:$0xff]
  %v67 = vld [vmem:[%s2 + $0x178] sm:$0xff]
  %v68 = vld [vmem:[%s2 + $0x180] sm:$0xff]
  %v69 = vld [vmem:[%s2 + $0x188] sm:$0xff]
  %v70 = vld [vmem:[%s2 + $0x190] sm:$0xff]
  %v71 = vld [vmem:[%s2 + $0x198] sm:$0xff]
  %v72 = vld [vmem:[%s2 + $0x1a0] sm:$0xff]
  %v73 = vld [vmem:[%s2 + $0x1a8] sm:$0xff]
  %v74 = vld [vmem:[%s2 + $0x1b0] sm:$0xff]
  %v75 = vld [vmem:[%s2 + $0x1b8] sm:$0xff]
  %v76 = vld [vmem:[%s2 + $0x1c0] sm:$0xff]
  %v77 = vld [vmem:[%s2 + $0x1c8] sm:$0xff]
  %v78 = vld [vmem:[%s2 + $0x1d0] sm:$0xff]
  %v79 = vld [vmem:[%s2 + $0x1d8] sm:$0xff]
  %v80 = vld [vmem:[%s2 + $0x1e0] sm:$0xff]
  %v81 = vld [vmem:[%s2 + $0x1e8] sm:$0xff]
  %v82 = vld [vmem:[%s2 + $0x1f0] sm:$0xff]
  %v83 = vld [vmem:[%s2 + $0x1f8] sm:$0xff]
  %v84 = vld [vmem:[%s2 + $0x200] sm:$0xff]
  %v85 = vld [vmem:[%s2 + $0x208] sm:$0xff]
  %v86 = vld [vmem:[%s2 + $0x210] sm:$0xff]
  %v87 = vld [vmem:[%s2 + $0x218] sm:$0xff]
  %v88 = vld [vmem:[%s2 + $0x220] sm:$0xff]
  %v89 = vld [vmem:[%s2 + $0x228] sm:$0xff]
  %v90 = vld [vmem:[%s2 + $0x230] sm:$0xff]
  %v91 = vld [vmem:[%s2 + $0x238] sm:$0xff]
  %v92 = vld [vmem:[%s2 + $0x240] sm:$0xff]
  %v93 = vld [vmem:[%s2 + $0x248] sm:$0xff]
  %v94 = vld [vmem:[%s2 + $0x250] sm:$0xff]
  %v95 = vld [vmem:[%s2 + $0x258] sm:$0xff]
  %v96 = vld [vmem:[%s2 + $0x260] sm:$0xff]
  %v97 = vld [vmem:[%s2 + $0x268] sm:$0xff]
  %v98 = vld [vmem:[%s2 + $0x270] sm:$0xff]
  %v99 = vld [vmem:[%s2 + $0x278] sm:$0xff]
  %v100 = vld [vmem:[%s2 + $0x280] sm:$0xff]
  %v101 = vld [vmem:[%s2 + $0x288] sm:$0xff]
  %v102 = vld [vmem:[%s2 + $0x290] sm:$0xff]
  %v103 = vld [vmem:[%s2 + $0x298] sm:$0xff]
  %v104 = vld [vmem:[%s2 + $0x2a0] sm:$0xff]
  %v105 = vld [vmem:[%s2 + $0x2a8] sm:$0xff]
  %v106 = vld [vmem:[%s2 + $0x2b0] sm:$0xff]
  %v107 = vld [vmem:[%s2 + $0x2b8] sm:$0xff]
  %v108 = vld [vmem:[%s2 + $0x2c0] sm:$0xff]
  %v109 = vld [vmem:[%s2 + $0x2c8] sm:$0xff]
  %v110 = vld [vmem:[%s2 + $0x2d0] sm:$0xff]
  %v111 = vld [vmem:[%s2 + $0x2d8] sm:$0xff]
  %v112 = vld [vmem:[%s2 + $0x2e0] sm:$0xff]
  %v113 = vld [vmem:[%s2 + $0x2e8] sm:$0xff]
  %v114 = vld [vmem:[%s2 + $0x2f0] sm:$0xff]
  %v115 = vld [vmem:[%s2 + $0x2f8] sm:$0xff]
  %v116 = vld [vmem:[%s2 + $0x300] sm:$0xff]
  %v117 = vld [vmem:[%s2 + $0x308] sm:$0xff]
  %v118 = vld [vmem:[%s2 + $0x310] sm:$0xff]
  %v119 = vld [vmem:[%s2 + $0x318] sm:$0xff]
  %v120 = vld [vmem:[%s2 + $0x320] sm:$0xff]
  %v121 = vld [vmem:[%s2 + $0x328] sm:$0xff]
  %v122 = vld [vmem:[%s2 + $0x330] sm:$0xff]
  %v123 = vld [vmem:[%s2 + $0x338] sm:$0xff]
  %v124 = vld [vmem:[%s2 + $0x340] sm:$0xff]
  %v125 = vld [vmem:[%s2 + $0x348] sm:$0xff]
  %v126 = vld [vmem:[%s2 + $0x350] sm:$0xff]
  %v127 = vld [vmem:[%s2 + $0x358] sm:$0xff]
  %v128 = vld [vmem:[%s2 + $0x360] sm:$0xff]
  %v129 = vld [vmem:[%s2 + $0x368] sm:$0xff]
  %v130 = vld [vmem:[%s2 + $0x370] sm:$0xff]
  %v131 = vld [vmem:[%s2 + $0x378] sm:$0xff]
  %v132 = vld [vmem:[%s2 + $0x380] sm:$0xff]
  %v133 = vld [vmem:[%s2 + $0x388] sm:$0xff]
  %v134 = vld [vmem:[%s2 + $0x390] sm:$0xff]
  %v135 = vld [vmem:[%s2 + $0x398] sm:$0xff]
  %v136 = vld [vmem:[%s2 + $0x3a0] sm:$0xff]
  %v137 = vld [vmem:[%s2 + $0x3a8] sm:$0xff]
  %v138 = vld [vmem:[%s2 + $0x3b0] sm:$0xff]
  %v139 = vld [vmem:[%s2 + $0x3b8] sm:$0xff]
  %v140 = vld [vmem:[%s2 + $0x3c0] sm:$0xff]
  %v141 = vld [vmem:[%s2 + $0x3c8] sm:$0xff]
  %v142 = vld [vmem:[%s2 + $0x3d0] sm:$0xff]
  %v143 = vld [vmem:[%s2 + $0x3d8] sm:$0xff]
  %v144 = vld [vmem:[%s2 + $0x3e0] sm:$0xff]
  %v145 = vld [vmem:[%s2 + $0x3e8] sm:$0xff]
  %v146 = vld [vmem:[%s2 + $0x3f0] sm:$0xff]
  %v147 = vld [vmem:[%s2 + $0x3f8] sm:$0xff]
  %v148 = vld [vmem:[%s2 + $0x400] sm:$0xff]
  %v149 = vld [vmem:[%s2 + $0x408] sm:$0xff]
  %v150 = vld [vmem:[%s2 + $0x410] sm:$0xff]
  %v151 = vld [vmem:[%s2 + $0x418] sm:$0xff]
  %v152 = vld [vmem:[%s2 + $0x420] sm:$0xff]
  %v153 = vld [vmem:[%s2 + $0x428] sm:$0xff]
  %v154 = vld [vmem:[%s2 + $0x430] sm:$0xff]
  %v155 = vld [vmem:[%s2 + $0x438] sm:$0xff]
  %v156 = vld [vmem:[%s2 + $0x440] sm:$0xff]
  %v157 = vld [vmem:[%s2 + $0x448] sm:$0xff]
  %v158 = vld [vmem:[%s2 + $0x450] sm:$0xff]
  %v159 = vld [vmem:[%s2 + $0x458] sm:$0xff]
  %v160 = vld [vmem:[%s2 + $0x460] sm:$0xff]
  %v161 = vld [vmem:[%s2 + $0x468] sm:$0xff]
  %v162 = vld [vmem:[%s2 + $0x470] sm:$0xff]
  %v163 = vld [vmem:[%s2 + $0x478] sm:$0xff]
  %v164 = vld [vmem:[%s2 + $0x480] sm:$0xff]
  %v165 = vld [vmem:[%s2 + $0x488] sm:$0xff]
  %v166 = vld [vmem:[%s2 + $0x490] sm:$0xff]
  %v167 = vld [vmem:[%s2 + $0x498] sm:$0xff]
  %v168 = vld [vmem:[%s2 + $0x4a0] sm:$0xff]
  %v169 = vld [vmem:[%s2 + $0x4a8] sm:$0xff]
  %v170 = vld [vmem:[%s2 + $0x4b0] sm:$0xff]
  %v171 = vld [vmem:[%s2 + $0x4b8] sm:$0xff]
  %v172 = vld [vmem:[%s2 + $0x4c0] sm:$0xff]
  %v173 = vld [vmem:[%s2 + $0x4c8] sm:$0xff]
  %v174 = vld [vmem:[%s2 + $0x4d0] sm:$0xff]
  %v175 = vld [vmem:[%s2 + $0x4d8] sm:$0xff]
  %v176 = vld [vmem:[%s2 + $0x4e0] sm:$0xff]
  %v177 = vld [vmem:[%s2 + $0x4e8] sm:$0xff]
  %v178 = vld [vmem:[%s2 + $0x4f0] sm:$0xff]
  %v179 = vld [vmem:[%s2 + $0x4f8] sm:$0xff]
  %v180 = vld [vmem:[%s2 + $0x500] sm:$0xff]
  %v181 = vld [vmem:[%s2 + $0x508] sm:$0xff]
  %v182 = vld [vmem:[%s2 + $0x510] sm:$0xff]
  %v183 = vld [vmem:[%s2 + $0x518] sm:$0xff]
  %v184 = vld [vmem:[%s2 + $0x520] sm:$0xff]
  %v185 = vld [vmem:[%s2 + $0x528] sm:$0xff]
  %v186 = vld [vmem:[%s2 + $0x530] sm:$0xff]
  %v187 = vld [vmem:[%s2 + $0x538] sm:$0xff]
  %v188 = vld [vmem:[%s2 + $0x540] sm:$0xff]
  %v189 = vld [vmem:[%s2 + $0x548] sm:$0xff]
  %v190 = vld [vmem:[%s2 + $0x550] sm:$0xff]
  %v191 = vld [vmem:[%s2 + $0x558] sm:$0xff]
  %v192 = vld [vmem:[%s2 + $0x560] sm:$0xff]
  %v193 = vld [vmem:[%s2 + $0x568] sm:$0xff]
  %v194 = vld [vmem:[%s2 + $0x570] sm:$0xff]
  %v195 = vld [vmem:[%s2 + $0x578] sm:$0xff]
  %v196 = vld [vmem:[%s2 + $0x580] sm:$0xff]
  %v197 = vld [vmem:[%s2 + $0x588] sm:$0xff]
  %v198 = vld [vmem:[%s2 + $0x590] sm:$0xff]
  %v199 = vld [vmem:[%s2 + $0x598] sm:$0xff]
  %v200 = vld [vmem:[%s2 + $0x5a0] sm:$0xff]
  %v201 = vld [vmem:[%s2 + $0x5a8] sm:$0xff]
  %v202 = vld [vmem:[%s2 + $0x5b0] sm:$0xff]
  %v203 = vld [vmem:[%s2 + $0x5b8] sm:$0xff]
  %v204 = vld [vmem:[%s2 + $0x5c0] sm:$0xff]
  %v205 = vld [vmem:[%s2 + $0x5c8] sm:$0xff]
  %v206 = vld [vmem:[%s2 + $0x5d0] sm:$0xff]
  %v207 = vld [vmem:[%s2 + $0x5d8] sm:$0xff]
  %v208 = vld [vmem:[%s2 + $0x5e0] sm:$0xff]
  %v209 = vld [vmem:[%s2 + $0x5e8] sm:$0xff]
  %v210 = vld [vmem:[%s2 + $0x5f0] sm:$0xff]
  %v211 = vld [vmem:[%s2 + $0x5f8] sm:$0xff]
  %v212 = vld [vmem:[%s2 + $0x600] sm:$0xff]
  %v213 = vld [vmem:[%s2 + $0x608] sm:$0xff]
  %v214 = vld [vmem:[%s2 + $0x610] sm:$0xff]
  %v215 = vld [vmem:[%s2 + $0x618] sm:$0xff]
  %v216 = vld [vmem:[%s2 + $0x620] sm:$0xff]
  %v217 = vld [vmem:[%s2 + $0x628] sm:$0xff]
  %v218 = vld [vmem:[%s2 + $0x630] sm:$0xff]
  %v219 = vld [vmem:[%s2 + $0x638] sm:$0xff]
  %s220 = scalar_lea.vmem %s2, 1600
  %v221 = vld [vmem:[%s220] ss:$8 sm:$0xf]
  %v223 = vperm.slane %v221, 0
  %v224 = vperm.slane %v221, 1
  %v225 = vperm.slane %v221, 2
  %v226 = vperm.slane %v221, 3
  %v232 = vperm.slane %v27, 0
  %v233 = vperm.slane %v27, 1
  %v234 = vperm.slane %v27, 2
  %v235 = vperm.slane %v27, 3
  %vm240 = vcmask 64512
  %v242 = vsel %vm240, %v14, 0
  %v245 = vsel %vm240, %v15, 0
  %v248 = vsel %vm240, %v16, 0
  %v251 = vsel %vm240, %v17, 0
  %v254 = vsel %vm240, %v18, 0
  %v257 = vsel %vm240, %v19, 0
  %v260 = vsel %vm240, %v20, 0
  %v263 = vsel %vm240, %v21, 0
  %265 = vmatpush.msra.mxu0 0.0
  %266 = vmatpush.msra.mxu0 0.0
  %267 = vmatpush.msra.mxu0 0.0
  %268 = vmatpush.msra.mxu0 0.0
  %269 = vmatpush.msra.mxu0 0.0
  %270 = vmatpush.msra.mxu0 0.0
  %271 = vmatpush.msra.mxu0 0.0
  %272 = vmatpush.msra.mxu0 0.0
  %273 = vmatpush.msra.mxu0 0.0
  %274 = vmatpush.msra.mxu0 0.0
  %275 = vmatpush.msra.mxu0 0.0
  %276 = vmatpush.msra.mxu0 0.0
  %277 = vmatpush.msra.mxu0 0.0
  %278 = vmatpush.msra.mxu0 0.0
  %279 = vmatpush.msra.mxu0 0.0
  %280 = vmatpush.msra.mxu0 %v22
  %281 = vmatmul.f32.gmra.mxu0 %v242
  %v282 = vpop.f32.mrf.mxu0
  %v283 = vadd.f32 %v232, %v282
  %284 = vmatmul.f32.gmra.mxu0 %v245
  %v285 = vpop.f32.mrf.mxu0
  %v286 = vadd.f32 %v232, %v285
  %287 = vmatmul.f32.gmra.mxu0 %v248
  %v288 = vpop.f32.mrf.mxu0
  %v289 = vadd.f32 %v232, %v288
  %290 = vmatmul.f32.gmra.mxu0 %v251
  %v291 = vpop.f32.mrf.mxu0
  %v292 = vadd.f32 %v232, %v291
  %293 = vmatmul.f32.gmra.mxu0 %v254
  %v294 = vpop.f32.mrf.mxu0
  %v295 = vadd.f32 %v232, %v294
  %296 = vmatmul.f32.gmra.mxu0 %v257
  %v297 = vpop.f32.mrf.mxu0
  %v298 = vadd.f32 %v232, %v297
  %299 = vmatmul.f32.gmra.mxu0 %v260
  %v300 = vpop.f32.mrf.mxu0
  %v301 = vadd.f32 %v232, %v300
  %302 = vmatmul.f32.gmra.mxu0 %v263
  %v303 = vpop.f32.mrf.mxu0
  %v304 = vadd.f32 %v232, %v303
  %305 = vdwg.mxu0
  %306 = vmatpush.msra.mxu0 0.0
  %307 = vmatpush.msra.mxu0 0.0
  %308 = vmatpush.msra.mxu0 0.0
  %309 = vmatpush.msra.mxu0 0.0
  %310 = vmatpush.msra.mxu0 0.0
  %311 = vmatpush.msra.mxu0 0.0
  %312 = vmatpush.msra.mxu0 0.0
  %313 = vmatpush.msra.mxu0 0.0
  %314 = vmatpush.msra.mxu0 0.0
  %315 = vmatpush.msra.mxu0 0.0
  %316 = vmatpush.msra.mxu0 0.0
  %317 = vmatpush.msra.mxu0 0.0
  %318 = vmatpush.msra.mxu0 0.0
  %319 = vmatpush.msra.mxu0 0.0
  %320 = vmatpush.msra.mxu0 0.0
  %321 = vmatpush.msra.mxu0 %v23
  %322 = vmatmul.f32.gmra.mxu0 %v242
  %v323 = vpop.f32.mrf.mxu0
  %v324 = vadd.f32 %v233, %v323
  %325 = vmatmul.f32.gmra.mxu0 %v245
  %v326 = vpop.f32.mrf.mxu0
  %v327 = vadd.f32 %v233, %v326
  %328 = vmatmul.f32.gmra.mxu0 %v248
  %v329 = vpop.f32.mrf.mxu0
  %v330 = vadd.f32 %v233, %v329
  %331 = vmatmul.f32.gmra.mxu0 %v251
  %v332 = vpop.f32.mrf.mxu0
  %v333 = vadd.f32 %v233, %v332
  %334 = vmatmul.f32.gmra.mxu0 %v254
  %v335 = vpop.f32.mrf.mxu0
  %v336 = vadd.f32 %v233, %v335
  %337 = vmatmul.f32.gmra.mxu0 %v257
  %v338 = vpop.f32.mrf.mxu0
  %v339 = vadd.f32 %v233, %v338
  %340 = vmatmul.f32.gmra.mxu0 %v260
  %v341 = vpop.f32.mrf.mxu0
  %v342 = vadd.f32 %v233, %v341
  %343 = vmatmul.f32.gmra.mxu0 %v263
  %v344 = vpop.f32.mrf.mxu0
  %v345 = vadd.f32 %v233, %v344
  %346 = vdwg.mxu0
  %347 = vmatpush.msra.mxu0 0.0
  %348 = vmatpush.msra.mxu0 0.0
  %349 = vmatpush.msra.mxu0 0.0
  %350 = vmatpush.msra.mxu0 0.0
  %351 = vmatpush.msra.mxu0 0.0
  %352 = vmatpush.msra.mxu0 0.0
  %353 = vmatpush.msra.mxu0 0.0
  %354 = vmatpush.msra.mxu0 0.0
  %355 = vmatpush.msra.mxu0 0.0
  %356 = vmatpush.msra.mxu0 0.0
  %357 = vmatpush.msra.mxu0 0.0
  %358 = vmatpush.msra.mxu0 0.0
  %359 = vmatpush.msra.mxu0 0.0
  %360 = vmatpush.msra.mxu0 0.0
  %361 = vmatpush.msra.mxu0 0.0
  %362 = vmatpush.msra.mxu0 %v24
  %363 = vmatmul.f32.gmra.mxu0 %v242
  %v364 = vpop.f32.mrf.mxu0
  %v365 = vadd.f32 %v234, %v364
  %366 = vmatmul.f32.gmra.mxu0 %v245
  %v367 = vpop.f32.mrf.mxu0
  %v368 = vadd.f32 %v234, %v367
  %369 = vmatmul.f32.gmra.mxu0 %v248
  %v370 = vpop.f32.mrf.mxu0
  %v371 = vadd.f32 %v234, %v370
  %372 = vmatmul.f32.gmra.mxu0 %v251
  %v373 = vpop.f32.mrf.mxu0
  %v374 = vadd.f32 %v234, %v373
  %375 = vmatmul.f32.gmra.mxu0 %v254
  %v376 = vpop.f32.mrf.mxu0
  %v377 = vadd.f32 %v234, %v376
  %378 = vmatmul.f32.gmra.mxu0 %v257
  %v379 = vpop.f32.mrf.mxu0
  %v380 = vadd.f32 %v234, %v379
  %381 = vmatmul.f32.gmra.mxu0 %v260
  %v382 = vpop.f32.mrf.mxu0
  %v383 = vadd.f32 %v234, %v382
  %384 = vmatmul.f32.gmra.mxu0 %v263
  %v385 = vpop.f32.mrf.mxu0
  %v386 = vadd.f32 %v234, %v385
  %387 = vdwg.mxu0
  %388 = vmatpush.msra.mxu0 0.0
  %389 = vmatpush.msra.mxu0 0.0
  %390 = vmatpush.msra.mxu0 0.0
  %391 = vmatpush.msra.mxu0 0.0
  %392 = vmatpush.msra.mxu0 0.0
  %393 = vmatpush.msra.mxu0 0.0
  %394 = vmatpush.msra.mxu0 0.0
  %395 = vmatpush.msra.mxu0 0.0
  %396 = vmatpush.msra.mxu0 0.0
  %397 = vmatpush.msra.mxu0 0.0
  %398 = vmatpush.msra.mxu0 0.0
  %399 = vmatpush.msra.mxu0 0.0
  %400 = vmatpush.msra.mxu0 0.0
  %401 = vmatpush.msra.mxu0 0.0
  %402 = vmatpush.msra.mxu0 0.0
  %403 = vmatpush.msra.mxu0 %v25
  %404 = vmatmul.f32.gmra.mxu0 %v242
  %v405 = vpop.f32.mrf.mxu0
  %v406 = vadd.f32 %v235, %v405
  %407 = vmatmul.f32.gmra.mxu0 %v245
  %v408 = vpop.f32.mrf.mxu0
  %v409 = vadd.f32 %v235, %v408
  %410 = vmatmul.f32.gmra.mxu0 %v248
  %v411 = vpop.f32.mrf.mxu0
  %v412 = vadd.f32 %v235, %v411
  %413 = vmatmul.f32.gmra.mxu0 %v251
  %v414 = vpop.f32.mrf.mxu0
  %v415 = vadd.f32 %v235, %v414
  %416 = vmatmul.f32.gmra.mxu0 %v254
  %v417 = vpop.f32.mrf.mxu0
  %v418 = vadd.f32 %v235, %v417
  %419 = vmatmul.f32.gmra.mxu0 %v257
  %v420 = vpop.f32.mrf.mxu0
  %v421 = vadd.f32 %v235, %v420
  %422 = vmatmul.f32.gmra.mxu0 %v260
  %v423 = vpop.f32.mrf.mxu0
  %v424 = vadd.f32 %v235, %v423
  %425 = vmatmul.f32.gmra.mxu0 %v263
  %v426 = vpop.f32.mrf.mxu0
  %v427 = vadd.f32 %v235, %v426
  %428 = vdwg.mxu0
  %429 = vmatpush.msra.mxu0 %v88
  %430 = vmatpush.msra.mxu0 %v84
  %431 = vmatpush.msra.mxu0 %v80
  %432 = vmatpush.msra.mxu0 %v76
  %433 = vmatpush.msra.mxu0 %v72
  %434 = vmatpush.msra.mxu0 %v68
  %435 = vmatpush.msra.mxu0 %v64
  %436 = vmatpush.msra.mxu0 %v60
  %437 = vmatpush.msra.mxu0 %v56
  %438 = vmatpush.msra.mxu0 %v52
  %439 = vmatpush.msra.mxu0 %v48
  %440 = vmatpush.msra.mxu0 %v44
  %441 = vmatpush.msra.mxu0 %v40
  %442 = vmatpush.msra.mxu0 %v36
  %443 = vmatpush.msra.mxu0 %v32
  %444 = vmatpush.msra.mxu0 %v28
  %445 = vmatmul.f32.gmra.mxu0 0.0
  %v446 = vpop.f32.mrf.mxu0
  %v447 = vadd.f32 0.0, %v446
  %448 = vmatmul.f32.gmra.mxu0 0.0
  %v449 = vpop.f32.mrf.mxu0
  %v450 = vadd.f32 0.0, %v449
  %451 = vdwg.mxu0
  %452 = vmatpush.msra.mxu0 %v89
  %453 = vmatpush.msra.mxu0 %v85
  %454 = vmatpush.msra.mxu0 %v81
  %455 = vmatpush.msra.mxu0 %v77
  %456 = vmatpush.msra.mxu0 %v73
  %457 = vmatpush.msra.mxu0 %v69
  %458 = vmatpush.msra.mxu0 %v65
  %459 = vmatpush.msra.mxu0 %v61
  %460 = vmatpush.msra.mxu0 %v57
  %461 = vmatpush.msra.mxu0 %v53
  %462 = vmatpush.msra.mxu0 %v49
  %463 = vmatpush.msra.mxu0 %v45
  %464 = vmatpush.msra.mxu0 %v41
  %465 = vmatpush.msra.mxu0 %v37
  %466 = vmatpush.msra.mxu0 %v33
  %467 = vmatpush.msra.mxu0 %v29
  %468 = vmatmul.f32.gmra.mxu0 0.0
  %v469 = vpop.f32.mrf.mxu0
  %v470 = vadd.f32 0.0, %v469
  %471 = vmatmul.f32.gmra.mxu0 0.0
  %v472 = vpop.f32.mrf.mxu0
  %v473 = vadd.f32 0.0, %v472
  %474 = vdwg.mxu0
  %475 = vmatpush.msra.mxu0 %v90
  %476 = vmatpush.msra.mxu0 %v86
  %477 = vmatpush.msra.mxu0 %v82
  %478 = vmatpush.msra.mxu0 %v78
  %479 = vmatpush.msra.mxu0 %v74
  %480 = vmatpush.msra.mxu0 %v70
  %481 = vmatpush.msra.mxu0 %v66
  %482 = vmatpush.msra.mxu0 %v62
  %483 = vmatpush.msra.mxu0 %v58
  %484 = vmatpush.msra.mxu0 %v54
  %485 = vmatpush.msra.mxu0 %v50
  %486 = vmatpush.msra.mxu0 %v46
  %487 = vmatpush.msra.mxu0 %v42
  %488 = vmatpush.msra.mxu0 %v38
  %489 = vmatpush.msra.mxu0 %v34
  %490 = vmatpush.msra.mxu0 %v30
  %491 = vmatmul.f32.gmra.mxu0 0.0
  %v492 = vpop.f32.mrf.mxu0
  %v493 = vadd.f32 0.0, %v492
  %494 = vmatmul.f32.gmra.mxu0 0.0
  %v495 = vpop.f32.mrf.mxu0
  %v496 = vadd.f32 0.0, %v495
  %497 = vdwg.mxu0
  %498 = vmatpush.msra.mxu0 %v91
  %499 = vmatpush.msra.mxu0 %v87
  %500 = vmatpush.msra.mxu0 %v83
  %501 = vmatpush.msra.mxu0 %v79
  %502 = vmatpush.msra.mxu0 %v75
  %503 = vmatpush.msra.mxu0 %v71
  %504 = vmatpush.msra.mxu0 %v67
  %505 = vmatpush.msra.mxu0 %v63
  %506 = vmatpush.msra.mxu0 %v59
  %507 = vmatpush.msra.mxu0 %v55
  %508 = vmatpush.msra.mxu0 %v51
  %509 = vmatpush.msra.mxu0 %v47
  %510 = vmatpush.msra.mxu0 %v43
  %511 = vmatpush.msra.mxu0 %v39
  %512 = vmatpush.msra.mxu0 %v35
  %513 = vmatpush.msra.mxu0 %v31
  %514 = vmatmul.f32.gmra.mxu0 0.0
  %v515 = vpop.f32.mrf.mxu0
  %v516 = vadd.f32 0.0, %v515
  %517 = vmatmul.f32.gmra.mxu0 0.0
  %v518 = vpop.f32.mrf.mxu0
  %v519 = vadd.f32 0.0, %v518
  %520 = vdwg.mxu0
  %v521 = vadd.f32 %v283, %v447
  %v522 = vadd.f32 %v324, %v470
  %v523 = vadd.f32 %v365, %v493
  %v524 = vadd.f32 %v406, %v516
  %v525 = vadd.f32 %v286, %v450
  %v526 = vadd.f32 %v327, %v473
  %v527 = vadd.f32 %v368, %v496
  %v528 = vadd.f32 %v409, %v519
  %v529 = vxor.u32 %v521, 2147483648
  %v530 = vxor.u32 %v525, 2147483648
  %v531 = vmul.f32 %v529, 1.442695
  %v532 = vpow.pop %v531
  %v533 = vmul.f32 %v530, 1.442695
  %v534 = vpow.pop %v533
  %v535 = vadd.f32 %v532, 1.0
  %v536 = vadd.f32 %v534, 1.0
  %v537 = vrcp.pop %v535
  %v538 = vmul.f32 %v535, %v537
  %v539 = vsub.f32 1.0, %v538
  %v540 = vmul.f32 %v537, %v539
  %v541 = vadd.f32 %v537, %v540
  %vm542 = vweird.f32 %v535
  %vm543 = vweird.f32 %v537
  %vm544 = vmor %vm542, %vm543
  %v545 = vsel %vm544, %v537, %v541
  %v546 = vand.u32 2147483647, %v535
  %vm547 = vcmp.eq.f32.partialorder %v546, 8.507059e+37
  %v548 = vand.u32 %v535, 2147483648
  %v549 = vor.u32 1.1754944e-38, %v548
  %v550 = vsel %vm547, %v549, %v545
  %v551 = vmul.f32 1.0, %v550
  %v552 = vrcp.pop %v536
  %v553 = vmul.f32 %v536, %v552
  %v554 = vsub.f32 1.0, %v553
  %v555 = vmul.f32 %v552, %v554
  %v556 = vadd.f32 %v552, %v555
  %vm557 = vweird.f32 %v536
  %vm558 = vweird.f32 %v552
  %vm559 = vmor %vm557, %vm558
  %v560 = vsel %vm559, %v552, %v556
  %v561 = vand.u32 2147483647, %v536
  %vm562 = vcmp.eq.f32.partialorder %v561, 8.507059e+37
  %v563 = vand.u32 %v536, 2147483648
  %v564 = vor.u32 1.1754944e-38, %v563
  %v565 = vsel %vm562, %v564, %v560
  %v566 = vmul.f32 1.0, %v565
  %v567 = vxor.u32 %v522, 2147483648
  %v568 = vxor.u32 %v526, 2147483648
  %v569 = vmul.f32 %v567, 1.442695
  %v570 = vpow.pop %v569
  %v571 = vmul.f32 %v568, 1.442695
  %v572 = vpow.pop %v571
  %v573 = vadd.f32 %v570, 1.0
  %v574 = vadd.f32 %v572, 1.0
  %v575 = vrcp.pop %v573
  %v576 = vmul.f32 %v573, %v575
  %v577 = vsub.f32 1.0, %v576
  %v578 = vmul.f32 %v575, %v577
  %v579 = vadd.f32 %v575, %v578
  %vm580 = vweird.f32 %v573
  %vm581 = vweird.f32 %v575
  %vm582 = vmor %vm580, %vm581
  %v583 = vsel %vm582, %v575, %v579
  %v584 = vand.u32 2147483647, %v573
  %vm585 = vcmp.eq.f32.partialorder %v584, 8.507059e+37
  %v586 = vand.u32 %v573, 2147483648
  %v587 = vor.u32 1.1754944e-38, %v586
  %v588 = vsel %vm585, %v587, %v583
  %v589 = vmul.f32 1.0, %v588
  %v590 = vrcp.pop %v574
  %v591 = vmul.f32 %v574, %v590
  %v592 = vsub.f32 1.0, %v591
  %v593 = vmul.f32 %v590, %v592
  %v594 = vadd.f32 %v590, %v593
  %vm595 = vweird.f32 %v574
  %vm596 = vweird.f32 %v590
  %vm597 = vmor %vm595, %vm596
  %v598 = vsel %vm597, %v590, %v594
  %v599 = vand.u32 2147483647, %v574
  %vm600 = vcmp.eq.f32.partialorder %v599, 8.507059e+37
  %v601 = vand.u32 %v574, 2147483648
  %v602 = vor.u32 1.1754944e-38, %v601
  %v603 = vsel %vm600, %v602, %v598
  %v604 = vmul.f32 1.0, %v603
  %v605 = vtanh.pop %v523
  %v606 = vtanh.pop %v527
  %v607 = vxor.u32 %v524, 2147483648
  %v608 = vxor.u32 %v528, 2147483648
  %v609 = vmul.f32 %v607, 1.442695
  %v610 = vpow.pop %v609
  %v611 = vmul.f32 %v608, 1.442695
  %v612 = vpow.pop %v611
  %v613 = vadd.f32 %v610, 1.0
  %v614 = vadd.f32 %v612, 1.0
  %v615 = vrcp.pop %v613
  %v616 = vmul.f32 %v613, %v615
  %v617 = vsub.f32 1.0, %v616
  %v618 = vmul.f32 %v615, %v617
  %v619 = vadd.f32 %v615, %v618
  %vm620 = vweird.f32 %v613
  %vm621 = vweird.f32 %v615
  %vm622 = vmor %vm620, %vm621
  %v623 = vsel %vm622, %v615, %v619
  %v624 = vand.u32 2147483647, %v613
  %vm625 = vcmp.eq.f32.partialorder %v624, 8.507059e+37
  %v626 = vand.u32 %v613, 2147483648
  %v627 = vor.u32 1.1754944e-38, %v626
  %v628 = vsel %vm625, %v627, %v623
  %v629 = vmul.f32 1.0, %v628
  %v630 = vrcp.pop %v614
  %v631 = vmul.f32 %v614, %v630
  %v632 = vsub.f32 1.0, %v631
  %v633 = vmul.f32 %v630, %v632
  %v634 = vadd.f32 %v630, %v633
  %vm635 = vweird.f32 %v614
  %vm636 = vweird.f32 %v630
  %vm637 = vmor %vm635, %vm636
  %v638 = vsel %vm637, %v630, %v634
  %v639 = vand.u32 2147483647, %v614
  %vm640 = vcmp.eq.f32.partialorder %v639, 8.507059e+37
  %v641 = vand.u32 %v614, 2147483648
  %v642 = vor.u32 1.1754944e-38, %v641
  %v643 = vsel %vm640, %v642, %v638
  %v644 = vmul.f32 1.0, %v643
  %v645 = vmul.f32 %v589, 0.0
  %v646 = vmul.f32 %v604, 0.0
  %v647 = vmul.f32 %v551, %v605
  %v648 = vmul.f32 %v566, %v606
  %v649 = vadd.f32 %v645, %v647
  %v650 = vadd.f32 %v646, %v648
  %v651 = vtanh.pop %v649
  %v652 = vtanh.pop %v650
  %v653 = vmul.f32 %v629, %v651
  %v654 = vmul.f32 %v644, %v652
  %655 = vmatpush.msra.mxu0 %v152
  %656 = vmatpush.msra.mxu0 %v148
  %657 = vmatpush.msra.mxu0 %v144
  %658 = vmatpush.msra.mxu0 %v140
  %659 = vmatpush.msra.mxu0 %v136
  %660 = vmatpush.msra.mxu0 %v132
  %661 = vmatpush.msra.mxu0 %v128
  %662 = vmatpush.msra.mxu0 %v124
  %663 = vmatpush.msra.mxu0 %v120
  %664 = vmatpush.msra.mxu0 %v116
  %665 = vmatpush.msra.mxu0 %v112
  %666 = vmatpush.msra.mxu0 %v108
  %667 = vmatpush.msra.mxu0 %v104
  %668 = vmatpush.msra.mxu0 %v100
  %669 = vmatpush.msra.mxu0 %v96
  %670 = vmatpush.msra.mxu0 %v92
  %671 = vmatmul.f32.gmra.mxu0 %v653
  %v672 = vpop.f32.mrf.mxu0
  %v673 = vadd.f32 %v223, %v672
  %674 = vmatmul.f32.gmra.mxu0 %v654
  %v675 = vpop.f32.mrf.mxu0
  %v676 = vadd.f32 %v223, %v675
  %677 = vdwg.mxu0
  %678 = vmatpush.msra.mxu0 %v216
  %679 = vmatpush.msra.mxu0 %v212
  %680 = vmatpush.msra.mxu0 %v208
  %681 = vmatpush.msra.mxu0 %v204
  %682 = vmatpush.msra.mxu0 %v200
  %683 = vmatpush.msra.mxu0 %v196
  %684 = vmatpush.msra.mxu0 %v192
  %685 = vmatpush.msra.mxu0 %v188
  %686 = vmatpush.msra.mxu0 %v184
  %687 = vmatpush.msra.mxu0 %v180
  %688 = vmatpush.msra.mxu0 %v176
  %689 = vmatpush.msra.mxu0 %v172
  %690 = vmatpush.msra.mxu0 %v168
  %691 = vmatpush.msra.mxu0 %v164
  %692 = vmatpush.msra.mxu0 %v160
  %693 = vmatpush.msra.mxu0 %v156
  %694 = vmatmul.f32.gmra.mxu0 0.0
  %v695 = vpop.f32.mrf.mxu0
  %v696 = vadd.f32 %v673, %v695
  %697 = vmatmul.f32.gmra.mxu0 0.0
  %v698 = vpop.f32.mrf.mxu0
  %v699 = vadd.f32 %v676, %v698
  %700 = vdwg.mxu0
  %701 = vmatpush.msra.mxu0 %v153
  %702 = vmatpush.msra.mxu0 %v149
  %703 = vmatpush.msra.mxu0 %v145
  %704 = vmatpush.msra.mxu0 %v141
  %705 = vmatpush.msra.mxu0 %v137
  %706 = vmatpush.msra.mxu0 %v133
  %707 = vmatpush.msra.mxu0 %v129
  %708 = vmatpush.msra.mxu0 %v125
  %709 = vmatpush.msra.mxu0 %v121
  %710 = vmatpush.msra.mxu0 %v117
  %711 = vmatpush.msra.mxu0 %v113
  %712 = vmatpush.msra.mxu0 %v109
  %713 = vmatpush.msra.mxu0 %v105
  %714 = vmatpush.msra.mxu0 %v101
  %715 = vmatpush.msra.mxu0 %v97
  %716 = vmatpush.msra.mxu0 %v93
  %717 = vmatmul.f32.gmra.mxu0 %v653
  %v718 = vpop.f32.mrf.mxu0
  %v719 = vadd.f32 %v224, %v718
  %720 = vmatmul.f32.gmra.mxu0 %v654
  %v721 = vpop.f32.mrf.mxu0
  %v722 = vadd.f32 %v224, %v721
  %723 = vdwg.mxu0
  %724 = vmatpush.msra.mxu0 %v217
  %725 = vmatpush.msra.mxu0 %v213
  %726 = vmatpush.msra.mxu0 %v209
  %727 = vmatpush.msra.mxu0 %v205
  %728 = vmatpush.msra.mxu0 %v201
  %729 = vmatpush.msra.mxu0 %v197
  %730 = vmatpush.msra.mxu0 %v193
  %731 = vmatpush.msra.mxu0 %v189
  %732 = vmatpush.msra.mxu0 %v185
  %733 = vmatpush.msra.mxu0 %v181
  %734 = vmatpush.msra.mxu0 %v177
  %735 = vmatpush.msra.mxu0 %v173
  %736 = vmatpush.msra.mxu0 %v169
  %737 = vmatpush.msra.mxu0 %v165
  %738 = vmatpush.msra.mxu0 %v161
  %739 = vmatpush.msra.mxu0 %v157
  %740 = vmatmul.f32.gmra.mxu0 0.0
  %v741 = vpop.f32.mrf.mxu0
  %v742 = vadd.f32 %v719, %v741
  %743 = vmatmul.f32.gmra.mxu0 0.0
  %v744 = vpop.f32.mrf.mxu0
  %v745 = vadd.f32 %v722, %v744
  %746 = vdwg.mxu0
  %747 = vmatpush.msra.mxu0 %v154
  %748 = vmatpush.msra.mxu0 %v150
  %749 = vmatpush.msra.mxu0 %v146
  %750 = vmatpush.msra.mxu0 %v142
  %751 = vmatpush.msra.mxu0 %v138
  %752 = vmatpush.msra.mxu0 %v134
  %753 = vmatpush.msra.mxu0 %v130
  %754 = vmatpush.msra.mxu0 %v126
  %755 = vmatpush.msra.mxu0 %v122
  %756 = vmatpush.msra.mxu0 %v118
  %757 = vmatpush.msra.mxu0 %v114
  %758 = vmatpush.msra.mxu0 %v110
  %759 = vmatpush.msra.mxu0 %v106
  %760 = vmatpush.msra.mxu0 %v102
  %761 = vmatpush.msra.mxu0 %v98
  %762 = vmatpush.msra.mxu0 %v94
  %763 = vmatmul.f32.gmra.mxu0 %v653
  %v764 = vpop.f32.mrf.mxu0
  %v765 = vadd.f32 %v225, %v764
  %766 = vmatmul.f32.gmra.mxu0 %v654
  %v767 = vpop.f32.mrf.mxu0
  %v768 = vadd.f32 %v225, %v767
  %769 = vdwg.mxu0
  %770 = vmatpush.msra.mxu0 %v218
  %771 = vmatpush.msra.mxu0 %v214
  %772 = vmatpush.msra.mxu0 %v210
  %773 = vmatpush.msra.mxu0 %v206
  %774 = vmatpush.msra.mxu0 %v202
  %775 = vmatpush.msra.mxu0 %v198
  %776 = vmatpush.msra.mxu0 %v194
  %777 = vmatpush.msra.mxu0 %v190
  %778 = vmatpush.msra.mxu0 %v186
  %779 = vmatpush.msra.mxu0 %v182
  %780 = vmatpush.msra.mxu0 %v178
  %781 = vmatpush.msra.mxu0 %v174
  %782 = vmatpush.msra.mxu0 %v170
  %783 = vmatpush.msra.mxu0 %v166
  %784 = vmatpush.msra.mxu0 %v162
  %785 = vmatpush.msra.mxu0 %v158
  %786 = vmatmul.f32.gmra.mxu0 0.0
  %v787 = vpop.f32.mrf.mxu0
  %v788 = vadd.f32 %v765, %v787
  %789 = vmatmul.f32.gmra.mxu0 0.0
  %v790 = vpop.f32.mrf.mxu0
  %v791 = vadd.f32 %v768, %v790
  %792 = vdwg.mxu0
  %793 = vmatpush.msra.mxu0 %v155
  %794 = vmatpush.msra.mxu0 %v151
  %795 = vmatpush.msra.mxu0 %v147
  %796 = vmatpush.msra.mxu0 %v143
  %797 = vmatpush.msra.mxu0 %v139
  %798 = vmatpush.msra.mxu0 %v135
  %799 = vmatpush.msra.mxu0 %v131
  %800 = vmatpush.msra.mxu0 %v127
  %801 = vmatpush.msra.mxu0 %v123
  %802 = vmatpush.msra.mxu0 %v119
  %803 = vmatpush.msra.mxu0 %v115
  %804 = vmatpush.msra.mxu0 %v111
  %805 = vmatpush.msra.mxu0 %v107
  %806 = vmatpush.msra.mxu0 %v103
  %807 = vmatpush.msra.mxu0 %v99
  %808 = vmatpush.msra.mxu0 %v95
  %809 = vmatmul.f32.gmra.mxu0 %v653
  %v810 = vpop.f32.mrf.mxu0
  %v811 = vadd.f32 %v226, %v810
  %812 = vmatmul.f32.gmra.mxu0 %v654
  %v813 = vpop.f32.mrf.mxu0
  %v814 = vadd.f32 %v226, %v813
  %815 = vdwg.mxu0
  %816 = vmatpush.msra.mxu0 %v219
  %817 = vmatpush.msra.mxu0 %v215
  %818 = vmatpush.msra.mxu0 %v211
  %819 = vmatpush.msra.mxu0 %v207
  %820 = vmatpush.msra.mxu0 %v203
  %821 = vmatpush.msra.mxu0 %v199
  %822 = vmatpush.msra.mxu0 %v195
  %823 = vmatpush.msra.mxu0 %v191
  %824 = vmatpush.msra.mxu0 %v187
  %825 = vmatpush.msra.mxu0 %v183
  %826 = vmatpush.msra.mxu0 %v179
  %827 = vmatpush.msra.mxu0 %v175
  %828 = vmatpush.msra.mxu0 %v171
  %829 = vmatpush.msra.mxu0 %v167
  %830 = vmatpush.msra.mxu0 %v163
  %831 = vmatpush.msra.mxu0 %v159
  %832 = vmatmul.f32.gmra.mxu0 0.0
  %v833 = vpop.f32.mrf.mxu0
  %v834 = vadd.f32 %v811, %v833
  %835 = vmatmul.f32.gmra.mxu0 0.0
  %v836 = vpop.f32.mrf.mxu0
  %v837 = vadd.f32 %v814, %v836
  %838 = vdwg.mxu0
  %v839 = vxor.u32 %v696, 2147483648
  %v840 = vxor.u32 %v699, 2147483648
  %v841 = vmul.f32 %v839, 1.442695
  %v842 = vpow.pop %v841
  %v843 = vmul.f32 %v840, 1.442695
  %v844 = vpow.pop %v843
  %v845 = vadd.f32 %v842, 1.0
  %v846 = vadd.f32 %v844, 1.0
  %v847 = vrcp.pop %v845
  %v848 = vmul.f32 %v845, %v847
  %v849 = vsub.f32 1.0, %v848
  %v850 = vmul.f32 %v847, %v849
  %v851 = vadd.f32 %v847, %v850
  %vm852 = vweird.f32 %v845
  %vm853 = vweird.f32 %v847
  %vm854 = vmor %vm852, %vm853
  %v855 = vsel %vm854, %v847, %v851
  %v856 = vand.u32 2147483647, %v845
  %vm857 = vcmp.eq.f32.partialorder %v856, 8.507059e+37
  %v858 = vand.u32 %v845, 2147483648
  %v859 = vor.u32 1.1754944e-38, %v858
  %v860 = vsel %vm857, %v859, %v855
  %v861 = vmul.f32 1.0, %v860
  %v862 = vrcp.pop %v846
  %v863 = vmul.f32 %v846, %v862
  %v864 = vsub.f32 1.0, %v863
  %v865 = vmul.f32 %v862, %v864
  %v866 = vadd.f32 %v862, %v865
  %vm867 = vweird.f32 %v846
  %vm868 = vweird.f32 %v862
  %vm869 = vmor %vm867, %vm868
  %v870 = vsel %vm869, %v862, %v866
  %v871 = vand.u32 2147483647, %v846
  %vm872 = vcmp.eq.f32.partialorder %v871, 8.507059e+37
  %v873 = vand.u32 %v846, 2147483648
  %v874 = vor.u32 1.1754944e-38, %v873
  %v875 = vsel %vm872, %v874, %v870
  %v876 = vmul.f32 1.0, %v875
  %v877 = vxor.u32 %v742, 2147483648
  %v878 = vxor.u32 %v745, 2147483648
  %v879 = vmul.f32 %v877, 1.442695
  %v880 = vpow.pop %v879
  %v881 = vmul.f32 %v878, 1.442695
  %v882 = vpow.pop %v881
  %v883 = vadd.f32 %v880, 1.0
  %v884 = vadd.f32 %v882, 1.0
  %v885 = vrcp.pop %v883
  %v886 = vmul.f32 %v883, %v885
  %v887 = vsub.f32 1.0, %v886
  %v888 = vmul.f32 %v885, %v887
  %v889 = vadd.f32 %v885, %v888
  %vm890 = vweird.f32 %v883
  %vm891 = vweird.f32 %v885
  %vm892 = vmor %vm890, %vm891
  %v893 = vsel %vm892, %v885, %v889
  %v894 = vand.u32 2147483647, %v883
  %vm895 = vcmp.eq.f32.partialorder %v894, 8.507059e+37
  %v896 = vand.u32 %v883, 2147483648
  %v897 = vor.u32 1.1754944e-38, %v896
  %v898 = vsel %vm895, %v897, %v893
  %v899 = vmul.f32 1.0, %v898
  %v900 = vrcp.pop %v884
  %v901 = vmul.f32 %v884, %v900
  %v902 = vsub.f32 1.0, %v901
  %v903 = vmul.f32 %v900, %v902
  %v904 = vadd.f32 %v900, %v903
  %vm905 = vweird.f32 %v884
  %vm906 = vweird.f32 %v900
  %vm907 = vmor %vm905, %vm906
  %v908 = vsel %vm907, %v900, %v904
  %v909 = vand.u32 2147483647, %v884
  %vm910 = vcmp.eq.f32.partialorder %v909, 8.507059e+37
  %v911 = vand.u32 %v884, 2147483648
  %v912 = vor.u32 1.1754944e-38, %v911
  %v913 = vsel %vm910, %v912, %v908
  %v914 = vmul.f32 1.0, %v913
  %v915 = vtanh.pop %v788
  %v916 = vtanh.pop %v791
  %v917 = vxor.u32 %v834, 2147483648
  %v918 = vxor.u32 %v837, 2147483648
  %v919 = vmul.f32 %v917, 1.442695
  %v920 = vpow.pop %v919
  %v921 = vmul.f32 %v918, 1.442695
  %v922 = vpow.pop %v921
  %v923 = vadd.f32 %v920, 1.0
  %v924 = vadd.f32 %v922, 1.0
  %v925 = vrcp.pop %v923
  %v926 = vmul.f32 %v923, %v925
  %v927 = vsub.f32 1.0, %v926
  %v928 = vmul.f32 %v925, %v927
  %v929 = vadd.f32 %v925, %v928
  %vm930 = vweird.f32 %v923
  %vm931 = vweird.f32 %v925
  %vm932 = vmor %vm930, %vm931
  %v933 = vsel %vm932, %v925, %v929
  %v934 = vand.u32 2147483647, %v923
  %vm935 = vcmp.eq.f32.partialorder %v934, 8.507059e+37
  %v936 = vand.u32 %v923, 2147483648
  %v937 = vor.u32 1.1754944e-38, %v936
  %v938 = vsel %vm935, %v937, %v933
  %v939 = vmul.f32 1.0, %v938
  %v940 = vrcp.pop %v924
  %v941 = vmul.f32 %v924, %v940
  %v942 = vsub.f32 1.0, %v941
  %v943 = vmul.f32 %v940, %v942
  %v944 = vadd.f32 %v940, %v943
  %vm945 = vweird.f32 %v924
  %vm946 = vweird.f32 %v940
  %vm947 = vmor %vm945, %vm946
  %v948 = vsel %vm947, %v940, %v944
  %v949 = vand.u32 2147483647, %v924
  %vm950 = vcmp.eq.f32.partialorder %v949, 8.507059e+37
  %v951 = vand.u32 %v924, 2147483648
  %v952 = vor.u32 1.1754944e-38, %v951
  %v953 = vsel %vm950, %v952, %v948
  %v954 = vmul.f32 1.0, %v953
  %v955 = vmul.f32 %v899, 0.0
  %v956 = vmul.f32 %v914, 0.0
  %v957 = vmul.f32 %v861, %v915
  %v958 = vmul.f32 %v876, %v916
  %v959 = vadd.f32 %v955, %v957
  %v960 = vadd.f32 %v956, %v958
  %v961 = vtanh.pop %v959
  %v962 = vtanh.pop %v960
  %v963 = vmul.f32 %v939, %v961
  %v964 = vmul.f32 %v954, %v962
  %965 = vmatpush.msra.mxu0 %v88
  %966 = vmatpush.msra.mxu0 %v84
  %967 = vmatpush.msra.mxu0 %v80
  %968 = vmatpush.msra.mxu0 %v76
  %969 = vmatpush.msra.mxu0 %v72
  %970 = vmatpush.msra.mxu0 %v68
  %971 = vmatpush.msra.mxu0 %v64
  %972 = vmatpush.msra.mxu0 %v60
  %973 = vmatpush.msra.mxu0 %v56
  %974 = vmatpush.msra.mxu0 %v52
  %975 = vmatpush.msra.mxu0 %v48
  %976 = vmatpush.msra.mxu0 %v44
  %977 = vmatpush.msra.mxu0 %v40
  %978 = vmatpush.msra.mxu0 %v36
  %979 = vmatpush.msra.mxu0 %v32
  %980 = vmatpush.msra.mxu0 %v28
  %981 = vmatmul.f32.gmra.mxu0 %v653
  %v982 = vpop.f32.mrf.mxu0
  %v983 = vadd.f32 0.0, %v982
  %984 = vmatmul.f32.gmra.mxu0 %v654
  %v985 = vpop.f32.mrf.mxu0
  %v986 = vadd.f32 0.0, %v985
  %987 = vdwg.mxu0
  %988 = vmatpush.msra.mxu0 %v89
  %989 = vmatpush.msra.mxu0 %v85
  %990 = vmatpush.msra.mxu0 %v81
  %991 = vmatpush.msra.mxu0 %v77
  %992 = vmatpush.msra.mxu0 %v73
  %993 = vmatpush.msra.mxu0 %v69
  %994 = vmatpush.msra.mxu0 %v65
  %995 = vmatpush.msra.mxu0 %v61
  %996 = vmatpush.msra.mxu0 %v57
  %997 = vmatpush.msra.mxu0 %v53
  %998 = vmatpush.msra.mxu0 %v49
  %999 = vmatpush.msra.mxu0 %v45
  %1000 = vmatpush.msra.mxu0 %v41
  %1001 = vmatpush.msra.mxu0 %v37
  %1002 = vmatpush.msra.mxu0 %v33
  %1003 = vmatpush.msra.mxu0 %v29
  %1004 = vmatmul.f32.gmra.mxu0 %v653
  %v1005 = vpop.f32.mrf.mxu0
  %v1006 = vadd.f32 0.0, %v1005
  %1007 = vmatmul.f32.gmra.mxu0 %v654
  %v1008 = vpop.f32.mrf.mxu0
  %v1009 = vadd.f32 0.0, %v1008
  %1010 = vdwg.mxu0
  %1011 = vmatpush.msra.mxu0 %v90
  %1012 = vmatpush.msra.mxu0 %v86
  %1013 = vmatpush.msra.mxu0 %v82
  %1014 = vmatpush.msra.mxu0 %v78
  %1015 = vmatpush.msra.mxu0 %v74
  %1016 = vmatpush.msra.mxu0 %v70
  %1017 = vmatpush.msra.mxu0 %v66
  %1018 = vmatpush.msra.mxu0 %v62
  %1019 = vmatpush.msra.mxu0 %v58
  %1020 = vmatpush.msra.mxu0 %v54
  %1021 = vmatpush.msra.mxu0 %v50
  %1022 = vmatpush.msra.mxu0 %v46
  %1023 = vmatpush.msra.mxu0 %v42
  %1024 = vmatpush.msra.mxu0 %v38
  %1025 = vmatpush.msra.mxu0 %v34
  %1026 = vmatpush.msra.mxu0 %v30
  %1027 = vmatmul.f32.gmra.mxu0 %v653
  %v1028 = vpop.f32.mrf.mxu0
  %v1029 = vadd.f32 0.0, %v1028
  %1030 = vmatmul.f32.gmra.mxu0 %v654
  %v1031 = vpop.f32.mrf.mxu0
  %v1032 = vadd.f32 0.0, %v1031
  %1033 = vdwg.mxu0
  %1034 = vmatpush.msra.mxu0 %v91
  %1035 = vmatpush.msra.mxu0 %v87
  %1036 = vmatpush.msra.mxu0 %v83
  %1037 = vmatpush.msra.mxu0 %v79
  %1038 = vmatpush.msra.mxu0 %v75
  %1039 = vmatpush.msra.mxu0 %v71
  %1040 = vmatpush.msra.mxu0 %v67
  %1041 = vmatpush.msra.mxu0 %v63
  %1042 = vmatpush.msra.mxu0 %v59
  %1043 = vmatpush.msra.mxu0 %v55
  %1044 = vmatpush.msra.mxu0 %v51
  %1045 = vmatpush.msra.mxu0 %v47
  %1046 = vmatpush.msra.mxu0 %v43
  %1047 = vmatpush.msra.mxu0 %v39
  %1048 = vmatpush.msra.mxu0 %v35
  %1049 = vmatpush.msra.mxu0 %v31
  %1050 = vmatmul.f32.gmra.mxu0 %v653
  %v1051 = vpop.f32.mrf.mxu0
  %v1052 = vadd.f32 0.0, %v1051
  %1053 = vmatmul.f32.gmra.mxu0 %v654
  %v1054 = vpop.f32.mrf.mxu0
  %v1055 = vadd.f32 0.0, %v1054
  %1056 = vdwg.mxu0
  %v1057 = vadd.f32 %v289, %v983
  %v1058 = vadd.f32 %v330, %v1006
  %v1059 = vadd.f32 %v371, %v1029
  %v1060 = vadd.f32 %v412, %v1052
  %v1061 = vadd.f32 %v292, %v986
  %v1062 = vadd.f32 %v333, %v1009
  %v1063 = vadd.f32 %v374, %v1032
  %v1064 = vadd.f32 %v415, %v1055
  %v1065 = vxor.u32 %v1057, 2147483648
  %v1066 = vxor.u32 %v1061, 2147483648
  %v1067 = vmul.f32 %v1065, 1.442695
  %v1068 = vpow.pop %v1067
  %v1069 = vmul.f32 %v1066, 1.442695
  %v1070 = vpow.pop %v1069
  %v1071 = vadd.f32 %v1068, 1.0
  %v1072 = vadd.f32 %v1070, 1.0
  %v1073 = vrcp.pop %v1071
  %v1074 = vmul.f32 %v1071, %v1073
  %v1075 = vsub.f32 1.0, %v1074
  %v1076 = vmul.f32 %v1073, %v1075
  %v1077 = vadd.f32 %v1073, %v1076
  %vm1078 = vweird.f32 %v1071
  %vm1079 = vweird.f32 %v1073
  %vm1080 = vmor %vm1078, %vm1079
  %v1081 = vsel %vm1080, %v1073, %v1077
  %v1082 = vand.u32 2147483647, %v1071
  %vm1083 = vcmp.eq.f32.partialorder %v1082, 8.507059e+37
  %v1084 = vand.u32 %v1071, 2147483648
  %v1085 = vor.u32 1.1754944e-38, %v1084
  %v1086 = vsel %vm1083, %v1085, %v1081
  %v1087 = vmul.f32 1.0, %v1086
  %v1088 = vrcp.pop %v1072
  %v1089 = vmul.f32 %v1072, %v1088
  %v1090 = vsub.f32 1.0, %v1089
  %v1091 = vmul.f32 %v1088, %v1090
  %v1092 = vadd.f32 %v1088, %v1091
  %vm1093 = vweird.f32 %v1072
  %vm1094 = vweird.f32 %v1088
  %vm1095 = vmor %vm1093, %vm1094
  %v1096 = vsel %vm1095, %v1088, %v1092
  %v1097 = vand.u32 2147483647, %v1072
  %vm1098 = vcmp.eq.f32.partialorder %v1097, 8.507059e+37
  %v1099 = vand.u32 %v1072, 2147483648
  %v1100 = vor.u32 1.1754944e-38, %v1099
  %v1101 = vsel %vm1098, %v1100, %v1096
  %v1102 = vmul.f32 1.0, %v1101
  %v1103 = vxor.u32 %v1058, 2147483648
  %v1104 = vxor.u32 %v1062, 2147483648
  %v1105 = vmul.f32 %v1103, 1.442695
  %v1106 = vpow.pop %v1105
  %v1107 = vmul.f32 %v1104, 1.442695
  %v1108 = vpow.pop %v1107
  %v1109 = vadd.f32 %v1106, 1.0
  %v1110 = vadd.f32 %v1108, 1.0
  %v1111 = vrcp.pop %v1109
  %v1112 = vmul.f32 %v1109, %v1111
  %v1113 = vsub.f32 1.0, %v1112
  %v1114 = vmul.f32 %v1111, %v1113
  %v1115 = vadd.f32 %v1111, %v1114
  %vm1116 = vweird.f32 %v1109
  %vm1117 = vweird.f32 %v1111
  %vm1118 = vmor %vm1116, %vm1117
  %v1119 = vsel %vm1118, %v1111, %v1115
  %v1120 = vand.u32 2147483647, %v1109
  %vm1121 = vcmp.eq.f32.partialorder %v1120, 8.507059e+37
  %v1122 = vand.u32 %v1109, 2147483648
  %v1123 = vor.u32 1.1754944e-38, %v1122
  %v1124 = vsel %vm1121, %v1123, %v1119
  %v1125 = vmul.f32 1.0, %v1124
  %v1126 = vrcp.pop %v1110
  %v1127 = vmul.f32 %v1110, %v1126
  %v1128 = vsub.f32 1.0, %v1127
  %v1129 = vmul.f32 %v1126, %v1128
  %v1130 = vadd.f32 %v1126, %v1129
  %vm1131 = vweird.f32 %v1110
  %vm1132 = vweird.f32 %v1126
  %vm1133 = vmor %vm1131, %vm1132
  %v1134 = vsel %vm1133, %v1126, %v1130
  %v1135 = vand.u32 2147483647, %v1110
  %vm1136 = vcmp.eq.f32.partialorder %v1135, 8.507059e+37
  %v1137 = vand.u32 %v1110, 2147483648
  %v1138 = vor.u32 1.1754944e-38, %v1137
  %v1139 = vsel %vm1136, %v1138, %v1134
  %v1140 = vmul.f32 1.0, %v1139
  %v1141 = vtanh.pop %v1059
  %v1142 = vtanh.pop %v1063
  %v1143 = vxor.u32 %v1060, 2147483648
  %v1144 = vxor.u32 %v1064, 2147483648
  %v1145 = vmul.f32 %v1143, 1.442695
  %v1146 = vpow.pop %v1145
  %v1147 = vmul.f32 %v1144, 1.442695
  %v1148 = vpow.pop %v1147
  %v1149 = vadd.f32 %v1146, 1.0
  %v1150 = vadd.f32 %v1148, 1.0
  %v1151 = vrcp.pop %v1149
  %v1152 = vmul.f32 %v1149, %v1151
  %v1153 = vsub.f32 1.0, %v1152
  %v1154 = vmul.f32 %v1151, %v1153
  %v1155 = vadd.f32 %v1151, %v1154
  %vm1156 = vweird.f32 %v1149
  %vm1157 = vweird.f32 %v1151
  %vm1158 = vmor %vm1156, %vm1157
  %v1159 = vsel %vm1158, %v1151, %v1155
  %v1160 = vand.u32 2147483647, %v1149
  %vm1161 = vcmp.eq.f32.partialorder %v1160, 8.507059e+37
  %v1162 = vand.u32 %v1149, 2147483648
  %v1163 = vor.u32 1.1754944e-38, %v1162
  %v1164 = vsel %vm1161, %v1163, %v1159
  %v1165 = vmul.f32 1.0, %v1164
  %v1166 = vrcp.pop %v1150
  %v1167 = vmul.f32 %v1150, %v1166
  %v1168 = vsub.f32 1.0, %v1167
  %v1169 = vmul.f32 %v1166, %v1168
  %v1170 = vadd.f32 %v1166, %v1169
  %vm1171 = vweird.f32 %v1150
  %vm1172 = vweird.f32 %v1166
  %vm1173 = vmor %vm1171, %vm1172
  %v1174 = vsel %vm1173, %v1166, %v1170
  %v1175 = vand.u32 2147483647, %v1150
  %vm1176 = vcmp.eq.f32.partialorder %v1175, 8.507059e+37
  %v1177 = vand.u32 %v1150, 2147483648
  %v1178 = vor.u32 1.1754944e-38, %v1177
  %v1179 = vsel %vm1176, %v1178, %v1174
  %v1180 = vmul.f32 1.0, %v1179
  %v1181 = vmul.f32 %v1125, %v649
  %v1182 = vmul.f32 %v1140, %v650
  %v1183 = vmul.f32 %v1087, %v1141
  %v1184 = vmul.f32 %v1102, %v1142
  %v1185 = vadd.f32 %v1181, %v1183
  %v1186 = vadd.f32 %v1182, %v1184
  %v1187 = vtanh.pop %v1185
  %v1188 = vtanh.pop %v1186
  %v1189 = vmul.f32 %v1165, %v1187
  %v1190 = vmul.f32 %v1180, %v1188
  %1191 = vmatpush.msra.mxu0 %v152
  %1192 = vmatpush.msra.mxu0 %v148
  %1193 = vmatpush.msra.mxu0 %v144
  %1194 = vmatpush.msra.mxu0 %v140
  %1195 = vmatpush.msra.mxu0 %v136
  %1196 = vmatpush.msra.mxu0 %v132
  %1197 = vmatpush.msra.mxu0 %v128
  %1198 = vmatpush.msra.mxu0 %v124
  %1199 = vmatpush.msra.mxu0 %v120
  %1200 = vmatpush.msra.mxu0 %v116
  %1201 = vmatpush.msra.mxu0 %v112
  %1202 = vmatpush.msra.mxu0 %v108
  %1203 = vmatpush.msra.mxu0 %v104
  %1204 = vmatpush.msra.mxu0 %v100
  %1205 = vmatpush.msra.mxu0 %v96
  %1206 = vmatpush.msra.mxu0 %v92
  %1207 = vmatmul.f32.gmra.mxu0 %v1189
  %v1208 = vpop.f32.mrf.mxu0
  %v1209 = vadd.f32 %v223, %v1208
  %1210 = vmatmul.f32.gmra.mxu0 %v1190
  %v1211 = vpop.f32.mrf.mxu0
  %v1212 = vadd.f32 %v223, %v1211
  %1213 = vdwg.mxu0
  %1214 = vmatpush.msra.mxu0 %v216
  %1215 = vmatpush.msra.mxu0 %v212
  %1216 = vmatpush.msra.mxu0 %v208
  %1217 = vmatpush.msra.mxu0 %v204
  %1218 = vmatpush.msra.mxu0 %v200
  %1219 = vmatpush.msra.mxu0 %v196
  %1220 = vmatpush.msra.mxu0 %v192
  %1221 = vmatpush.msra.mxu0 %v188
  %1222 = vmatpush.msra.mxu0 %v184
  %1223 = vmatpush.msra.mxu0 %v180
  %1224 = vmatpush.msra.mxu0 %v176
  %1225 = vmatpush.msra.mxu0 %v172
  %1226 = vmatpush.msra.mxu0 %v168
  %1227 = vmatpush.msra.mxu0 %v164
  %1228 = vmatpush.msra.mxu0 %v160
  %1229 = vmatpush.msra.mxu0 %v156
  %1230 = vmatmul.f32.gmra.mxu0 %v963
  %v1231 = vpop.f32.mrf.mxu0
  %v1232 = vadd.f32 %v1209, %v1231
  %1233 = vmatmul.f32.gmra.mxu0 %v964
  %v1234 = vpop.f32.mrf.mxu0
  %v1235 = vadd.f32 %v1212, %v1234
  %1236 = vdwg.mxu0
  %1237 = vmatpush.msra.mxu0 %v153
  %1238 = vmatpush.msra.mxu0 %v149
  %1239 = vmatpush.msra.mxu0 %v145
  %1240 = vmatpush.msra.mxu0 %v141
  %1241 = vmatpush.msra.mxu0 %v137
  %1242 = vmatpush.msra.mxu0 %v133
  %1243 = vmatpush.msra.mxu0 %v129
  %1244 = vmatpush.msra.mxu0 %v125
  %1245 = vmatpush.msra.mxu0 %v121
  %1246 = vmatpush.msra.mxu0 %v117
  %1247 = vmatpush.msra.mxu0 %v113
  %1248 = vmatpush.msra.mxu0 %v109
  %1249 = vmatpush.msra.mxu0 %v105
  %1250 = vmatpush.msra.mxu0 %v101
  %1251 = vmatpush.msra.mxu0 %v97
  %1252 = vmatpush.msra.mxu0 %v93
  %1253 = vmatmul.f32.gmra.mxu0 %v1189
  %v1254 = vpop.f32.mrf.mxu0
  %v1255 = vadd.f32 %v224, %v1254
  %1256 = vmatmul.f32.gmra.mxu0 %v1190
  %v1257 = vpop.f32.mrf.mxu0
  %v1258 = vadd.f32 %v224, %v1257
  %1259 = vdwg.mxu0
  %1260 = vmatpush.msra.mxu0 %v217
  %1261 = vmatpush.msra.mxu0 %v213
  %1262 = vmatpush.msra.mxu0 %v209
  %1263 = vmatpush.msra.mxu0 %v205
  %1264 = vmatpush.msra.mxu0 %v201
  %1265 = vmatpush.msra.mxu0 %v197
  %1266 = vmatpush.msra.mxu0 %v193
  %1267 = vmatpush.msra.mxu0 %v189
  %1268 = vmatpush.msra.mxu0 %v185
  %1269 = vmatpush.msra.mxu0 %v181
  %1270 = vmatpush.msra.mxu0 %v177
  %1271 = vmatpush.msra.mxu0 %v173
  %1272 = vmatpush.msra.mxu0 %v169
  %1273 = vmatpush.msra.mxu0 %v165
  %1274 = vmatpush.msra.mxu0 %v161
  %1275 = vmatpush.msra.mxu0 %v157
  %1276 = vmatmul.f32.gmra.mxu0 %v963
  %v1277 = vpop.f32.mrf.mxu0
  %v1278 = vadd.f32 %v1255, %v1277
  %1279 = vmatmul.f32.gmra.mxu0 %v964
  %v1280 = vpop.f32.mrf.mxu0
  %v1281 = vadd.f32 %v1258, %v1280
  %1282 = vdwg.mxu0
  %1283 = vmatpush.msra.mxu0 %v154
  %1284 = vmatpush.msra.mxu0 %v150
  %1285 = vmatpush.msra.mxu0 %v146
  %1286 = vmatpush.msra.mxu0 %v142
  %1287 = vmatpush.msra.mxu0 %v138
  %1288 = vmatpush.msra.mxu0 %v134
  %1289 = vmatpush.msra.mxu0 %v130
  %1290 = vmatpush.msra.mxu0 %v126
  %1291 = vmatpush.msra.mxu0 %v122
  %1292 = vmatpush.msra.mxu0 %v118
  %1293 = vmatpush.msra.mxu0 %v114
  %1294 = vmatpush.msra.mxu0 %v110
  %1295 = vmatpush.msra.mxu0 %v106
  %1296 = vmatpush.msra.mxu0 %v102
  %1297 = vmatpush.msra.mxu0 %v98
  %1298 = vmatpush.msra.mxu0 %v94
  %1299 = vmatmul.f32.gmra.mxu0 %v1189
  %v1300 = vpop.f32.mrf.mxu0
  %v1301 = vadd.f32 %v225, %v1300
  %1302 = vmatmul.f32.gmra.mxu0 %v1190
  %v1303 = vpop.f32.mrf.mxu0
  %v1304 = vadd.f32 %v225, %v1303
  %1305 = vdwg.mxu0
  %1306 = vmatpush.msra.mxu0 %v218
  %1307 = vmatpush.msra.mxu0 %v214
  %1308 = vmatpush.msra.mxu0 %v210
  %1309 = vmatpush.msra.mxu0 %v206
  %1310 = vmatpush.msra.mxu0 %v202
  %1311 = vmatpush.msra.mxu0 %v198
  %1312 = vmatpush.msra.mxu0 %v194
  %1313 = vmatpush.msra.mxu0 %v190
  %1314 = vmatpush.msra.mxu0 %v186
  %1315 = vmatpush.msra.mxu0 %v182
  %1316 = vmatpush.msra.mxu0 %v178
  %1317 = vmatpush.msra.mxu0 %v174
  %1318 = vmatpush.msra.mxu0 %v170
  %1319 = vmatpush.msra.mxu0 %v166
  %1320 = vmatpush.msra.mxu0 %v162
  %1321 = vmatpush.msra.mxu0 %v158
  %1322 = vmatmul.f32.gmra.mxu0 %v963
  %v1323 = vpop.f32.mrf.mxu0
  %v1324 = vadd.f32 %v1301, %v1323
  %1325 = vmatmul.f32.gmra.mxu0 %v964
  %v1326 = vpop.f32.mrf.mxu0
  %v1327 = vadd.f32 %v1304, %v1326
  %1328 = vdwg.mxu0
  %1329 = vmatpush.msra.mxu0 %v155
  %1330 = vmatpush.msra.mxu0 %v151
  %1331 = vmatpush.msra.mxu0 %v147
  %1332 = vmatpush.msra.mxu0 %v143
  %1333 = vmatpush.msra.mxu0 %v139
  %1334 = vmatpush.msra.mxu0 %v135
  %1335 = vmatpush.msra.mxu0 %v131
  %1336 = vmatpush.msra.mxu0 %v127
  %1337 = vmatpush.msra.mxu0 %v123
  %1338 = vmatpush.msra.mxu0 %v119
  %1339 = vmatpush.msra.mxu0 %v115
  %1340 = vmatpush.msra.mxu0 %v111
  %1341 = vmatpush.msra.mxu0 %v107
  %1342 = vmatpush.msra.mxu0 %v103
  %1343 = vmatpush.msra.mxu0 %v99
  %1344 = vmatpush.msra.mxu0 %v95
  %1345 = vmatmul.f32.gmra.mxu0 %v1189
  %v1346 = vpop.f32.mrf.mxu0
  %v1347 = vadd.f32 %v226, %v1346
  %1348 = vmatmul.f32.gmra.mxu0 %v1190
  %v1349 = vpop.f32.mrf.mxu0
  %v1350 = vadd.f32 %v226, %v1349
  %1351 = vdwg.mxu0
  %1352 = vmatpush.msra.mxu0 %v219
  %1353 = vmatpush.msra.mxu0 %v215
  %1354 = vmatpush.msra.mxu0 %v211
  %1355 = vmatpush.msra.mxu0 %v207
  %1356 = vmatpush.msra.mxu0 %v203
  %1357 = vmatpush.msra.mxu0 %v199
  %1358 = vmatpush.msra.mxu0 %v195
  %1359 = vmatpush.msra.mxu0 %v191
  %1360 = vmatpush.msra.mxu0 %v187
  %1361 = vmatpush.msra.mxu0 %v183
  %1362 = vmatpush.msra.mxu0 %v179
  %1363 = vmatpush.msra.mxu0 %v175
  %1364 = vmatpush.msra.mxu0 %v171
  %1365 = vmatpush.msra.mxu0 %v167
  %1366 = vmatpush.msra.mxu0 %v163
  %1367 = vmatpush.msra.mxu0 %v159
  %1368 = vmatmul.f32.gmra.mxu0 %v963
  %v1369 = vpop.f32.mrf.mxu0
  %v1370 = vadd.f32 %v1347, %v1369
  %1371 = vmatmul.f32.gmra.mxu0 %v964
  %v1372 = vpop.f32.mrf.mxu0
  %v1373 = vadd.f32 %v1350, %v1372
  %1374 = vdwg.mxu0
  %v1375 = vxor.u32 %v1232, 2147483648
  %v1376 = vxor.u32 %v1235, 2147483648
  %v1377 = vmul.f32 %v1375, 1.442695
  %v1378 = vpow.pop %v1377
  %v1379 = vmul.f32 %v1376, 1.442695
  %v1380 = vpow.pop %v1379
  %v1381 = vadd.f32 %v1378, 1.0
  %v1382 = vadd.f32 %v1380, 1.0
  %v1383 = vrcp.pop %v1381
  %v1384 = vmul.f32 %v1381, %v1383
  %v1385 = vsub.f32 1.0, %v1384
  %v1386 = vmul.f32 %v1383, %v1385
  %v1387 = vadd.f32 %v1383, %v1386
  %vm1388 = vweird.f32 %v1381
  %vm1389 = vweird.f32 %v1383
  %vm1390 = vmor %vm1388, %vm1389
  %v1391 = vsel %vm1390, %v1383, %v1387
  %v1392 = vand.u32 2147483647, %v1381
  %vm1393 = vcmp.eq.f32.partialorder %v1392, 8.507059e+37
  %v1394 = vand.u32 %v1381, 2147483648
  %v1395 = vor.u32 1.1754944e-38, %v1394
  %v1396 = vsel %vm1393, %v1395, %v1391
  %v1397 = vmul.f32 1.0, %v1396
  %v1398 = vrcp.pop %v1382
  %v1399 = vmul.f32 %v1382, %v1398
  %v1400 = vsub.f32 1.0, %v1399
  %v1401 = vmul.f32 %v1398, %v1400
  %v1402 = vadd.f32 %v1398, %v1401
  %vm1403 = vweird.f32 %v1382
  %vm1404 = vweird.f32 %v1398
  %vm1405 = vmor %vm1403, %vm1404
  %v1406 = vsel %vm1405, %v1398, %v1402
  %v1407 = vand.u32 2147483647, %v1382
  %vm1408 = vcmp.eq.f32.partialorder %v1407, 8.507059e+37
  %v1409 = vand.u32 %v1382, 2147483648
  %v1410 = vor.u32 1.1754944e-38, %v1409
  %v1411 = vsel %vm1408, %v1410, %v1406
  %v1412 = vmul.f32 1.0, %v1411
  %v1413 = vxor.u32 %v1278, 2147483648
  %v1414 = vxor.u32 %v1281, 2147483648
  %v1415 = vmul.f32 %v1413, 1.442695
  %v1416 = vpow.pop %v1415
  %v1417 = vmul.f32 %v1414, 1.442695
  %v1418 = vpow.pop %v1417
  %v1419 = vadd.f32 %v1416, 1.0
  %v1420 = vadd.f32 %v1418, 1.0
  %v1421 = vrcp.pop %v1419
  %v1422 = vmul.f32 %v1419, %v1421
  %v1423 = vsub.f32 1.0, %v1422
  %v1424 = vmul.f32 %v1421, %v1423
  %v1425 = vadd.f32 %v1421, %v1424
  %vm1426 = vweird.f32 %v1419
  %vm1427 = vweird.f32 %v1421
  %vm1428 = vmor %vm1426, %vm1427
  %v1429 = vsel %vm1428, %v1421, %v1425
  %v1430 = vand.u32 2147483647, %v1419
  %vm1431 = vcmp.eq.f32.partialorder %v1430, 8.507059e+37
  %v1432 = vand.u32 %v1419, 2147483648
  %v1433 = vor.u32 1.1754944e-38, %v1432
  %v1434 = vsel %vm1431, %v1433, %v1429
  %v1435 = vmul.f32 1.0, %v1434
  %v1436 = vrcp.pop %v1420
  %v1437 = vmul.f32 %v1420, %v1436
  %v1438 = vsub.f32 1.0, %v1437
  %v1439 = vmul.f32 %v1436, %v1438
  %v1440 = vadd.f32 %v1436, %v1439
  %vm1441 = vweird.f32 %v1420
  %vm1442 = vweird.f32 %v1436
  %vm1443 = vmor %vm1441, %vm1442
  %v1444 = vsel %vm1443, %v1436, %v1440
  %v1445 = vand.u32 2147483647, %v1420
  %vm1446 = vcmp.eq.f32.partialorder %v1445, 8.507059e+37
  %v1447 = vand.u32 %v1420, 2147483648
  %v1448 = vor.u32 1.1754944e-38, %v1447
  %v1449 = vsel %vm1446, %v1448, %v1444
  %v1450 = vmul.f32 1.0, %v1449
  %v1451 = vtanh.pop %v1324
  %v1452 = vtanh.pop %v1327
  %v1453 = vxor.u32 %v1370, 2147483648
  %v1454 = vxor.u32 %v1373, 2147483648
  %v1455 = vmul.f32 %v1453, 1.442695
  %v1456 = vpow.pop %v1455
  %v1457 = vmul.f32 %v1454, 1.442695
  %v1458 = vpow.pop %v1457
  %v1459 = vadd.f32 %v1456, 1.0
  %v1460 = vadd.f32 %v1458, 1.0
  %v1461 = vrcp.pop %v1459
  %v1462 = vmul.f32 %v1459, %v1461
  %v1463 = vsub.f32 1.0, %v1462
  %v1464 = vmul.f32 %v1461, %v1463
  %v1465 = vadd.f32 %v1461, %v1464
  %vm1466 = vweird.f32 %v1459
  %vm1467 = vweird.f32 %v1461
  %vm1468 = vmor %vm1466, %vm1467
  %v1469 = vsel %vm1468, %v1461, %v1465
  %v1470 = vand.u32 2147483647, %v1459
  %vm1471 = vcmp.eq.f32.partialorder %v1470, 8.507059e+37
  %v1472 = vand.u32 %v1459, 2147483648
  %v1473 = vor.u32 1.1754944e-38, %v1472
  %v1474 = vsel %vm1471, %v1473, %v1469
  %v1475 = vmul.f32 1.0, %v1474
  %v1476 = vrcp.pop %v1460
  %v1477 = vmul.f32 %v1460, %v1476
  %v1478 = vsub.f32 1.0, %v1477
  %v1479 = vmul.f32 %v1476, %v1478
  %v1480 = vadd.f32 %v1476, %v1479
  %vm1481 = vweird.f32 %v1460
  %vm1482 = vweird.f32 %v1476
  %vm1483 = vmor %vm1481, %vm1482
  %v1484 = vsel %vm1483, %v1476, %v1480
  %v1485 = vand.u32 2147483647, %v1460
  %vm1486 = vcmp.eq.f32.partialorder %v1485, 8.507059e+37
  %v1487 = vand.u32 %v1460, 2147483648
  %v1488 = vor.u32 1.1754944e-38, %v1487
  %v1489 = vsel %vm1486, %v1488, %v1484
  %v1490 = vmul.f32 1.0, %v1489
  %v1491 = vmul.f32 %v1435, %v959
  %v1492 = vmul.f32 %v1450, %v960
  %v1493 = vmul.f32 %v1397, %v1451
  %v1494 = vmul.f32 %v1412, %v1452
  %v1495 = vadd.f32 %v1491, %v1493
  %v1496 = vadd.f32 %v1492, %v1494
  %v1497 = vtanh.pop %v1495
  %v1498 = vtanh.pop %v1496
  %v1499 = vmul.f32 %v1475, %v1497
  %v1500 = vmul.f32 %v1490, %v1498
  %1501 = vmatpush.msra.mxu0 %v88
  %1502 = vmatpush.msra.mxu0 %v84
  %1503 = vmatpush.msra.mxu0 %v80
  %1504 = vmatpush.msra.mxu0 %v76
  %1505 = vmatpush.msra.mxu0 %v72
  %1506 = vmatpush.msra.mxu0 %v68
  %1507 = vmatpush.msra.mxu0 %v64
  %1508 = vmatpush.msra.mxu0 %v60
  %1509 = vmatpush.msra.mxu0 %v56
  %1510 = vmatpush.msra.mxu0 %v52
  %1511 = vmatpush.msra.mxu0 %v48
  %1512 = vmatpush.msra.mxu0 %v44
  %1513 = vmatpush.msra.mxu0 %v40
  %1514 = vmatpush.msra.mxu0 %v36
  %1515 = vmatpush.msra.mxu0 %v32
  %1516 = vmatpush.msra.mxu0 %v28
  %1517 = vmatmul.f32.gmra.mxu0 %v1189
  %v1518 = vpop.f32.mrf.mxu0
  %v1519 = vadd.f32 0.0, %v1518
  %1520 = vmatmul.f32.gmra.mxu0 %v1190
  %v1521 = vpop.f32.mrf.mxu0
  %v1522 = vadd.f32 0.0, %v1521
  %1523 = vdwg.mxu0
  %1524 = vmatpush.msra.mxu0 %v89
  %1525 = vmatpush.msra.mxu0 %v85
  %1526 = vmatpush.msra.mxu0 %v81
  %1527 = vmatpush.msra.mxu0 %v77
  %1528 = vmatpush.msra.mxu0 %v73
  %1529 = vmatpush.msra.mxu0 %v69
  %1530 = vmatpush.msra.mxu0 %v65
  %1531 = vmatpush.msra.mxu0 %v61
  %1532 = vmatpush.msra.mxu0 %v57
  %1533 = vmatpush.msra.mxu0 %v53
  %1534 = vmatpush.msra.mxu0 %v49
  %1535 = vmatpush.msra.mxu0 %v45
  %1536 = vmatpush.msra.mxu0 %v41
  %1537 = vmatpush.msra.mxu0 %v37
  %1538 = vmatpush.msra.mxu0 %v33
  %1539 = vmatpush.msra.mxu0 %v29
  %1540 = vmatmul.f32.gmra.mxu0 %v1189
  %v1541 = vpop.f32.mrf.mxu0
  %v1542 = vadd.f32 0.0, %v1541
  %1543 = vmatmul.f32.gmra.mxu0 %v1190
  %v1544 = vpop.f32.mrf.mxu0
  %v1545 = vadd.f32 0.0, %v1544
  %1546 = vdwg.mxu0
  %1547 = vmatpush.msra.mxu0 %v90
  %1548 = vmatpush.msra.mxu0 %v86
  %1549 = vmatpush.msra.mxu0 %v82
  %1550 = vmatpush.msra.mxu0 %v78
  %1551 = vmatpush.msra.mxu0 %v74
  %1552 = vmatpush.msra.mxu0 %v70
  %1553 = vmatpush.msra.mxu0 %v66
  %1554 = vmatpush.msra.mxu0 %v62
  %1555 = vmatpush.msra.mxu0 %v58
  %1556 = vmatpush.msra.mxu0 %v54
  %1557 = vmatpush.msra.mxu0 %v50
  %1558 = vmatpush.msra.mxu0 %v46
  %1559 = vmatpush.msra.mxu0 %v42
  %1560 = vmatpush.msra.mxu0 %v38
  %1561 = vmatpush.msra.mxu0 %v34
  %1562 = vmatpush.msra.mxu0 %v30
  %1563 = vmatmul.f32.gmra.mxu0 %v1189
  %v1564 = vpop.f32.mrf.mxu0
  %v1565 = vadd.f32 0.0, %v1564
  %1566 = vmatmul.f32.gmra.mxu0 %v1190
  %v1567 = vpop.f32.mrf.mxu0
  %v1568 = vadd.f32 0.0, %v1567
  %1569 = vdwg.mxu0
  %1570 = vmatpush.msra.mxu0 %v91
  %1571 = vmatpush.msra.mxu0 %v87
  %1572 = vmatpush.msra.mxu0 %v83
  %1573 = vmatpush.msra.mxu0 %v79
  %1574 = vmatpush.msra.mxu0 %v75
  %1575 = vmatpush.msra.mxu0 %v71
  %1576 = vmatpush.msra.mxu0 %v67
  %1577 = vmatpush.msra.mxu0 %v63
  %1578 = vmatpush.msra.mxu0 %v59
  %1579 = vmatpush.msra.mxu0 %v55
  %1580 = vmatpush.msra.mxu0 %v51
  %1581 = vmatpush.msra.mxu0 %v47
  %1582 = vmatpush.msra.mxu0 %v43
  %1583 = vmatpush.msra.mxu0 %v39
  %1584 = vmatpush.msra.mxu0 %v35
  %1585 = vmatpush.msra.mxu0 %v31
  %1586 = vmatmul.f32.gmra.mxu0 %v1189
  %v1587 = vpop.f32.mrf.mxu0
  %v1588 = vadd.f32 0.0, %v1587
  %1589 = vmatmul.f32.gmra.mxu0 %v1190
  %v1590 = vpop.f32.mrf.mxu0
  %v1591 = vadd.f32 0.0, %v1590
  %1592 = vdwg.mxu0
  %v1593 = vadd.f32 %v295, %v1519
  %v1594 = vadd.f32 %v336, %v1542
  %v1595 = vadd.f32 %v377, %v1565
  %v1596 = vadd.f32 %v418, %v1588
  %v1597 = vadd.f32 %v298, %v1522
  %v1598 = vadd.f32 %v339, %v1545
  %v1599 = vadd.f32 %v380, %v1568
  %v1600 = vadd.f32 %v421, %v1591
  %v1601 = vxor.u32 %v1593, 2147483648
  %v1602 = vxor.u32 %v1597, 2147483648
  %v1603 = vmul.f32 %v1601, 1.442695
  %v1604 = vpow.pop %v1603
  %v1605 = vmul.f32 %v1602, 1.442695
  %v1606 = vpow.pop %v1605
  %v1607 = vadd.f32 %v1604, 1.0
  %v1608 = vadd.f32 %v1606, 1.0
  %v1609 = vrcp.pop %v1607
  %v1610 = vmul.f32 %v1607, %v1609
  %v1611 = vsub.f32 1.0, %v1610
  %v1612 = vmul.f32 %v1609, %v1611
  %v1613 = vadd.f32 %v1609, %v1612
  %vm1614 = vweird.f32 %v1607
  %vm1615 = vweird.f32 %v1609
  %vm1616 = vmor %vm1614, %vm1615
  %v1617 = vsel %vm1616, %v1609, %v1613
  %v1618 = vand.u32 2147483647, %v1607
  %vm1619 = vcmp.eq.f32.partialorder %v1618, 8.507059e+37
  %v1620 = vand.u32 %v1607, 2147483648
  %v1621 = vor.u32 1.1754944e-38, %v1620
  %v1622 = vsel %vm1619, %v1621, %v1617
  %v1623 = vmul.f32 1.0, %v1622
  %v1624 = vrcp.pop %v1608
  %v1625 = vmul.f32 %v1608, %v1624
  %v1626 = vsub.f32 1.0, %v1625
  %v1627 = vmul.f32 %v1624, %v1626
  %v1628 = vadd.f32 %v1624, %v1627
  %vm1629 = vweird.f32 %v1608
  %vm1630 = vweird.f32 %v1624
  %vm1631 = vmor %vm1629, %vm1630
  %v1632 = vsel %vm1631, %v1624, %v1628
  %v1633 = vand.u32 2147483647, %v1608
  %vm1634 = vcmp.eq.f32.partialorder %v1633, 8.507059e+37
  %v1635 = vand.u32 %v1608, 2147483648
  %v1636 = vor.u32 1.1754944e-38, %v1635
  %v1637 = vsel %vm1634, %v1636, %v1632
  %v1638 = vmul.f32 1.0, %v1637
  %v1639 = vxor.u32 %v1594, 2147483648
  %v1640 = vxor.u32 %v1598, 2147483648
  %v1641 = vmul.f32 %v1639, 1.442695
  %v1642 = vpow.pop %v1641
  %v1643 = vmul.f32 %v1640, 1.442695
  %v1644 = vpow.pop %v1643
  %v1645 = vadd.f32 %v1642, 1.0
  %v1646 = vadd.f32 %v1644, 1.0
  %v1647 = vrcp.pop %v1645
  %v1648 = vmul.f32 %v1645, %v1647
  %v1649 = vsub.f32 1.0, %v1648
  %v1650 = vmul.f32 %v1647, %v1649
  %v1651 = vadd.f32 %v1647, %v1650
  %vm1652 = vweird.f32 %v1645
  %vm1653 = vweird.f32 %v1647
  %vm1654 = vmor %vm1652, %vm1653
  %v1655 = vsel %vm1654, %v1647, %v1651
  %v1656 = vand.u32 2147483647, %v1645
  %vm1657 = vcmp.eq.f32.partialorder %v1656, 8.507059e+37
  %v1658 = vand.u32 %v1645, 2147483648
  %v1659 = vor.u32 1.1754944e-38, %v1658
  %v1660 = vsel %vm1657, %v1659, %v1655
  %v1661 = vmul.f32 1.0, %v1660
  %v1662 = vrcp.pop %v1646
  %v1663 = vmul.f32 %v1646, %v1662
  %v1664 = vsub.f32 1.0, %v1663
  %v1665 = vmul.f32 %v1662, %v1664
  %v1666 = vadd.f32 %v1662, %v1665
  %vm1667 = vweird.f32 %v1646
  %vm1668 = vweird.f32 %v1662
  %vm1669 = vmor %vm1667, %vm1668
  %v1670 = vsel %vm1669, %v1662, %v1666
  %v1671 = vand.u32 2147483647, %v1646
  %vm1672 = vcmp.eq.f32.partialorder %v1671, 8.507059e+37
  %v1673 = vand.u32 %v1646, 2147483648
  %v1674 = vor.u32 1.1754944e-38, %v1673
  %v1675 = vsel %vm1672, %v1674, %v1670
  %v1676 = vmul.f32 1.0, %v1675
  %v1677 = vtanh.pop %v1595
  %v1678 = vtanh.pop %v1599
  %v1679 = vxor.u32 %v1596, 2147483648
  %v1680 = vxor.u32 %v1600, 2147483648
  %v1681 = vmul.f32 %v1679, 1.442695
  %v1682 = vpow.pop %v1681
  %v1683 = vmul.f32 %v1680, 1.442695
  %v1684 = vpow.pop %v1683
  %v1685 = vadd.f32 %v1682, 1.0
  %v1686 = vadd.f32 %v1684, 1.0
  %v1687 = vrcp.pop %v1685
  %v1688 = vmul.f32 %v1685, %v1687
  %v1689 = vsub.f32 1.0, %v1688
  %v1690 = vmul.f32 %v1687, %v1689
  %v1691 = vadd.f32 %v1687, %v1690
  %vm1692 = vweird.f32 %v1685
  %vm1693 = vweird.f32 %v1687
  %vm1694 = vmor %vm1692, %vm1693
  %v1695 = vsel %vm1694, %v1687, %v1691
  %v1696 = vand.u32 2147483647, %v1685
  %vm1697 = vcmp.eq.f32.partialorder %v1696, 8.507059e+37
  %v1698 = vand.u32 %v1685, 2147483648
  %v1699 = vor.u32 1.1754944e-38, %v1698
  %v1700 = vsel %vm1697, %v1699, %v1695
  %v1701 = vmul.f32 1.0, %v1700
  %v1702 = vrcp.pop %v1686
  %v1703 = vmul.f32 %v1686, %v1702
  %v1704 = vsub.f32 1.0, %v1703
  %v1705 = vmul.f32 %v1702, %v1704
  %v1706 = vadd.f32 %v1702, %v1705
  %vm1707 = vweird.f32 %v1686
  %vm1708 = vweird.f32 %v1702
  %vm1709 = vmor %vm1707, %vm1708
  %v1710 = vsel %vm1709, %v1702, %v1706
  %v1711 = vand.u32 2147483647, %v1686
  %vm1712 = vcmp.eq.f32.partialorder %v1711, 8.507059e+37
  %v1713 = vand.u32 %v1686, 2147483648
  %v1714 = vor.u32 1.1754944e-38, %v1713
  %v1715 = vsel %vm1712, %v1714, %v1710
  %v1716 = vmul.f32 1.0, %v1715
  %v1717 = vmul.f32 %v1661, %v1185
  %v1718 = vmul.f32 %v1676, %v1186
  %v1719 = vmul.f32 %v1623, %v1677
  %v1720 = vmul.f32 %v1638, %v1678
  %v1721 = vadd.f32 %v1717, %v1719
  %v1722 = vadd.f32 %v1718, %v1720
  %v1723 = vtanh.pop %v1721
  %v1724 = vtanh.pop %v1722
  %v1725 = vmul.f32 %v1701, %v1723
  %v1726 = vmul.f32 %v1716, %v1724
  %1727 = vmatpush.msra.mxu0 %v152
  %1728 = vmatpush.msra.mxu0 %v148
  %1729 = vmatpush.msra.mxu0 %v144
  %1730 = vmatpush.msra.mxu0 %v140
  %1731 = vmatpush.msra.mxu0 %v136
  %1732 = vmatpush.msra.mxu0 %v132
  %1733 = vmatpush.msra.mxu0 %v128
  %1734 = vmatpush.msra.mxu0 %v124
  %1735 = vmatpush.msra.mxu0 %v120
  %1736 = vmatpush.msra.mxu0 %v116
  %1737 = vmatpush.msra.mxu0 %v112
  %1738 = vmatpush.msra.mxu0 %v108
  %1739 = vmatpush.msra.mxu0 %v104
  %1740 = vmatpush.msra.mxu0 %v100
  %1741 = vmatpush.msra.mxu0 %v96
  %1742 = vmatpush.msra.mxu0 %v92
  %1743 = vmatmul.f32.gmra.mxu0 %v1725
  %v1744 = vpop.f32.mrf.mxu0
  %v1745 = vadd.f32 %v223, %v1744
  %1746 = vmatmul.f32.gmra.mxu0 %v1726
  %v1747 = vpop.f32.mrf.mxu0
  %v1748 = vadd.f32 %v223, %v1747
  %1749 = vdwg.mxu0
  %1750 = vmatpush.msra.mxu0 %v216
  %1751 = vmatpush.msra.mxu0 %v212
  %1752 = vmatpush.msra.mxu0 %v208
  %1753 = vmatpush.msra.mxu0 %v204
  %1754 = vmatpush.msra.mxu0 %v200
  %1755 = vmatpush.msra.mxu0 %v196
  %1756 = vmatpush.msra.mxu0 %v192
  %1757 = vmatpush.msra.mxu0 %v188
  %1758 = vmatpush.msra.mxu0 %v184
  %1759 = vmatpush.msra.mxu0 %v180
  %1760 = vmatpush.msra.mxu0 %v176
  %1761 = vmatpush.msra.mxu0 %v172
  %1762 = vmatpush.msra.mxu0 %v168
  %1763 = vmatpush.msra.mxu0 %v164
  %1764 = vmatpush.msra.mxu0 %v160
  %1765 = vmatpush.msra.mxu0 %v156
  %1766 = vmatmul.f32.gmra.mxu0 %v1499
  %v1767 = vpop.f32.mrf.mxu0
  %v1768 = vadd.f32 %v1745, %v1767
  %1769 = vmatmul.f32.gmra.mxu0 %v1500
  %v1770 = vpop.f32.mrf.mxu0
  %v1771 = vadd.f32 %v1748, %v1770
  %1772 = vdwg.mxu0
  %1773 = vmatpush.msra.mxu0 %v153
  %1774 = vmatpush.msra.mxu0 %v149
  %1775 = vmatpush.msra.mxu0 %v145
  %1776 = vmatpush.msra.mxu0 %v141
  %1777 = vmatpush.msra.mxu0 %v137
  %1778 = vmatpush.msra.mxu0 %v133
  %1779 = vmatpush.msra.mxu0 %v129
  %1780 = vmatpush.msra.mxu0 %v125
  %1781 = vmatpush.msra.mxu0 %v121
  %1782 = vmatpush.msra.mxu0 %v117
  %1783 = vmatpush.msra.mxu0 %v113
  %1784 = vmatpush.msra.mxu0 %v109
  %1785 = vmatpush.msra.mxu0 %v105
  %1786 = vmatpush.msra.mxu0 %v101
  %1787 = vmatpush.msra.mxu0 %v97
  %1788 = vmatpush.msra.mxu0 %v93
  %1789 = vmatmul.f32.gmra.mxu0 %v1725
  %v1790 = vpop.f32.mrf.mxu0
  %v1791 = vadd.f32 %v224, %v1790
  %1792 = vmatmul.f32.gmra.mxu0 %v1726
  %v1793 = vpop.f32.mrf.mxu0
  %v1794 = vadd.f32 %v224, %v1793
  %1795 = vdwg.mxu0
  %1796 = vmatpush.msra.mxu0 %v217
  %1797 = vmatpush.msra.mxu0 %v213
  %1798 = vmatpush.msra.mxu0 %v209
  %1799 = vmatpush.msra.mxu0 %v205
  %1800 = vmatpush.msra.mxu0 %v201
  %1801 = vmatpush.msra.mxu0 %v197
  %1802 = vmatpush.msra.mxu0 %v193
  %1803 = vmatpush.msra.mxu0 %v189
  %1804 = vmatpush.msra.mxu0 %v185
  %1805 = vmatpush.msra.mxu0 %v181
  %1806 = vmatpush.msra.mxu0 %v177
  %1807 = vmatpush.msra.mxu0 %v173
  %1808 = vmatpush.msra.mxu0 %v169
  %1809 = vmatpush.msra.mxu0 %v165
  %1810 = vmatpush.msra.mxu0 %v161
  %1811 = vmatpush.msra.mxu0 %v157
  %1812 = vmatmul.f32.gmra.mxu0 %v1499
  %v1813 = vpop.f32.mrf.mxu0
  %v1814 = vadd.f32 %v1791, %v1813
  %1815 = vmatmul.f32.gmra.mxu0 %v1500
  %v1816 = vpop.f32.mrf.mxu0
  %v1817 = vadd.f32 %v1794, %v1816
  %1818 = vdwg.mxu0
  %1819 = vmatpush.msra.mxu0 %v154
  %1820 = vmatpush.msra.mxu0 %v150
  %1821 = vmatpush.msra.mxu0 %v146
  %1822 = vmatpush.msra.mxu0 %v142
  %1823 = vmatpush.msra.mxu0 %v138
  %1824 = vmatpush.msra.mxu0 %v134
  %1825 = vmatpush.msra.mxu0 %v130
  %1826 = vmatpush.msra.mxu0 %v126
  %1827 = vmatpush.msra.mxu0 %v122
  %1828 = vmatpush.msra.mxu0 %v118
  %1829 = vmatpush.msra.mxu0 %v114
  %1830 = vmatpush.msra.mxu0 %v110
  %1831 = vmatpush.msra.mxu0 %v106
  %1832 = vmatpush.msra.mxu0 %v102
  %1833 = vmatpush.msra.mxu0 %v98
  %1834 = vmatpush.msra.mxu0 %v94
  %1835 = vmatmul.f32.gmra.mxu0 %v1725
  %v1836 = vpop.f32.mrf.mxu0
  %v1837 = vadd.f32 %v225, %v1836
  %1838 = vmatmul.f32.gmra.mxu0 %v1726
  %v1839 = vpop.f32.mrf.mxu0
  %v1840 = vadd.f32 %v225, %v1839
  %1841 = vdwg.mxu0
  %1842 = vmatpush.msra.mxu0 %v218
  %1843 = vmatpush.msra.mxu0 %v214
  %1844 = vmatpush.msra.mxu0 %v210
  %1845 = vmatpush.msra.mxu0 %v206
  %1846 = vmatpush.msra.mxu0 %v202
  %1847 = vmatpush.msra.mxu0 %v198
  %1848 = vmatpush.msra.mxu0 %v194
  %1849 = vmatpush.msra.mxu0 %v190
  %1850 = vmatpush.msra.mxu0 %v186
  %1851 = vmatpush.msra.mxu0 %v182
  %1852 = vmatpush.msra.mxu0 %v178
  %1853 = vmatpush.msra.mxu0 %v174
  %1854 = vmatpush.msra.mxu0 %v170
  %1855 = vmatpush.msra.mxu0 %v166
  %1856 = vmatpush.msra.mxu0 %v162
  %1857 = vmatpush.msra.mxu0 %v158
  %1858 = vmatmul.f32.gmra.mxu0 %v1499
  %v1859 = vpop.f32.mrf.mxu0
  %v1860 = vadd.f32 %v1837, %v1859
  %1861 = vmatmul.f32.gmra.mxu0 %v1500
  %v1862 = vpop.f32.mrf.mxu0
  %v1863 = vadd.f32 %v1840, %v1862
  %1864 = vdwg.mxu0
  %1865 = vmatpush.msra.mxu0 %v155
  %1866 = vmatpush.msra.mxu0 %v151
  %1867 = vmatpush.msra.mxu0 %v147
  %1868 = vmatpush.msra.mxu0 %v143
  %1869 = vmatpush.msra.mxu0 %v139
  %1870 = vmatpush.msra.mxu0 %v135
  %1871 = vmatpush.msra.mxu0 %v131
  %1872 = vmatpush.msra.mxu0 %v127
  %1873 = vmatpush.msra.mxu0 %v123
  %1874 = vmatpush.msra.mxu0 %v119
  %1875 = vmatpush.msra.mxu0 %v115
  %1876 = vmatpush.msra.mxu0 %v111
  %1877 = vmatpush.msra.mxu0 %v107
  %1878 = vmatpush.msra.mxu0 %v103
  %1879 = vmatpush.msra.mxu0 %v99
  %1880 = vmatpush.msra.mxu0 %v95
  %1881 = vmatmul.f32.gmra.mxu0 %v1725
  %v1882 = vpop.f32.mrf.mxu0
  %v1883 = vadd.f32 %v226, %v1882
  %1884 = vmatmul.f32.gmra.mxu0 %v1726
  %v1885 = vpop.f32.mrf.mxu0
  %v1886 = vadd.f32 %v226, %v1885
  %1887 = vdwg.mxu0
  %1888 = vmatpush.msra.mxu0 %v219
  %1889 = vmatpush.msra.mxu0 %v215
  %1890 = vmatpush.msra.mxu0 %v211
  %1891 = vmatpush.msra.mxu0 %v207
  %1892 = vmatpush.msra.mxu0 %v203
  %1893 = vmatpush.msra.mxu0 %v199
  %1894 = vmatpush.msra.mxu0 %v195
  %1895 = vmatpush.msra.mxu0 %v191
  %1896 = vmatpush.msra.mxu0 %v187
  %1897 = vmatpush.msra.mxu0 %v183
  %1898 = vmatpush.msra.mxu0 %v179
  %1899 = vmatpush.msra.mxu0 %v175
  %1900 = vmatpush.msra.mxu0 %v171
  %1901 = vmatpush.msra.mxu0 %v167
  %1902 = vmatpush.msra.mxu0 %v163
  %1903 = vmatpush.msra.mxu0 %v159
  %1904 = vmatmul.f32.gmra.mxu0 %v1499
  %v1905 = vpop.f32.mrf.mxu0
  %v1906 = vadd.f32 %v1883, %v1905
  %1907 = vmatmul.f32.gmra.mxu0 %v1500
  %v1908 = vpop.f32.mrf.mxu0
  %v1909 = vadd.f32 %v1886, %v1908
  %1910 = vdwg.mxu0
  %v1911 = vxor.u32 %v1768, 2147483648
  %v1912 = vxor.u32 %v1771, 2147483648
  %v1913 = vmul.f32 %v1911, 1.442695
  %v1914 = vpow.pop %v1913
  %v1915 = vmul.f32 %v1912, 1.442695
  %v1916 = vpow.pop %v1915
  %v1917 = vadd.f32 %v1914, 1.0
  %v1918 = vadd.f32 %v1916, 1.0
  %v1919 = vrcp.pop %v1917
  %v1920 = vmul.f32 %v1917, %v1919
  %v1921 = vsub.f32 1.0, %v1920
  %v1922 = vmul.f32 %v1919, %v1921
  %v1923 = vadd.f32 %v1919, %v1922
  %vm1924 = vweird.f32 %v1917
  %vm1925 = vweird.f32 %v1919
  %vm1926 = vmor %vm1924, %vm1925
  %v1927 = vsel %vm1926, %v1919, %v1923
  %v1928 = vand.u32 2147483647, %v1917
  %vm1929 = vcmp.eq.f32.partialorder %v1928, 8.507059e+37
  %v1930 = vand.u32 %v1917, 2147483648
  %v1931 = vor.u32 1.1754944e-38, %v1930
  %v1932 = vsel %vm1929, %v1931, %v1927
  %v1933 = vmul.f32 1.0, %v1932
  %v1934 = vrcp.pop %v1918
  %v1935 = vmul.f32 %v1918, %v1934
  %v1936 = vsub.f32 1.0, %v1935
  %v1937 = vmul.f32 %v1934, %v1936
  %v1938 = vadd.f32 %v1934, %v1937
  %vm1939 = vweird.f32 %v1918
  %vm1940 = vweird.f32 %v1934
  %vm1941 = vmor %vm1939, %vm1940
  %v1942 = vsel %vm1941, %v1934, %v1938
  %v1943 = vand.u32 2147483647, %v1918
  %vm1944 = vcmp.eq.f32.partialorder %v1943, 8.507059e+37
  %v1945 = vand.u32 %v1918, 2147483648
  %v1946 = vor.u32 1.1754944e-38, %v1945
  %v1947 = vsel %vm1944, %v1946, %v1942
  %v1948 = vmul.f32 1.0, %v1947
  %v1949 = vxor.u32 %v1814, 2147483648
  %v1950 = vxor.u32 %v1817, 2147483648
  %v1951 = vmul.f32 %v1949, 1.442695
  %v1952 = vpow.pop %v1951
  %v1953 = vmul.f32 %v1950, 1.442695
  %v1954 = vpow.pop %v1953
  %v1955 = vadd.f32 %v1952, 1.0
  %v1956 = vadd.f32 %v1954, 1.0
  %v1957 = vrcp.pop %v1955
  %v1958 = vmul.f32 %v1955, %v1957
  %v1959 = vsub.f32 1.0, %v1958
  %v1960 = vmul.f32 %v1957, %v1959
  %v1961 = vadd.f32 %v1957, %v1960
  %vm1962 = vweird.f32 %v1955
  %vm1963 = vweird.f32 %v1957
  %vm1964 = vmor %vm1962, %vm1963
  %v1965 = vsel %vm1964, %v1957, %v1961
  %v1966 = vand.u32 2147483647, %v1955
  %vm1967 = vcmp.eq.f32.partialorder %v1966, 8.507059e+37
  %v1968 = vand.u32 %v1955, 2147483648
  %v1969 = vor.u32 1.1754944e-38, %v1968
  %v1970 = vsel %vm1967, %v1969, %v1965
  %v1971 = vmul.f32 1.0, %v1970
  %v1972 = vrcp.pop %v1956
  %v1973 = vmul.f32 %v1956, %v1972
  %v1974 = vsub.f32 1.0, %v1973
  %v1975 = vmul.f32 %v1972, %v1974
  %v1976 = vadd.f32 %v1972, %v1975
  %vm1977 = vweird.f32 %v1956
  %vm1978 = vweird.f32 %v1972
  %vm1979 = vmor %vm1977, %vm1978
  %v1980 = vsel %vm1979, %v1972, %v1976
  %v1981 = vand.u32 2147483647, %v1956
  %vm1982 = vcmp.eq.f32.partialorder %v1981, 8.507059e+37
  %v1983 = vand.u32 %v1956, 2147483648
  %v1984 = vor.u32 1.1754944e-38, %v1983
  %v1985 = vsel %vm1982, %v1984, %v1980
  %v1986 = vmul.f32 1.0, %v1985
  %v1987 = vtanh.pop %v1860
  %v1988 = vtanh.pop %v1863
  %v1989 = vxor.u32 %v1906, 2147483648
  %v1990 = vxor.u32 %v1909, 2147483648
  %v1991 = vmul.f32 %v1989, 1.442695
  %v1992 = vpow.pop %v1991
  %v1993 = vmul.f32 %v1990, 1.442695
  %v1994 = vpow.pop %v1993
  %v1995 = vadd.f32 %v1992, 1.0
  %v1996 = vadd.f32 %v1994, 1.0
  %v1997 = vrcp.pop %v1995
  %v1998 = vmul.f32 %v1995, %v1997
  %v1999 = vsub.f32 1.0, %v1998
  %v2000 = vmul.f32 %v1997, %v1999
  %v2001 = vadd.f32 %v1997, %v2000
  %vm2002 = vweird.f32 %v1995
  %vm2003 = vweird.f32 %v1997
  %vm2004 = vmor %vm2002, %vm2003
  %v2005 = vsel %vm2004, %v1997, %v2001
  %v2006 = vand.u32 2147483647, %v1995
  %vm2007 = vcmp.eq.f32.partialorder %v2006, 8.507059e+37
  %v2008 = vand.u32 %v1995, 2147483648
  %v2009 = vor.u32 1.1754944e-38, %v2008
  %v2010 = vsel %vm2007, %v2009, %v2005
  %v2011 = vmul.f32 1.0, %v2010
  %v2012 = vrcp.pop %v1996
  %v2013 = vmul.f32 %v1996, %v2012
  %v2014 = vsub.f32 1.0, %v2013
  %v2015 = vmul.f32 %v2012, %v2014
  %v2016 = vadd.f32 %v2012, %v2015
  %vm2017 = vweird.f32 %v1996
  %vm2018 = vweird.f32 %v2012
  %vm2019 = vmor %vm2017, %vm2018
  %v2020 = vsel %vm2019, %v2012, %v2016
  %v2021 = vand.u32 2147483647, %v1996
  %vm2022 = vcmp.eq.f32.partialorder %v2021, 8.507059e+37
  %v2023 = vand.u32 %v1996, 2147483648
  %v2024 = vor.u32 1.1754944e-38, %v2023
  %v2025 = vsel %vm2022, %v2024, %v2020
  %v2026 = vmul.f32 1.0, %v2025
  %v2027 = vmul.f32 %v1971, %v1495
  %v2028 = vmul.f32 %v1986, %v1496
  %v2029 = vmul.f32 %v1933, %v1987
  %v2030 = vmul.f32 %v1948, %v1988
  %v2031 = vadd.f32 %v2027, %v2029
  %v2032 = vadd.f32 %v2028, %v2030
  %v2033 = vtanh.pop %v2031
  %v2034 = vtanh.pop %v2032
  %v2035 = vmul.f32 %v2011, %v2033
  %v2036 = vmul.f32 %v2026, %v2034
  %2037 = vmatpush.msra.mxu0 %v88
  %2038 = vmatpush.msra.mxu0 %v84
  %2039 = vmatpush.msra.mxu0 %v80
  %2040 = vmatpush.msra.mxu0 %v76
  %2041 = vmatpush.msra.mxu0 %v72
  %2042 = vmatpush.msra.mxu0 %v68
  %2043 = vmatpush.msra.mxu0 %v64
  %2044 = vmatpush.msra.mxu0 %v60
  %2045 = vmatpush.msra.mxu0 %v56
  %2046 = vmatpush.msra.mxu0 %v52
  %2047 = vmatpush.msra.mxu0 %v48
  %2048 = vmatpush.msra.mxu0 %v44
  %2049 = vmatpush.msra.mxu0 %v40
  %2050 = vmatpush.msra.mxu0 %v36
  %2051 = vmatpush.msra.mxu0 %v32
  %2052 = vmatpush.msra.mxu0 %v28
  %2053 = vmatmul.f32.gmra.mxu0 %v1725
  %v2054 = vpop.f32.mrf.mxu0
  %v2055 = vadd.f32 0.0, %v2054
  %2056 = vmatmul.f32.gmra.mxu0 %v1726
  %v2057 = vpop.f32.mrf.mxu0
  %v2058 = vadd.f32 0.0, %v2057
  %2059 = vdwg.mxu0
  %2060 = vmatpush.msra.mxu0 %v89
  %2061 = vmatpush.msra.mxu0 %v85
  %2062 = vmatpush.msra.mxu0 %v81
  %2063 = vmatpush.msra.mxu0 %v77
  %2064 = vmatpush.msra.mxu0 %v73
  %2065 = vmatpush.msra.mxu0 %v69
  %2066 = vmatpush.msra.mxu0 %v65
  %2067 = vmatpush.msra.mxu0 %v61
  %2068 = vmatpush.msra.mxu0 %v57
  %2069 = vmatpush.msra.mxu0 %v53
  %2070 = vmatpush.msra.mxu0 %v49
  %2071 = vmatpush.msra.mxu0 %v45
  %2072 = vmatpush.msra.mxu0 %v41
  %2073 = vmatpush.msra.mxu0 %v37
  %2074 = vmatpush.msra.mxu0 %v33
  %2075 = vmatpush.msra.mxu0 %v29
  %2076 = vmatmul.f32.gmra.mxu0 %v1725
  %v2077 = vpop.f32.mrf.mxu0
  %v2078 = vadd.f32 0.0, %v2077
  %2079 = vmatmul.f32.gmra.mxu0 %v1726
  %v2080 = vpop.f32.mrf.mxu0
  %v2081 = vadd.f32 0.0, %v2080
  %2082 = vdwg.mxu0
  %2083 = vmatpush.msra.mxu0 %v90
  %2084 = vmatpush.msra.mxu0 %v86
  %2085 = vmatpush.msra.mxu0 %v82
  %2086 = vmatpush.msra.mxu0 %v78
  %2087 = vmatpush.msra.mxu0 %v74
  %2088 = vmatpush.msra.mxu0 %v70
  %2089 = vmatpush.msra.mxu0 %v66
  %2090 = vmatpush.msra.mxu0 %v62
  %2091 = vmatpush.msra.mxu0 %v58
  %2092 = vmatpush.msra.mxu0 %v54
  %2093 = vmatpush.msra.mxu0 %v50
  %2094 = vmatpush.msra.mxu0 %v46
  %2095 = vmatpush.msra.mxu0 %v42
  %2096 = vmatpush.msra.mxu0 %v38
  %2097 = vmatpush.msra.mxu0 %v34
  %2098 = vmatpush.msra.mxu0 %v30
  %2099 = vmatmul.f32.gmra.mxu0 %v1725
  %v2100 = vpop.f32.mrf.mxu0
  %v2101 = vadd.f32 0.0, %v2100
  %2102 = vmatmul.f32.gmra.mxu0 %v1726
  %v2103 = vpop.f32.mrf.mxu0
  %v2104 = vadd.f32 0.0, %v2103
  %2105 = vdwg.mxu0
  %2106 = vmatpush.msra.mxu0 %v91
  %2107 = vmatpush.msra.mxu0 %v87
  %2108 = vmatpush.msra.mxu0 %v83
  %2109 = vmatpush.msra.mxu0 %v79
  %2110 = vmatpush.msra.mxu0 %v75
  %2111 = vmatpush.msra.mxu0 %v71
  %2112 = vmatpush.msra.mxu0 %v67
  %2113 = vmatpush.msra.mxu0 %v63
  %2114 = vmatpush.msra.mxu0 %v59
  %2115 = vmatpush.msra.mxu0 %v55
  %2116 = vmatpush.msra.mxu0 %v51
  %2117 = vmatpush.msra.mxu0 %v47
  %2118 = vmatpush.msra.mxu0 %v43
  %2119 = vmatpush.msra.mxu0 %v39
  %2120 = vmatpush.msra.mxu0 %v35
  %2121 = vmatpush.msra.mxu0 %v31
  %2122 = vmatmul.f32.gmra.mxu0 %v1725
  %v2123 = vpop.f32.mrf.mxu0
  %v2124 = vadd.f32 0.0, %v2123
  %2125 = vmatmul.f32.gmra.mxu0 %v1726
  %v2126 = vpop.f32.mrf.mxu0
  %v2127 = vadd.f32 0.0, %v2126
  %2128 = vdwg.mxu0
  %v2129 = vadd.f32 %v301, %v2055
  %v2130 = vadd.f32 %v342, %v2078
  %v2131 = vadd.f32 %v383, %v2101
  %v2132 = vadd.f32 %v424, %v2124
  %v2133 = vadd.f32 %v304, %v2058
  %v2134 = vadd.f32 %v345, %v2081
  %v2135 = vadd.f32 %v386, %v2104
  %v2136 = vadd.f32 %v427, %v2127
  %v2137 = vxor.u32 %v2129, 2147483648
  %v2138 = vxor.u32 %v2133, 2147483648
  %v2139 = vmul.f32 %v2137, 1.442695
  %v2140 = vpow.pop %v2139
  %v2141 = vmul.f32 %v2138, 1.442695
  %v2142 = vpow.pop %v2141
  %v2143 = vadd.f32 %v2140, 1.0
  %v2144 = vadd.f32 %v2142, 1.0
  %v2145 = vrcp.pop %v2143
  %v2146 = vmul.f32 %v2143, %v2145
  %v2147 = vsub.f32 1.0, %v2146
  %v2148 = vmul.f32 %v2145, %v2147
  %v2149 = vadd.f32 %v2145, %v2148
  %vm2150 = vweird.f32 %v2143
  %vm2151 = vweird.f32 %v2145
  %vm2152 = vmor %vm2150, %vm2151
  %v2153 = vsel %vm2152, %v2145, %v2149
  %v2154 = vand.u32 2147483647, %v2143
  %vm2155 = vcmp.eq.f32.partialorder %v2154, 8.507059e+37
  %v2156 = vand.u32 %v2143, 2147483648
  %v2157 = vor.u32 1.1754944e-38, %v2156
  %v2158 = vsel %vm2155, %v2157, %v2153
  %v2159 = vmul.f32 1.0, %v2158
  %v2160 = vrcp.pop %v2144
  %v2161 = vmul.f32 %v2144, %v2160
  %v2162 = vsub.f32 1.0, %v2161
  %v2163 = vmul.f32 %v2160, %v2162
  %v2164 = vadd.f32 %v2160, %v2163
  %vm2165 = vweird.f32 %v2144
  %vm2166 = vweird.f32 %v2160
  %vm2167 = vmor %vm2165, %vm2166
  %v2168 = vsel %vm2167, %v2160, %v2164
  %v2169 = vand.u32 2147483647, %v2144
  %vm2170 = vcmp.eq.f32.partialorder %v2169, 8.507059e+37
  %v2171 = vand.u32 %v2144, 2147483648
  %v2172 = vor.u32 1.1754944e-38, %v2171
  %v2173 = vsel %vm2170, %v2172, %v2168
  %v2174 = vmul.f32 1.0, %v2173
  %v2175 = vxor.u32 %v2130, 2147483648
  %v2176 = vxor.u32 %v2134, 2147483648
  %v2177 = vmul.f32 %v2175, 1.442695
  %v2178 = vpow.pop %v2177
  %v2179 = vmul.f32 %v2176, 1.442695
  %v2180 = vpow.pop %v2179
  %v2181 = vadd.f32 %v2178, 1.0
  %v2182 = vadd.f32 %v2180, 1.0
  %v2183 = vrcp.pop %v2181
  %v2184 = vmul.f32 %v2181, %v2183
  %v2185 = vsub.f32 1.0, %v2184
  %v2186 = vmul.f32 %v2183, %v2185
  %v2187 = vadd.f32 %v2183, %v2186
  %vm2188 = vweird.f32 %v2181
  %vm2189 = vweird.f32 %v2183
  %vm2190 = vmor %vm2188, %vm2189
  %v2191 = vsel %vm2190, %v2183, %v2187
  %v2192 = vand.u32 2147483647, %v2181
  %vm2193 = vcmp.eq.f32.partialorder %v2192, 8.507059e+37
  %v2194 = vand.u32 %v2181, 2147483648
  %v2195 = vor.u32 1.1754944e-38, %v2194
  %v2196 = vsel %vm2193, %v2195, %v2191
  %v2197 = vmul.f32 1.0, %v2196
  %v2198 = vrcp.pop %v2182
  %v2199 = vmul.f32 %v2182, %v2198
  %v2200 = vsub.f32 1.0, %v2199
  %v2201 = vmul.f32 %v2198, %v2200
  %v2202 = vadd.f32 %v2198, %v2201
  %vm2203 = vweird.f32 %v2182
  %vm2204 = vweird.f32 %v2198
  %vm2205 = vmor %vm2203, %vm2204
  %v2206 = vsel %vm2205, %v2198, %v2202
  %v2207 = vand.u32 2147483647, %v2182
  %vm2208 = vcmp.eq.f32.partialorder %v2207, 8.507059e+37
  %v2209 = vand.u32 %v2182, 2147483648
  %v2210 = vor.u32 1.1754944e-38, %v2209
  %v2211 = vsel %vm2208, %v2210, %v2206
  %v2212 = vmul.f32 1.0, %v2211
  %v2213 = vtanh.pop %v2131
  %v2214 = vtanh.pop %v2135
  %v2215 = vxor.u32 %v2132, 2147483648
  %v2216 = vxor.u32 %v2136, 2147483648
  %v2217 = vmul.f32 %v2215, 1.442695
  %v2218 = vpow.pop %v2217
  %v2219 = vmul.f32 %v2216, 1.442695
  %v2220 = vpow.pop %v2219
  %v2221 = vadd.f32 %v2218, 1.0
  %v2222 = vadd.f32 %v2220, 1.0
  %v2223 = vrcp.pop %v2221
  %v2224 = vmul.f32 %v2221, %v2223
  %v2225 = vsub.f32 1.0, %v2224
  %v2226 = vmul.f32 %v2223, %v2225
  %v2227 = vadd.f32 %v2223, %v2226
  %vm2228 = vweird.f32 %v2221
  %vm2229 = vweird.f32 %v2223
  %vm2230 = vmor %vm2228, %vm2229
  %v2231 = vsel %vm2230, %v2223, %v2227
  %v2232 = vand.u32 2147483647, %v2221
  %vm2233 = vcmp.eq.f32.partialorder %v2232, 8.507059e+37
  %v2234 = vand.u32 %v2221, 2147483648
  %v2235 = vor.u32 1.1754944e-38, %v2234
  %v2236 = vsel %vm2233, %v2235, %v2231
  %v2237 = vmul.f32 1.0, %v2236
  %v2238 = vrcp.pop %v2222
  %v2239 = vmul.f32 %v2222, %v2238
  %v2240 = vsub.f32 1.0, %v2239
  %v2241 = vmul.f32 %v2238, %v2240
  %v2242 = vadd.f32 %v2238, %v2241
  %vm2243 = vweird.f32 %v2222
  %vm2244 = vweird.f32 %v2238
  %vm2245 = vmor %vm2243, %vm2244
  %v2246 = vsel %vm2245, %v2238, %v2242
  %v2247 = vand.u32 2147483647, %v2222
  %vm2248 = vcmp.eq.f32.partialorder %v2247, 8.507059e+37
  %v2249 = vand.u32 %v2222, 2147483648
  %v2250 = vor.u32 1.1754944e-38, %v2249
  %v2251 = vsel %vm2248, %v2250, %v2246
  %v2252 = vmul.f32 1.0, %v2251
  %v2253 = vmul.f32 %v2197, %v1721
  %v2254 = vmul.f32 %v2212, %v1722
  %v2255 = vmul.f32 %v2159, %v2213
  %v2256 = vmul.f32 %v2174, %v2214
  %v2257 = vadd.f32 %v2253, %v2255
  %v2258 = vadd.f32 %v2254, %v2256
  %v2259 = vtanh.pop %v2257
  %v2260 = vtanh.pop %v2258
  %v2261 = vmul.f32 %v2237, %v2259
  %v2262 = vmul.f32 %v2252, %v2260
  %2263 = vmatpush.msra.mxu0 %v152
  %2264 = vmatpush.msra.mxu0 %v148
  %2265 = vmatpush.msra.mxu0 %v144
  %2266 = vmatpush.msra.mxu0 %v140
  %2267 = vmatpush.msra.mxu0 %v136
  %2268 = vmatpush.msra.mxu0 %v132
  %2269 = vmatpush.msra.mxu0 %v128
  %2270 = vmatpush.msra.mxu0 %v124
  %2271 = vmatpush.msra.mxu0 %v120
  %2272 = vmatpush.msra.mxu0 %v116
  %2273 = vmatpush.msra.mxu0 %v112
  %2274 = vmatpush.msra.mxu0 %v108
  %2275 = vmatpush.msra.mxu0 %v104
  %2276 = vmatpush.msra.mxu0 %v100
  %2277 = vmatpush.msra.mxu0 %v96
  %2278 = vmatpush.msra.mxu0 %v92
  %2279 = vmatmul.f32.gmra.mxu0 %v2261
  %v2280 = vpop.f32.mrf.mxu0
  %v2281 = vadd.f32 %v223, %v2280
  %2282 = vmatmul.f32.gmra.mxu0 %v2262
  %v2283 = vpop.f32.mrf.mxu0
  %v2284 = vadd.f32 %v223, %v2283
  %2285 = vdwg.mxu0
  %2286 = vmatpush.msra.mxu0 %v216
  %2287 = vmatpush.msra.mxu0 %v212
  %2288 = vmatpush.msra.mxu0 %v208
  %2289 = vmatpush.msra.mxu0 %v204
  %2290 = vmatpush.msra.mxu0 %v200
  %2291 = vmatpush.msra.mxu0 %v196
  %2292 = vmatpush.msra.mxu0 %v192
  %2293 = vmatpush.msra.mxu0 %v188
  %2294 = vmatpush.msra.mxu0 %v184
  %2295 = vmatpush.msra.mxu0 %v180
  %2296 = vmatpush.msra.mxu0 %v176
  %2297 = vmatpush.msra.mxu0 %v172
  %2298 = vmatpush.msra.mxu0 %v168
  %2299 = vmatpush.msra.mxu0 %v164
  %2300 = vmatpush.msra.mxu0 %v160
  %2301 = vmatpush.msra.mxu0 %v156
  %2302 = vmatmul.f32.gmra.mxu0 %v2035
  %v2303 = vpop.f32.mrf.mxu0
  %v2304 = vadd.f32 %v2281, %v2303
  %2305 = vmatmul.f32.gmra.mxu0 %v2036
  %v2306 = vpop.f32.mrf.mxu0
  %v2307 = vadd.f32 %v2284, %v2306
  %2308 = vdwg.mxu0
  %2309 = vmatpush.msra.mxu0 %v153
  %2310 = vmatpush.msra.mxu0 %v149
  %2311 = vmatpush.msra.mxu0 %v145
  %2312 = vmatpush.msra.mxu0 %v141
  %2313 = vmatpush.msra.mxu0 %v137
  %2314 = vmatpush.msra.mxu0 %v133
  %2315 = vmatpush.msra.mxu0 %v129
  %2316 = vmatpush.msra.mxu0 %v125
  %2317 = vmatpush.msra.mxu0 %v121
  %2318 = vmatpush.msra.mxu0 %v117
  %2319 = vmatpush.msra.mxu0 %v113
  %2320 = vmatpush.msra.mxu0 %v109
  %2321 = vmatpush.msra.mxu0 %v105
  %2322 = vmatpush.msra.mxu0 %v101
  %2323 = vmatpush.msra.mxu0 %v97
  %2324 = vmatpush.msra.mxu0 %v93
  %2325 = vmatmul.f32.gmra.mxu0 %v2261
  %v2326 = vpop.f32.mrf.mxu0
  %v2327 = vadd.f32 %v224, %v2326
  %2328 = vmatmul.f32.gmra.mxu0 %v2262
  %v2329 = vpop.f32.mrf.mxu0
  %v2330 = vadd.f32 %v224, %v2329
  %2331 = vdwg.mxu0
  %2332 = vmatpush.msra.mxu0 %v217
  %2333 = vmatpush.msra.mxu0 %v213
  %2334 = vmatpush.msra.mxu0 %v209
  %2335 = vmatpush.msra.mxu0 %v205
  %2336 = vmatpush.msra.mxu0 %v201
  %2337 = vmatpush.msra.mxu0 %v197
  %2338 = vmatpush.msra.mxu0 %v193
  %2339 = vmatpush.msra.mxu0 %v189
  %2340 = vmatpush.msra.mxu0 %v185
  %2341 = vmatpush.msra.mxu0 %v181
  %2342 = vmatpush.msra.mxu0 %v177
  %2343 = vmatpush.msra.mxu0 %v173
  %2344 = vmatpush.msra.mxu0 %v169
  %2345 = vmatpush.msra.mxu0 %v165
  %2346 = vmatpush.msra.mxu0 %v161
  %2347 = vmatpush.msra.mxu0 %v157
  %2348 = vmatmul.f32.gmra.mxu0 %v2035
  %v2349 = vpop.f32.mrf.mxu0
  %v2350 = vadd.f32 %v2327, %v2349
  %2351 = vmatmul.f32.gmra.mxu0 %v2036
  %v2352 = vpop.f32.mrf.mxu0
  %v2353 = vadd.f32 %v2330, %v2352
  %2354 = vdwg.mxu0
  %2355 = vmatpush.msra.mxu0 %v154
  %2356 = vmatpush.msra.mxu0 %v150
  %2357 = vmatpush.msra.mxu0 %v146
  %2358 = vmatpush.msra.mxu0 %v142
  %2359 = vmatpush.msra.mxu0 %v138
  %2360 = vmatpush.msra.mxu0 %v134
  %2361 = vmatpush.msra.mxu0 %v130
  %2362 = vmatpush.msra.mxu0 %v126
  %2363 = vmatpush.msra.mxu0 %v122
  %2364 = vmatpush.msra.mxu0 %v118
  %2365 = vmatpush.msra.mxu0 %v114
  %2366 = vmatpush.msra.mxu0 %v110
  %2367 = vmatpush.msra.mxu0 %v106
  %2368 = vmatpush.msra.mxu0 %v102
  %2369 = vmatpush.msra.mxu0 %v98
  %2370 = vmatpush.msra.mxu0 %v94
  %2371 = vmatmul.f32.gmra.mxu0 %v2261
  %v2372 = vpop.f32.mrf.mxu0
  %v2373 = vadd.f32 %v225, %v2372
  %2374 = vmatmul.f32.gmra.mxu0 %v2262
  %v2375 = vpop.f32.mrf.mxu0
  %v2376 = vadd.f32 %v225, %v2375
  %2377 = vdwg.mxu0
  %2378 = vmatpush.msra.mxu0 %v218
  %2379 = vmatpush.msra.mxu0 %v214
  %2380 = vmatpush.msra.mxu0 %v210
  %2381 = vmatpush.msra.mxu0 %v206
  %2382 = vmatpush.msra.mxu0 %v202
  %2383 = vmatpush.msra.mxu0 %v198
  %2384 = vmatpush.msra.mxu0 %v194
  %2385 = vmatpush.msra.mxu0 %v190
  %2386 = vmatpush.msra.mxu0 %v186
  %2387 = vmatpush.msra.mxu0 %v182
  %2388 = vmatpush.msra.mxu0 %v178
  %2389 = vmatpush.msra.mxu0 %v174
  %2390 = vmatpush.msra.mxu0 %v170
  %2391 = vmatpush.msra.mxu0 %v166
  %2392 = vmatpush.msra.mxu0 %v162
  %2393 = vmatpush.msra.mxu0 %v158
  %2394 = vmatmul.f32.gmra.mxu0 %v2035
  %v2395 = vpop.f32.mrf.mxu0
  %v2396 = vadd.f32 %v2373, %v2395
  %2397 = vmatmul.f32.gmra.mxu0 %v2036
  %v2398 = vpop.f32.mrf.mxu0
  %v2399 = vadd.f32 %v2376, %v2398
  %2400 = vdwg.mxu0
  %2401 = vmatpush.msra.mxu0 %v155
  %2402 = vmatpush.msra.mxu0 %v151
  %2403 = vmatpush.msra.mxu0 %v147
  %2404 = vmatpush.msra.mxu0 %v143
  %2405 = vmatpush.msra.mxu0 %v139
  %2406 = vmatpush.msra.mxu0 %v135
  %2407 = vmatpush.msra.mxu0 %v131
  %2408 = vmatpush.msra.mxu0 %v127
  %2409 = vmatpush.msra.mxu0 %v123
  %2410 = vmatpush.msra.mxu0 %v119
  %2411 = vmatpush.msra.mxu0 %v115
  %2412 = vmatpush.msra.mxu0 %v111
  %2413 = vmatpush.msra.mxu0 %v107
  %2414 = vmatpush.msra.mxu0 %v103
  %2415 = vmatpush.msra.mxu0 %v99
  %2416 = vmatpush.msra.mxu0 %v95
  %2417 = vmatmul.f32.gmra.mxu0 %v2261
  %v2418 = vpop.f32.mrf.mxu0
  %v2419 = vadd.f32 %v226, %v2418
  %2420 = vmatmul.f32.gmra.mxu0 %v2262
  %v2421 = vpop.f32.mrf.mxu0
  %v2422 = vadd.f32 %v226, %v2421
  %2423 = vdwg.mxu0
  %2424 = vmatpush.msra.mxu0 %v219
  %2425 = vmatpush.msra.mxu0 %v215
  %2426 = vmatpush.msra.mxu0 %v211
  %2427 = vmatpush.msra.mxu0 %v207
  %2428 = vmatpush.msra.mxu0 %v203
  %2429 = vmatpush.msra.mxu0 %v199
  %2430 = vmatpush.msra.mxu0 %v195
  %2431 = vmatpush.msra.mxu0 %v191
  %2432 = vmatpush.msra.mxu0 %v187
  %2433 = vmatpush.msra.mxu0 %v183
  %2434 = vmatpush.msra.mxu0 %v179
  %2435 = vmatpush.msra.mxu0 %v175
  %2436 = vmatpush.msra.mxu0 %v171
  %2437 = vmatpush.msra.mxu0 %v167
  %2438 = vmatpush.msra.mxu0 %v163
  %2439 = vmatpush.msra.mxu0 %v159
  %2440 = vmatmul.f32.gmra.mxu0 %v2035
  %v2441 = vpop.f32.mrf.mxu0
  %v2442 = vadd.f32 %v2419, %v2441
  %2443 = vmatmul.f32.gmra.mxu0 %v2036
  %v2444 = vpop.f32.mrf.mxu0
  %v2445 = vadd.f32 %v2422, %v2444
  %2446 = vdwg.mxu0
  %v2447 = vxor.u32 %v2304, 2147483648
  %v2448 = vxor.u32 %v2307, 2147483648
  %v2449 = vmul.f32 %v2447, 1.442695
  %v2450 = vpow.pop %v2449
  %v2451 = vmul.f32 %v2448, 1.442695
  %v2452 = vpow.pop %v2451
  %v2453 = vadd.f32 %v2450, 1.0
  %v2454 = vadd.f32 %v2452, 1.0
  %v2455 = vrcp.pop %v2453
  %v2456 = vmul.f32 %v2453, %v2455
  %v2457 = vsub.f32 1.0, %v2456
  %v2458 = vmul.f32 %v2455, %v2457
  %v2459 = vadd.f32 %v2455, %v2458
  %vm2460 = vweird.f32 %v2453
  %vm2461 = vweird.f32 %v2455
  %vm2462 = vmor %vm2460, %vm2461
  %v2463 = vsel %vm2462, %v2455, %v2459
  %v2464 = vand.u32 2147483647, %v2453
  %vm2465 = vcmp.eq.f32.partialorder %v2464, 8.507059e+37
  %v2466 = vand.u32 %v2453, 2147483648
  %v2467 = vor.u32 1.1754944e-38, %v2466
  %v2468 = vsel %vm2465, %v2467, %v2463
  %v2469 = vmul.f32 1.0, %v2468
  %v2470 = vrcp.pop %v2454
  %v2471 = vmul.f32 %v2454, %v2470
  %v2472 = vsub.f32 1.0, %v2471
  %v2473 = vmul.f32 %v2470, %v2472
  %v2474 = vadd.f32 %v2470, %v2473
  %vm2475 = vweird.f32 %v2454
  %vm2476 = vweird.f32 %v2470
  %vm2477 = vmor %vm2475, %vm2476
  %v2478 = vsel %vm2477, %v2470, %v2474
  %v2479 = vand.u32 2147483647, %v2454
  %vm2480 = vcmp.eq.f32.partialorder %v2479, 8.507059e+37
  %v2481 = vand.u32 %v2454, 2147483648
  %v2482 = vor.u32 1.1754944e-38, %v2481
  %v2483 = vsel %vm2480, %v2482, %v2478
  %v2484 = vmul.f32 1.0, %v2483
  %v2485 = vxor.u32 %v2350, 2147483648
  %v2486 = vxor.u32 %v2353, 2147483648
  %v2487 = vmul.f32 %v2485, 1.442695
  %v2488 = vpow.pop %v2487
  %v2489 = vmul.f32 %v2486, 1.442695
  %v2490 = vpow.pop %v2489
  %v2491 = vadd.f32 %v2488, 1.0
  %v2492 = vadd.f32 %v2490, 1.0
  %v2493 = vrcp.pop %v2491
  %v2494 = vmul.f32 %v2491, %v2493
  %v2495 = vsub.f32 1.0, %v2494
  %v2496 = vmul.f32 %v2493, %v2495
  %v2497 = vadd.f32 %v2493, %v2496
  %vm2498 = vweird.f32 %v2491
  %vm2499 = vweird.f32 %v2493
  %vm2500 = vmor %vm2498, %vm2499
  %v2501 = vsel %vm2500, %v2493, %v2497
  %v2502 = vand.u32 2147483647, %v2491
  %vm2503 = vcmp.eq.f32.partialorder %v2502, 8.507059e+37
  %v2504 = vand.u32 %v2491, 2147483648
  %v2505 = vor.u32 1.1754944e-38, %v2504
  %v2506 = vsel %vm2503, %v2505, %v2501
  %v2507 = vmul.f32 1.0, %v2506
  %v2508 = vrcp.pop %v2492
  %v2509 = vmul.f32 %v2492, %v2508
  %v2510 = vsub.f32 1.0, %v2509
  %v2511 = vmul.f32 %v2508, %v2510
  %v2512 = vadd.f32 %v2508, %v2511
  %vm2513 = vweird.f32 %v2492
  %vm2514 = vweird.f32 %v2508
  %vm2515 = vmor %vm2513, %vm2514
  %v2516 = vsel %vm2515, %v2508, %v2512
  %v2517 = vand.u32 2147483647, %v2492
  %vm2518 = vcmp.eq.f32.partialorder %v2517, 8.507059e+37
  %v2519 = vand.u32 %v2492, 2147483648
  %v2520 = vor.u32 1.1754944e-38, %v2519
  %v2521 = vsel %vm2518, %v2520, %v2516
  %v2522 = vmul.f32 1.0, %v2521
  %v2523 = vtanh.pop %v2396
  %v2524 = vtanh.pop %v2399
  %v2525 = vxor.u32 %v2442, 2147483648
  %v2526 = vxor.u32 %v2445, 2147483648
  %v2527 = vmul.f32 %v2525, 1.442695
  %v2528 = vpow.pop %v2527
  %v2529 = vmul.f32 %v2526, 1.442695
  %v2530 = vpow.pop %v2529
  %v2531 = vadd.f32 %v2528, 1.0
  %v2532 = vadd.f32 %v2530, 1.0
  %v2533 = vrcp.pop %v2531
  %v2534 = vmul.f32 %v2531, %v2533
  %v2535 = vsub.f32 1.0, %v2534
  %v2536 = vmul.f32 %v2533, %v2535
  %v2537 = vadd.f32 %v2533, %v2536
  %vm2538 = vweird.f32 %v2531
  %vm2539 = vweird.f32 %v2533
  %vm2540 = vmor %vm2538, %vm2539
  %v2541 = vsel %vm2540, %v2533, %v2537
  %v2542 = vand.u32 2147483647, %v2531
  %vm2543 = vcmp.eq.f32.partialorder %v2542, 8.507059e+37
  %v2544 = vand.u32 %v2531, 2147483648
  %v2545 = vor.u32 1.1754944e-38, %v2544
  %v2546 = vsel %vm2543, %v2545, %v2541
  %v2547 = vmul.f32 1.0, %v2546
  %v2548 = vrcp.pop %v2532
  %v2549 = vmul.f32 %v2532, %v2548
  %v2550 = vsub.f32 1.0, %v2549
  %v2551 = vmul.f32 %v2548, %v2550
  %v2552 = vadd.f32 %v2548, %v2551
  %vm2553 = vweird.f32 %v2532
  %vm2554 = vweird.f32 %v2548
  %vm2555 = vmor %vm2553, %vm2554
  %v2556 = vsel %vm2555, %v2548, %v2552
  %v2557 = vand.u32 2147483647, %v2532
  %vm2558 = vcmp.eq.f32.partialorder %v2557, 8.507059e+37
  %v2559 = vand.u32 %v2532, 2147483648
  %v2560 = vor.u32 1.1754944e-38, %v2559
  %v2561 = vsel %vm2558, %v2560, %v2556
  %v2562 = vmul.f32 1.0, %v2561
  %v2563 = vmul.f32 %v2507, %v2031
  %v2564 = vmul.f32 %v2522, %v2032
  %v2565 = vmul.f32 %v2469, %v2523
  %v2566 = vmul.f32 %v2484, %v2524
  %v2567 = vadd.f32 %v2563, %v2565
  %v2568 = vadd.f32 %v2564, %v2566
  %v2569 = vtanh.pop %v2567
  %v2570 = vtanh.pop %v2568
  %v2571 = vmul.f32 %v2547, %v2569
  %v2572 = vmul.f32 %v2562, %v2570
  %v2573 = vld [vmem:[%s2 + $0x660] sm:$0xff]
  %v2574 = vld [vmem:[%s2 + $0x680] sm:$0xff]
  %v2575 = vld [vmem:[%s2 + $0x6a0] sm:$0xff]
  %v2576 = vld [vmem:[%s2 + $0x6c0] sm:$0xff]
  %v2577 = vld [vmem:[%s2 + $0x6e0] sm:$0xff]
  %v2578 = vld [vmem:[%s2 + $0x700] sm:$0xff]
  %v2579 = vld [vmem:[%s2 + $0x720] sm:$0xff]
  %v2580 = vld [vmem:[%s2 + $0x740] sm:$0xff]
  %v2581 = vld [vmem:[%s2 + $0x760] sm:$0xff]
  %v2582 = vld [vmem:[%s2 + $0x780] sm:$0xff]
  %v2583 = vld [vmem:[%s2 + $0x7a0] sm:$0xff]
  %v2584 = vld [vmem:[%s2 + $0x7c0] sm:$0xff]
  %v2585 = vld [vmem:[%s2 + $0x7e0] sm:$0xff]
  %v2586 = vld [vmem:[%s2 + $0x800] sm:$0xff]
  %v2587 = vld [vmem:[%s2 + $0x820] sm:$0xff]
  %v2588 = vld [vmem:[%s2 + $0x840] sm:$0xff]
  %v2589 = vld [vmem:[%s2 + $0x860] sm:$0xff]
  %v2590 = vld [vmem:[%s2 + $0x880] sm:$0xff]
  %v2591 = vld [vmem:[%s2 + $0x8a0] sm:$0xff]
  %v2592 = vld [vmem:[%s2 + $0x8c0] sm:$0xff]
  %v2593 = vld [vmem:[%s2 + $0x8e0] sm:$0xff]
  %v2594 = vld [vmem:[%s2 + $0x900] sm:$0xff]
  %v2595 = vld [vmem:[%s2 + $0x920] sm:$0xff]
  %v2596 = vld [vmem:[%s2 + $0x940] sm:$0xff]
  %v2597 = vld [vmem:[%s2 + $0x960] sm:$0xff]
  %v2598 = vld [vmem:[%s2 + $0x980] sm:$0xff]
  %v2599 = vld [vmem:[%s2 + $0x9a0] sm:$0xff]
  %v2600 = vld [vmem:[%s2 + $0x9c0] sm:$0xff]
  %v2601 = vld [vmem:[%s2 + $0x9e0] sm:$0xff]
  %v2602 = vld [vmem:[%s2 + $0xa00] sm:$0xff]
  %v2603 = vld [vmem:[%s2 + $0xa20] sm:$0xff]
  %v2604 = vld [vmem:[%s2 + $0xa40] sm:$0xff]
  %v2605 = vld [vmem:[%s2 + $0xa60] sm:$0xff]
  %v2606 = vld [vmem:[%s2 + $0xa80] sm:$0xff]
  %v2607 = vld [vmem:[%s2 + $0xaa0] sm:$0xff]
  %v2608 = vld [vmem:[%s2 + $0xac0] sm:$0xff]
  %v2609 = vld [vmem:[%s2 + $0xae0] sm:$0xff]
  %v2610 = vld [vmem:[%s2 + $0xb00] sm:$0xff]
  %v2611 = vld [vmem:[%s2 + $0xb20] sm:$0xff]
  %v2612 = vld [vmem:[%s2 + $0xb40] sm:$0xff]
  %v2613 = vld [vmem:[%s2 + $0xb60] sm:$0xff]
  %v2614 = vld [vmem:[%s2 + $0xb80] sm:$0xff]
  %v2615 = vld [vmem:[%s2 + $0xba0] sm:$0xff]
  %v2616 = vld [vmem:[%s2 + $0xbc0] sm:$0xff]
  %v2617 = vld [vmem:[%s2 + $0xbe0] sm:$0xff]
  %v2618 = vld [vmem:[%s2 + $0xc00] sm:$0xff]
  %v2619 = vld [vmem:[%s2 + $0xc20] sm:$0xff]
  %v2620 = vld [vmem:[%s2 + $0xc40] sm:$0xff]
  %v2621 = vld [vmem:[%s2 + $0xc60] sm:$0xff]
  %v2622 = vld [vmem:[%s2 + $0xc80] sm:$0xff]
  %v2623 = vld [vmem:[%s2 + $0xca0] sm:$0xff]
  %v2624 = vld [vmem:[%s2 + $0xcc0] sm:$0xff]
  %v2625 = vld [vmem:[%s2 + $0xce0] sm:$0xff]
  %v2626 = vld [vmem:[%s2 + $0xd00] sm:$0xff]
  %v2627 = vld [vmem:[%s2 + $0xd20] sm:$0xff]
  %v2628 = vld [vmem:[%s2 + $0xd40] sm:$0xff]
  %v2629 = vld [vmem:[%s2 + $0xd60] sm:$0xff]
  %v2630 = vld [vmem:[%s2 + $0xd80] sm:$0xff]
  %v2631 = vld [vmem:[%s2 + $0xda0] sm:$0xff]
  %v2632 = vld [vmem:[%s2 + $0xdc0] sm:$0xff]
  %v2633 = vld [vmem:[%s2 + $0xde0] sm:$0xff]
  %v2634 = vld [vmem:[%s2 + $0xe00] sm:$0xff]
  %v2635 = vld [vmem:[%s2 + $0xe20] sm:$0xff]
  %v2636 = vld [vmem:[%s2 + $0xe40] sm:$0xff]
  %2637 = vmatpush.msra.mxu0 %v2588
  %2638 = vmatpush.msra.mxu0 %v2587
  %2639 = vmatpush.msra.mxu0 %v2586
  %2640 = vmatpush.msra.mxu0 %v2585
  %2641 = vmatpush.msra.mxu0 %v2584
  %2642 = vmatpush.msra.mxu0 %v2583
  %2643 = vmatpush.msra.mxu0 %v2582
  %2644 = vmatpush.msra.mxu0 %v2581
  %2645 = vmatpush.msra.mxu0 %v2580
  %2646 = vmatpush.msra.mxu0 %v2579
  %2647 = vmatpush.msra.mxu0 %v2578
  %2648 = vmatpush.msra.mxu0 %v2577
  %2649 = vmatpush.msra.mxu0 %v2576
  %2650 = vmatpush.msra.mxu0 %v2575
  %2651 = vmatpush.msra.mxu0 %v2574
  %2652 = vmatpush.msra.mxu0 %v2573
  %2653 = vmatmul.f32.gmra.mxu0 %v963
  %v2654 = vpop.f32.mrf.mxu0
  %v2655 = vadd.f32 0.0, %v2654
  %2656 = vmatmul.f32.gmra.mxu0 %v964
  %v2657 = vpop.f32.mrf.mxu0
  %v2658 = vadd.f32 0.0, %v2657
  %2659 = vdwg.mxu0
  %2660 = vmatpush.msra.mxu0 %v2604
  %2661 = vmatpush.msra.mxu0 %v2603
  %2662 = vmatpush.msra.mxu0 %v2602
  %2663 = vmatpush.msra.mxu0 %v2601
  %2664 = vmatpush.msra.mxu0 %v2600
  %2665 = vmatpush.msra.mxu0 %v2599
  %2666 = vmatpush.msra.mxu0 %v2598
  %2667 = vmatpush.msra.mxu0 %v2597
  %2668 = vmatpush.msra.mxu0 %v2596
  %2669 = vmatpush.msra.mxu0 %v2595
  %2670 = vmatpush.msra.mxu0 %v2594
  %2671 = vmatpush.msra.mxu0 %v2593
  %2672 = vmatpush.msra.mxu0 %v2592
  %2673 = vmatpush.msra.mxu0 %v2591
  %2674 = vmatpush.msra.mxu0 %v2590
  %2675 = vmatpush.msra.mxu0 %v2589
  %2676 = vmatmul.f32.gmra.mxu0 %v1499
  %v2677 = vpop.f32.mrf.mxu0
  %v2678 = vadd.f32 %v2655, %v2677
  %2679 = vmatmul.f32.gmra.mxu0 %v1500
  %v2680 = vpop.f32.mrf.mxu0
  %v2681 = vadd.f32 %v2658, %v2680
  %2682 = vdwg.mxu0
  %2683 = vmatpush.msra.mxu0 %v2620
  %2684 = vmatpush.msra.mxu0 %v2619
  %2685 = vmatpush.msra.mxu0 %v2618
  %2686 = vmatpush.msra.mxu0 %v2617
  %2687 = vmatpush.msra.mxu0 %v2616
  %2688 = vmatpush.msra.mxu0 %v2615
  %2689 = vmatpush.msra.mxu0 %v2614
  %2690 = vmatpush.msra.mxu0 %v2613
  %2691 = vmatpush.msra.mxu0 %v2612
  %2692 = vmatpush.msra.mxu0 %v2611
  %2693 = vmatpush.msra.mxu0 %v2610
  %2694 = vmatpush.msra.mxu0 %v2609
  %2695 = vmatpush.msra.mxu0 %v2608
  %2696 = vmatpush.msra.mxu0 %v2607
  %2697 = vmatpush.msra.mxu0 %v2606
  %2698 = vmatpush.msra.mxu0 %v2605
  %2699 = vmatmul.f32.gmra.mxu0 %v2035
  %v2700 = vpop.f32.mrf.mxu0
  %v2701 = vadd.f32 %v2678, %v2700
  %2702 = vmatmul.f32.gmra.mxu0 %v2036
  %v2703 = vpop.f32.mrf.mxu0
  %v2704 = vadd.f32 %v2681, %v2703
  %2705 = vdwg.mxu0
  %2706 = vmatpush.msra.mxu0 %v2636
  %2707 = vmatpush.msra.mxu0 %v2635
  %2708 = vmatpush.msra.mxu0 %v2634
  %2709 = vmatpush.msra.mxu0 %v2633
  %2710 = vmatpush.msra.mxu0 %v2632
  %2711 = vmatpush.msra.mxu0 %v2631
  %2712 = vmatpush.msra.mxu0 %v2630
  %2713 = vmatpush.msra.mxu0 %v2629
  %2714 = vmatpush.msra.mxu0 %v2628
  %2715 = vmatpush.msra.mxu0 %v2627
  %2716 = vmatpush.msra.mxu0 %v2626
  %2717 = vmatpush.msra.mxu0 %v2625
  %2718 = vmatpush.msra.mxu0 %v2624
  %2719 = vmatpush.msra.mxu0 %v2623
  %2720 = vmatpush.msra.mxu0 %v2622
  %2721 = vmatpush.msra.mxu0 %v2621
  %2722 = vmatmul.f32.gmra.mxu0 %v2571
  %v2723 = vpop.f32.mrf.mxu0
  %v2724 = vadd.f32 %v2701, %v2723
  %2725 = vmatmul.f32.gmra.mxu0 %v2572
  %v2726 = vpop.f32.mrf.mxu0
  %v2727 = vadd.f32 %v2704, %v2726
  %2728 = vdwg.mxu0
  %v2729 = vld [vmem:[%s1] sm:$0xff]
  %v2730 = vld [vmem:[%s1 + $0x8] sm:$0xff]
  %vm2731 = vcmp.gt.f32.partialorder %v2729, 0.0
  %vm2732 = vcmp.gt.f32.partialorder %v2730, 0.0
  %v2733 = vsel %vm2731, 0.0, -9e+15
  %v2734 = vsel %vm2732, 0.0, -9e+15
  %v2735 = vld [vmem:[%s2 + $0xe60] ss:$0 sm:$0xff]
  %v2736 = vld [vmem:[%s2 + $0xe80] ss:$0 sm:$0xff]
  %v2737 = vmul.f32 %v2724, %v2735
  %v2738 = vmul.f32 %v2727, %v2735
  %v2739 = vsel %vm240, %v2737, 0.0
  %2740 = vadd.xlane.f32.xlu0 %v2739
  %v2741 = vpop.xlane.xlu0 %2740
  %v2742 = vsel %vm240, %v2738, 0.0
  %2743 = vadd.xlane.f32.xlu0 %v2742
  %v2744 = vpop.xlane.xlu0 %2743
  %v2745 = vmul.f32 %v2724, %v2736
  %v2746 = vmul.f32 %v2727, %v2736
  %v2747 = vsel %vm240, %v2745, 0.0
  %2748 = vadd.xlane.f32.xlu0 %v2747
  %v2749 = vpop.xlane.xlu0 %2748
  %v2750 = vsel %vm240, %v2746, 0.0
  %2751 = vadd.xlane.f32.xlu0 %v2750
  %v2752 = vpop.xlane.xlu0 %2751
  %2753 = vxpose.xlu0.b32.start [1/16] %v2749, 128
  %2754 = vxpose.xlu0.b32.cont [2/16] %v2752, 128
  %2755 = vxpose.xlu0.b32.cont [3/16] 0.0, 128
  %2756 = vxpose.xlu0.b32.cont [4/16] 0.0, 128
  %2757 = vxpose.xlu0.b32.cont [5/16] 0.0, 128
  %2758 = vxpose.xlu0.b32.cont [6/16] 0.0, 128
  %2759 = vxpose.xlu0.b32.cont [7/16] 0.0, 128
  %2760 = vxpose.xlu0.b32.cont [8/16] 0.0, 128
  %2761 = vxpose.xlu0.b32.cont [9/16] 0.0, 128
  %2762 = vxpose.xlu0.b32.cont [10/16] 0.0, 128
  %2763 = vxpose.xlu0.b32.cont [11/16] 0.0, 128
  %2764 = vxpose.xlu0.b32.cont [12/16] 0.0, 128
  %2765 = vxpose.xlu0.b32.cont [13/16] 0.0, 128
  %2766 = vxpose.xlu0.b32.cont [14/16] 0.0, 128
  %2767 = vxpose.xlu0.b32.cont [15/16] 0.0, 128
  %2768 = vxpose.xlu0.b32.end [16/16] 0.0, 128
  %v2769 = vpop.trf.xlu0
  %v2770 = vpop.trf.xlu0
  %v2771 = vpop.trf.xlu0
  %v2772 = vpop.trf.xlu0
  %v2773 = vpop.trf.xlu0
  %v2774 = vpop.trf.xlu0
  %v2775 = vpop.trf.xlu0
  %v2776 = vpop.trf.xlu0
  %v2777 = vpop.trf.xlu0
  %v2778 = vpop.trf.xlu0
  %v2779 = vpop.trf.xlu0
  %v2780 = vpop.trf.xlu0
  %v2781 = vpop.trf.xlu0
  %v2782 = vpop.trf.xlu0
  %v2783 = vpop.trf.xlu0
  %v2784 = vpop.trf.xlu0
  %v2785 = vperm.slane %v2769, 0
  %v2786 = vadd.f32 %v2741, %v2785
  %v2787 = vadd.f32 %v2744, %v2785
  %vm2788 = vcmp.gt.f32.partialorder %v2786, 0.0
  %vm2789 = vcmp.gt.f32.partialorder %v2787, 0.0
  %v2790 = vmul.f32 %v2786, 0.2
  %v2791 = vmul.f32 %v2787, 0.2
  %v2792 = vsel %vm2788, %v2786, %v2790
  %v2793 = vsel %vm2789, %v2787, %v2791
  %v2794 = vadd.f32 %v2792, %v2733
  %v2795 = vadd.f32 %v2793, %v2734
  %vm2796 = vcmask 130048
  %v2797 = vsel %vm2796, %v2794, -inf
  %2798 = vmax.xlane.f32.xlu0 %v2797
  %v2799 = vpop.xlane.xlu0 %2798
  %v2800 = vsel %vm2796, %v2795, -inf
  %2801 = vmax.xlane.f32.xlu0 %v2800
  %v2802 = vpop.xlane.xlu0 %2801
  %v2803 = vsub.f32 %v2794, %v2799
  %v2804 = vsub.f32 %v2795, %v2802
  %v2805 = vmul.f32 %v2803, 1.442695
  %v2806 = vpow.pop %v2805
  %v2807 = vmul.f32 %v2804, 1.442695
  %v2808 = vpow.pop %v2807
  %v2809 = vsel %vm2796, %v2806, 0.0
  %2810 = vadd.xlane.f32.xlu0 %v2809
  %v2811 = vpop.xlane.xlu0 %2810
  %v2812 = vsel %vm2796, %v2808, 0.0
  %2813 = vadd.xlane.f32.xlu0 %v2812
  %v2814 = vpop.xlane.xlu0 %2813
  %v2815 = vmax.f32 %v2811, 1e-30
  %v2816 = vmax.f32 %v2814, 1e-30
  %v2817 = vrcp.pop %v2815
  %v2818 = vmul.f32 %v2815, %v2817
  %v2819 = vsub.f32 1.0, %v2818
  %v2820 = vmul.f32 %v2817, %v2819
  %v2821 = vadd.f32 %v2817, %v2820
  %vm2822 = vweird.f32 %v2815
  %vm2823 = vweird.f32 %v2817
  %vm2824 = vmor %vm2822, %vm2823
  %v2825 = vsel %vm2824, %v2817, %v2821
  %v2826 = vand.u32 2147483647, %v2815
  %vm2827 = vcmp.eq.f32.partialorder %v2826, 8.507059e+37
  %v2828 = vand.u32 %v2815, 2147483648
  %v2829 = vor.u32 1.1754944e-38, %v2828
  %v2830 = vsel %vm2827, %v2829, %v2825
  %v2831 = vrcp.pop %v2816
  %v2832 = vmul.f32 %v2816, %v2831
  %v2833 = vsub.f32 1.0, %v2832
  %v2834 = vmul.f32 %v2831, %v2833
  %v2835 = vadd.f32 %v2831, %v2834
  %vm2836 = vweird.f32 %v2816
  %vm2837 = vweird.f32 %v2831
  %vm2838 = vmor %vm2836, %vm2837
  %v2839 = vsel %vm2838, %v2831, %v2835
  %v2840 = vand.u32 2147483647, %v2816
  %vm2841 = vcmp.eq.f32.partialorder %v2840, 8.507059e+37
  %v2842 = vand.u32 %v2816, 2147483648
  %v2843 = vor.u32 1.1754944e-38, %v2842
  %v2844 = vsel %vm2841, %v2843, %v2839
  %v2845 = vmul.f32 %v2806, %v2830
  %v2846 = vmul.f32 %v2808, %v2844
  %v2848 = vsel %vm2796, %v2845, 0
  %v2851 = vsel %vm2796, %v2846, 0
  %2853 = vmatpush.msra.mxu0 0.0
  %2854 = vmatpush.msra.mxu0 0.0
  %2855 = vmatpush.msra.mxu0 0.0
  %2856 = vmatpush.msra.mxu0 0.0
  %2857 = vmatpush.msra.mxu0 0.0
  %2858 = vmatpush.msra.mxu0 0.0
  %2859 = vmatpush.msra.mxu0 0.0
  %2860 = vmatpush.msra.mxu0 0.0
  %2861 = vmatpush.msra.mxu0 0.0
  %2862 = vmatpush.msra.mxu0 0.0
  %2863 = vmatpush.msra.mxu0 0.0
  %2864 = vmatpush.msra.mxu0 0.0
  %2865 = vmatpush.msra.mxu0 0.0
  %2866 = vmatpush.msra.mxu0 0.0
  %2867 = vmatpush.msra.mxu0 %v2727
  %2868 = vmatpush.msra.mxu0 %v2724
  %2869 = vmatmul.f32.gmra.mxu0 %v2848
  %v2870 = vpop.f32.mrf.mxu0
  %v2871 = vadd.f32 0.0, %v2870
  %2872 = vmatmul.f32.gmra.mxu0 %v2851
  %v2873 = vpop.f32.mrf.mxu0
  %v2874 = vadd.f32 0.0, %v2873
  %2875 = vdwg.mxu0
  %vm2876 = vcmp.gt.f32.partialorder %v2871, 0.0
  %vm2877 = vcmp.gt.f32.partialorder %v2874, 0.0
  %v2878 = vmul.f32 %v2871, 1.442695
  %v2879 = vpow.pop %v2878
  %v2880 = vmul.f32 %v2874, 1.442695
  %v2881 = vpow.pop %v2880
  %v2882 = vsub.f32 %v2879, 1.0
  %v2883 = vsub.f32 %v2881, 1.0
  %v2884 = vsel %vm2876, %v2871, %v2882
  %v2885 = vsel %vm2877, %v2874, %v2883
  %v2886 = vld [vmem:[%s2 + $0xea0] sm:$0xff]
  %v2887 = vld [vmem:[%s2 + $0xe61] ss:$0 sm:$0xff]
  %v2888 = vld [vmem:[%s2 + $0xe81] ss:$0 sm:$0xff]
  %2890 = vrot.lane.b32.xlu0 %v2887, 8
  %v2891 = vpop.permute.xlu0 %2890
  %v2893 = vmul.f32 %v2724, %v2891
  %v2894 = vmul.f32 %v2727, %v2891
  %2897 = vrot.lane.b32.xlu0 %v2893, 120
  %v2898 = vpop.permute.xlu0 %2897
  %2899 = vrot.lane.b32.xlu0 %v2894, 120
  %v2900 = vpop.permute.xlu0 %2899
  %v2903 = vsel %vm240, %v2898, 0.0
  %2904 = vadd.xlane.f32.xlu0 %v2903
  %v2905 = vpop.xlane.xlu0 %2904
  %v2906 = vsel %vm240, %v2900, 0.0
  %2907 = vadd.xlane.f32.xlu0 %v2906
  %v2908 = vpop.xlane.xlu0 %2907
  %2910 = vrot.lane.b32.xlu0 %v2888, 8
  %v2911 = vpop.permute.xlu0 %2910
  %v2913 = vmul.f32 %v2724, %v2911
  %v2914 = vmul.f32 %v2727, %v2911
  %2917 = vrot.lane.b32.xlu0 %v2913, 120
  %v2918 = vpop.permute.xlu0 %2917
  %2919 = vrot.lane.b32.xlu0 %v2914, 120
  %v2920 = vpop.permute.xlu0 %2919
  %v2923 = vsel %vm240, %v2918, 0.0
  %2924 = vadd.xlane.f32.xlu0 %v2923
  %v2925 = vpop.xlane.xlu0 %2924
  %v2926 = vsel %vm240, %v2920, 0.0
  %2927 = vadd.xlane.f32.xlu0 %v2926
  %v2928 = vpop.xlane.xlu0 %2927
  %2929 = vxpose.xlu0.b32.start [1/16] %v2925, 128
  %2930 = vxpose.xlu0.b32.cont [2/16] %v2928, 128
  %2931 = vxpose.xlu0.b32.cont [3/16] 0.0, 128
  %2932 = vxpose.xlu0.b32.cont [4/16] 0.0, 128
  %2933 = vxpose.xlu0.b32.cont [5/16] 0.0, 128
  %2934 = vxpose.xlu0.b32.cont [6/16] 0.0, 128
  %2935 = vxpose.xlu0.b32.cont [7/16] 0.0, 128
  %2936 = vxpose.xlu0.b32.cont [8/16] 0.0, 128
  %2937 = vxpose.xlu0.b32.cont [9/16] 0.0, 128
  %2938 = vxpose.xlu0.b32.cont [10/16] 0.0, 128
  %2939 = vxpose.xlu0.b32.cont [11/16] 0.0, 128
  %2940 = vxpose.xlu0.b32.cont [12/16] 0.0, 128
  %2941 = vxpose.xlu0.b32.cont [13/16] 0.0, 128
  %2942 = vxpose.xlu0.b32.cont [14/16] 0.0, 128
  %2943 = vxpose.xlu0.b32.cont [15/16] 0.0, 128
  %2944 = vxpose.xlu0.b32.end [16/16] 0.0, 128
  %v2945 = vpop.trf.xlu0
  %v2946 = vpop.trf.xlu0
  %v2947 = vpop.trf.xlu0
  %v2948 = vpop.trf.xlu0
  %v2949 = vpop.trf.xlu0
  %v2950 = vpop.trf.xlu0
  %v2951 = vpop.trf.xlu0
  %v2952 = vpop.trf.xlu0
  %v2953 = vpop.trf.xlu0
  %v2954 = vpop.trf.xlu0
  %v2955 = vpop.trf.xlu0
  %v2956 = vpop.trf.xlu0
  %v2957 = vpop.trf.xlu0
  %v2958 = vpop.trf.xlu0
  %v2959 = vpop.trf.xlu0
  %v2960 = vpop.trf.xlu0
  %v2961 = vperm.slane %v2945, 0
  %v2962 = vadd.f32 %v2905, %v2961
  %v2963 = vadd.f32 %v2908, %v2961
  %vm2964 = vcmp.gt.f32.partialorder %v2962, 0.0
  %vm2965 = vcmp.gt.f32.partialorder %v2963, 0.0
  %v2966 = vmul.f32 %v2962, 0.2
  %v2967 = vmul.f32 %v2963, 0.2
  %v2968 = vsel %vm2964, %v2962, %v2966
  %v2969 = vsel %vm2965, %v2963, %v2967
  %v2970 = vadd.f32 %v2968, %v2733
  %v2971 = vadd.f32 %v2969, %v2734
  %v2972 = vsel %vm2796, %v2970, -inf
  %2973 = vmax.xlane.f32.xlu0 %v2972
  %v2974 = vpop.xlane.xlu0 %2973
  %v2975 = vsel %vm2796, %v2971, -inf
  %2976 = vmax.xlane.f32.xlu0 %v2975
  %v2977 = vpop.xlane.xlu0 %2976
  %v2978 = vsub.f32 %v2970, %v2974
  %v2979 = vsub.f32 %v2971, %v2977
  %v2980 = vmul.f32 %v2978, 1.442695
  %v2981 = vpow.pop %v2980
  %v2982 = vmul.f32 %v2979, 1.442695
  %v2983 = vpow.pop %v2982
  %v2984 = vsel %vm2796, %v2981, 0.0
  %2985 = vadd.xlane.f32.xlu0 %v2984
  %v2986 = vpop.xlane.xlu0 %2985
  %v2987 = vsel %vm2796, %v2983, 0.0
  %2988 = vadd.xlane.f32.xlu0 %v2987
  %v2989 = vpop.xlane.xlu0 %2988
  %v2990 = vmax.f32 %v2986, 1e-30
  %v2991 = vmax.f32 %v2989, 1e-30
  %v2992 = vrcp.pop %v2990
  %v2993 = vmul.f32 %v2990, %v2992
  %v2994 = vsub.f32 1.0, %v2993
  %v2995 = vmul.f32 %v2992, %v2994
  %v2996 = vadd.f32 %v2992, %v2995
  %vm2997 = vweird.f32 %v2990
  %vm2998 = vweird.f32 %v2992
  %vm2999 = vmor %vm2997, %vm2998
  %v3000 = vsel %vm2999, %v2992, %v2996
  %v3001 = vand.u32 2147483647, %v2990
  %vm3002 = vcmp.eq.f32.partialorder %v3001, 8.507059e+37
  %v3003 = vand.u32 %v2990, 2147483648
  %v3004 = vor.u32 1.1754944e-38, %v3003
  %v3005 = vsel %vm3002, %v3004, %v3000
  %v3006 = vrcp.pop %v2991
  %v3007 = vmul.f32 %v2991, %v3006
  %v3008 = vsub.f32 1.0, %v3007
  %v3009 = vmul.f32 %v3006, %v3008
  %v3010 = vadd.f32 %v3006, %v3009
  %vm3011 = vweird.f32 %v2991
  %vm3012 = vweird.f32 %v3006
  %vm3013 = vmor %vm3011, %vm3012
  %v3014 = vsel %vm3013, %v3006, %v3010
  %v3015 = vand.u32 2147483647, %v2991
  %vm3016 = vcmp.eq.f32.partialorder %v3015, 8.507059e+37
  %v3017 = vand.u32 %v2991, 2147483648
  %v3018 = vor.u32 1.1754944e-38, %v3017
  %v3019 = vsel %vm3016, %v3018, %v3014
  %v3020 = vmul.f32 %v2981, %v3005
  %v3021 = vmul.f32 %v2983, %v3019
  %3024 = vrot.lane.b32.xlu0 %v2724, 120
  %v3025 = vpop.permute.xlu0 %3024
  %3026 = vrot.lane.b32.xlu0 %v2727, 120
  %v3027 = vpop.permute.xlu0 %3026
  %v3031 = vsel %vm2796, %v3020, 0
  %v3034 = vsel %vm2796, %v3021, 0
  %3036 = vmatpush.msra.mxu0 0.0
  %3037 = vmatpush.msra.mxu0 0.0
  %3038 = vmatpush.msra.mxu0 0.0
  %3039 = vmatpush.msra.mxu0 0.0
  %3040 = vmatpush.msra.mxu0 0.0
  %3041 = vmatpush.msra.mxu0 0.0
  %3042 = vmatpush.msra.mxu0 0.0
  %3043 = vmatpush.msra.mxu0 0.0
  %3044 = vmatpush.msra.mxu0 0.0
  %3045 = vmatpush.msra.mxu0 0.0
  %3046 = vmatpush.msra.mxu0 0.0
  %3047 = vmatpush.msra.mxu0 0.0
  %3048 = vmatpush.msra.mxu0 0.0
  %3049 = vmatpush.msra.mxu0 0.0
  %3050 = vmatpush.msra.mxu0 %v3027
  %3051 = vmatpush.msra.mxu0 %v3025
  %3052 = vmatmul.f32.gmra.mxu0 %v3031
  %v3053 = vpop.f32.mrf.mxu0
  %v3054 = vadd.f32 0.0, %v3053
  %3055 = vmatmul.f32.gmra.mxu0 %v3034
  %v3056 = vpop.f32.mrf.mxu0
  %v3057 = vadd.f32 0.0, %v3056
  %3058 = vdwg.mxu0
  %vm3059 = vcmp.gt.f32.partialorder %v3054, 0.0
  %vm3060 = vcmp.gt.f32.partialorder %v3057, 0.0
  %v3061 = vmul.f32 %v3054, 1.442695
  %v3062 = vpow.pop %v3061
  %v3063 = vmul.f32 %v3057, 1.442695
  %v3064 = vpow.pop %v3063
  %v3065 = vsub.f32 %v3062, 1.0
  %v3066 = vsub.f32 %v3064, 1.0
  %v3067 = vsel %vm3059, %v3054, %v3065
  %v3068 = vsel %vm3060, %v3057, %v3066
  %v3069 = vld [vmem:[%s2 + $0xec0] sm:$0xff]
  %v3071 = vsel %vm240, %v3067, 0
  %v3074 = vsel %vm240, %v3068, 0
  %3076 = vmatpush.msra.mxu0 0.0
  %3077 = vmatpush.msra.mxu0 0.0
  %3078 = vmatpush.msra.mxu0 0.0
  %3079 = vmatpush.msra.mxu0 0.0
  %3080 = vmatpush.msra.mxu0 0.0
  %3081 = vmatpush.msra.mxu0 0.0
  %3082 = vmatpush.msra.mxu0 0.0
  %3083 = vmatpush.msra.mxu0 0.0
  %3084 = vmatpush.msra.mxu0 0.0
  %3085 = vmatpush.msra.mxu0 0.0
  %3086 = vmatpush.msra.mxu0 0.0
  %3087 = vmatpush.msra.mxu0 0.0
  %3088 = vmatpush.msra.mxu0 0.0
  %3089 = vmatpush.msra.mxu0 0.0
  %3090 = vmatpush.msra.mxu0 0.0
  %3091 = vmatpush.msra.mxu0 %v3069
  %3092 = vmatmul.f32.gmra.mxu0 %v3071
  %v3093 = vpop.f32.mrf.mxu0
  %v3094 = vadd.f32 0.0, %v3093
  %3095 = vmatmul.f32.gmra.mxu0 %v3074
  %v3096 = vpop.f32.mrf.mxu0
  %v3097 = vadd.f32 0.0, %v3096
  %3098 = vdwg.mxu0
  %v3100 = vsel %vm240, %v2884, 0
  %v3103 = vsel %vm240, %v2885, 0
  %3105 = vmatpush.msra.mxu0 0.0
  %3106 = vmatpush.msra.mxu0 0.0
  %3107 = vmatpush.msra.mxu0 0.0
  %3108 = vmatpush.msra.mxu0 0.0
  %3109 = vmatpush.msra.mxu0 0.0
  %3110 = vmatpush.msra.mxu0 0.0
  %3111 = vmatpush.msra.mxu0 0.0
  %3112 = vmatpush.msra.mxu0 0.0
  %3113 = vmatpush.msra.mxu0 0.0
  %3114 = vmatpush.msra.mxu0 0.0
  %3115 = vmatpush.msra.mxu0 0.0
  %3116 = vmatpush.msra.mxu0 0.0
  %3117 = vmatpush.msra.mxu0 0.0
  %3118 = vmatpush.msra.mxu0 0.0
  %3119 = vmatpush.msra.mxu0 0.0
  %3120 = vmatpush.msra.mxu0 %v2886
  %3121 = vmatmul.f32.gmra.mxu0 %v3100
  %v3122 = vpop.f32.mrf.mxu0
  %v3123 = vadd.f32 %v3094, %v3122
  %3124 = vmatmul.f32.gmra.mxu0 %v3103
  %v3125 = vpop.f32.mrf.mxu0
  %v3126 = vadd.f32 %v3097, %v3125
  %3127 = vdwg.mxu0
  %v3128 = vld [vmem:[%s2 + $0xee0] ss:$0 sm:$0xff]
  %v3129 = vld [vmem:[%s2 + $0xf00] ss:$0 sm:$0xff]
  %v3130 = vmul.f32 %v3123, %v3128
  %v3131 = vmul.f32 %v3126, %v3128
  %vm3132 = vcmask 23552
  %v3133 = vsel %vm3132, %v3130, 0.0
  %3134 = vadd.xlane.f32.xlu0 %v3133
  %v3135 = vpop.xlane.xlu0 %3134
  %v3136 = vsel %vm3132, %v3131, 0.0
  %3137 = vadd.xlane.f32.xlu0 %v3136
  %v3138 = vpop.xlane.xlu0 %3137
  %v3139 = vmul.f32 %v3123, %v3129
  %v3140 = vmul.f32 %v3126, %v3129
  %v3141 = vsel %vm3132, %v3139, 0.0
  %3142 = vadd.xlane.f32.xlu0 %v3141
  %v3143 = vpop.xlane.xlu0 %3142
  %v3144 = vsel %vm3132, %v3140, 0.0
  %3145 = vadd.xlane.f32.xlu0 %v3144
  %v3146 = vpop.xlane.xlu0 %3145
  %3147 = vxpose.xlu0.b32.start [1/16] %v3143, 128
  %3148 = vxpose.xlu0.b32.cont [2/16] %v3146, 128
  %3149 = vxpose.xlu0.b32.cont [3/16] 0.0, 128
  %3150 = vxpose.xlu0.b32.cont [4/16] 0.0, 128
  %3151 = vxpose.xlu0.b32.cont [5/16] 0.0, 128
  %3152 = vxpose.xlu0.b32.cont [6/16] 0.0, 128
  %3153 = vxpose.xlu0.b32.cont [7/16] 0.0, 128
  %3154 = vxpose.xlu0.b32.cont [8/16] 0.0, 128
  %3155 = vxpose.xlu0.b32.cont [9/16] 0.0, 128
  %3156 = vxpose.xlu0.b32.cont [10/16] 0.0, 128
  %3157 = vxpose.xlu0.b32.cont [11/16] 0.0, 128
  %3158 = vxpose.xlu0.b32.cont [12/16] 0.0, 128
  %3159 = vxpose.xlu0.b32.cont [13/16] 0.0, 128
  %3160 = vxpose.xlu0.b32.cont [14/16] 0.0, 128
  %3161 = vxpose.xlu0.b32.cont [15/16] 0.0, 128
  %3162 = vxpose.xlu0.b32.end [16/16] 0.0, 128
  %v3163 = vpop.trf.xlu0
  %v3164 = vpop.trf.xlu0
  %v3165 = vpop.trf.xlu0
  %v3166 = vpop.trf.xlu0
  %v3167 = vpop.trf.xlu0
  %v3168 = vpop.trf.xlu0
  %v3169 = vpop.trf.xlu0
  %v3170 = vpop.trf.xlu0
  %v3171 = vpop.trf.xlu0
  %v3172 = vpop.trf.xlu0
  %v3173 = vpop.trf.xlu0
  %v3174 = vpop.trf.xlu0
  %v3175 = vpop.trf.xlu0
  %v3176 = vpop.trf.xlu0
  %v3177 = vpop.trf.xlu0
  %v3178 = vpop.trf.xlu0
  %v3179 = vperm.slane %v3163, 0
  %v3180 = vadd.f32 %v3135, %v3179
  %v3181 = vadd.f32 %v3138, %v3179
  %vm3182 = vcmp.gt.f32.partialorder %v3180, 0.0
  %vm3183 = vcmp.gt.f32.partialorder %v3181, 0.0
  %v3184 = vmul.f32 %v3180, 0.2
  %v3185 = vmul.f32 %v3181, 0.2
  %v3186 = vsel %vm3182, %v3180, %v3184
  %v3187 = vsel %vm3183, %v3181, %v3185
  %v3188 = vadd.f32 %v3186, %v2733
  %v3189 = vadd.f32 %v3187, %v2734
  %v3190 = vsel %vm2796, %v3188, -inf
  %3191 = vmax.xlane.f32.xlu0 %v3190
  %v3192 = vpop.xlane.xlu0 %3191
  %v3193 = vsel %vm2796, %v3189, -inf
  %3194 = vmax.xlane.f32.xlu0 %v3193
  %v3195 = vpop.xlane.xlu0 %3194
  %v3196 = vsub.f32 %v3188, %v3192
  %v3197 = vsub.f32 %v3189, %v3195
  %v3198 = vmul.f32 %v3196, 1.442695
  %v3199 = vpow.pop %v3198
  %v3200 = vmul.f32 %v3197, 1.442695
  %v3201 = vpow.pop %v3200
  %v3202 = vsel %vm2796, %v3199, 0.0
  %3203 = vadd.xlane.f32.xlu0 %v3202
  %v3204 = vpop.xlane.xlu0 %3203
  %v3205 = vsel %vm2796, %v3201, 0.0
  %3206 = vadd.xlane.f32.xlu0 %v3205
  %v3207 = vpop.xlane.xlu0 %3206
  %v3208 = vmax.f32 %v3204, 1e-30
  %v3209 = vmax.f32 %v3207, 1e-30
  %v3210 = vrcp.pop %v3208
  %v3211 = vmul.f32 %v3208, %v3210
  %v3212 = vsub.f32 1.0, %v3211
  %v3213 = vmul.f32 %v3210, %v3212
  %v3214 = vadd.f32 %v3210, %v3213
  %vm3215 = vweird.f32 %v3208
  %vm3216 = vweird.f32 %v3210
  %vm3217 = vmor %vm3215, %vm3216
  %v3218 = vsel %vm3217, %v3210, %v3214
  %v3219 = vand.u32 2147483647, %v3208
  %vm3220 = vcmp.eq.f32.partialorder %v3219, 8.507059e+37
  %v3221 = vand.u32 %v3208, 2147483648
  %v3222 = vor.u32 1.1754944e-38, %v3221
  %v3223 = vsel %vm3220, %v3222, %v3218
  %v3224 = vrcp.pop %v3209
  %v3225 = vmul.f32 %v3209, %v3224
  %v3226 = vsub.f32 1.0, %v3225
  %v3227 = vmul.f32 %v3224, %v3226
  %v3228 = vadd.f32 %v3224, %v3227
  %vm3229 = vweird.f32 %v3209
  %vm3230 = vweird.f32 %v3224
  %vm3231 = vmor %vm3229, %vm3230
  %v3232 = vsel %vm3231, %v3224, %v3228
  %v3233 = vand.u32 2147483647, %v3209
  %vm3234 = vcmp.eq.f32.partialorder %v3233, 8.507059e+37
  %v3235 = vand.u32 %v3209, 2147483648
  %v3236 = vor.u32 1.1754944e-38, %v3235
  %v3237 = vsel %vm3234, %v3236, %v3232
  %v3238 = vmul.f32 %v3199, %v3223
  %v3239 = vmul.f32 %v3201, %v3237
  %v3241 = vsel %vm2796, %v3238, 0
  %v3244 = vsel %vm2796, %v3239, 0
  %3246 = vmatpush.msra.mxu0 0.0
  %3247 = vmatpush.msra.mxu0 0.0
  %3248 = vmatpush.msra.mxu0 0.0
  %3249 = vmatpush.msra.mxu0 0.0
  %3250 = vmatpush.msra.mxu0 0.0
  %3251 = vmatpush.msra.mxu0 0.0
  %3252 = vmatpush.msra.mxu0 0.0
  %3253 = vmatpush.msra.mxu0 0.0
  %3254 = vmatpush.msra.mxu0 0.0
  %3255 = vmatpush.msra.mxu0 0.0
  %3256 = vmatpush.msra.mxu0 0.0
  %3257 = vmatpush.msra.mxu0 0.0
  %3258 = vmatpush.msra.mxu0 0.0
  %3259 = vmatpush.msra.mxu0 0.0
  %3260 = vmatpush.msra.mxu0 %v3126
  %3261 = vmatpush.msra.mxu0 %v3123
  %3262 = vmatmul.f32.gmra.mxu0 %v3241
  %v3263 = vpop.f32.mrf.mxu0
  %v3264 = vadd.f32 0.0, %v3263
  %3265 = vmatmul.f32.gmra.mxu0 %v3244
  %v3266 = vpop.f32.mrf.mxu0
  %v3267 = vadd.f32 0.0, %v3266
  %3268 = vdwg.mxu0
  %vm3269 = vcmp.gt.f32.partialorder %v3264, 0.0
  %vm3270 = vcmp.gt.f32.partialorder %v3267, 0.0
  %v3271 = vmul.f32 %v3264, 1.442695
  %v3272 = vpow.pop %v3271
  %v3273 = vmul.f32 %v3267, 1.442695
  %v3274 = vpow.pop %v3273
  %v3275 = vsub.f32 %v3272, 1.0
  %v3276 = vsub.f32 %v3274, 1.0
  %v3277 = vsel %vm3269, %v3264, %v3275
  %v3278 = vsel %vm3270, %v3267, %v3276
  %v3279 = vsel %vm3132, %v3277, -inf
  %3280 = vmax.xlane.f32.xlu0 %v3279
  %v3281 = vpop.xlane.xlu0 %3280
  %v3282 = vsel %vm3132, %v3278, -inf
  %3283 = vmax.xlane.f32.xlu0 %v3282
  %v3284 = vpop.xlane.xlu0 %3283
  %v3285 = vsub.f32 %v3277, %v3281
  %v3286 = vsub.f32 %v3278, %v3284
  %v3287 = vmul.f32 %v3285, 1.442695
  %v3288 = vpow.pop %v3287
  %v3289 = vmul.f32 %v3286, 1.442695
  %v3290 = vpow.pop %v3289
  %v3291 = vsel %vm3132, %v3288, 0.0
  %3292 = vadd.xlane.f32.xlu0 %v3291
  %v3293 = vpop.xlane.xlu0 %3292
  %v3294 = vsel %vm3132, %v3290, 0.0
  %3295 = vadd.xlane.f32.xlu0 %v3294
  %v3296 = vpop.xlane.xlu0 %3295
  %v3297 = vlog2.pop %v3293
  %v3298 = vmul.f32 %v3297, 0.6931472
  %v3299 = vlog2.pop %v3296
  %v3300 = vmul.f32 %v3299, 0.6931472
  %v3301 = vsub.f32 %v3285, %v3298
  %v3302 = vsub.f32 %v3286, %v3300
  %3303 = vst.msk [vmem:[%s3] sm:$0xff] %vm3132, %v3301
  %3304 = vst.msk [vmem:[%s3 + $0x8] sm:$0xff] %vm3132, %v3302
  // Predicated region
  $region14: #{gat_with_lstm_forward.1} parent=0 // pred_check
    _
  $region15: #{gat_with_lstm_forward.1} parent=0 // pred_check_branch
    %3306 = sbr.rel (0) target = $region17
  $region16: #{gat_with_lstm_forward.1} parent=0 // pred_region
    _
  $region17: #{gat_with_lstm_forward.1} parent=0 // pred_fallthru
    _
  // Predicated region
  $region18: #{gat_with_lstm_forward.1} parent=0 // pred_check
    _
  $region19: #{gat_with_lstm_forward.1} parent=0 // pred_check_branch
    %3308 = sbr.rel (0) target = $region21
  $region20: #{gat_with_lstm_forward.1} parent=0 // pred_region
    _
  $region21: #{gat_with_lstm_forward.1} parent=0 // pred_fallthru
    _

</llo_original>
